<compile_context>
chip_gen: v7x
topology: tpu7x:2x2x1
jax: 0.10.0
libtpu: 0.0.40
codegen_flags: <defaults>
</compile_context>

<pallas_src>
import jax
import jax.numpy as jnp
from jax.experimental import pallas as pl
from jax.experimental.pallas import tpu as pltpu


# ---------------------------------------------------------------------------
# Helpers
# ---------------------------------------------------------------------------
def _round_up(x, m):
    return ((x + m - 1) // m) * m


def _cdiv(a, b):
    return -(-a // b)


def _vmem_limit_bytes():
    """Per-generation scoped-VMEM limit: half of physical VMEM, capped at
    64 MiB (=> 64 MiB on v5e/v6e with 128 MiB physical, 32 MiB on v7x)."""
    phys = 128 << 20
    try:
        info = pltpu.get_tpu_info()
        phys = int(getattr(info, "vmem_capacity_bytes", phys))
    except Exception:
        pass
    return int(min(phys // 2, 64 << 20))


def _choose_tiles(B, n_feat, h1_dim, h2_dim, out_size, itemsize, vmem_limit,
                  force_tb=None, force_max_tk=None):
    """Pick (tb, num_b, b_pad, tk, num_k, k_pad).

    tk is the largest multiple of 128 such that double-buffered w1/x tiles +
    the f32 accumulator + the output tile + the small layer-2/3 weights stay
    within ~85% of the scoped-VMEM limit."""
    # ---- batch (M) tile ----
    if force_tb is not None:
        tb = int(min(force_tb, B))
    else:
        tb = B if B <= 256 else 256
    if tb < B:
        tb = min(_round_up(tb, 8), _round_up(B, 8))
    tb = max(tb, 1)
    num_b = _cdiv(B, tb)
    b_pad = num_b * tb

    # ---- reduction (K) tile ----
    n_feat_pad = _round_up(n_feat, 128)
    # VMEM cost that does not scale with tk: f32 small weights/biases
    # (double-buffered), f32 accumulator, double-buffered f32 output tile.
    fixed = 2 * 4 * (h1_dim * h2_dim + h2_dim * out_size
                     + h1_dim + h2_dim + out_size)
    fixed += 4 * tb * h1_dim
    fixed += 2 * 4 * tb * out_size
    budget = int(0.85 * vmem_limit) - fixed
    # Bytes per 128 columns of K: double-buffered w1 slab + double-buffered x slab.
    per_128 = 2 * 128 * itemsize * (h1_dim + tb)
    max_units = max(1, budget // per_128)
    tk = int(min(max_units * 128, n_feat_pad))
    if force_max_tk is not None:
        tk = min(tk, int(force_max_tk))
    tk = max(128, (tk // 128) * 128)
    num_k = _cdiv(n_feat_pad, tk)
    # Rebalance tk so the last K tile is not mostly zero padding.
    tk = _round_up(_cdiv(n_feat_pad, num_k), 128)
    k_pad = num_k * tk
    return tb, num_b, b_pad, tk, num_k, k_pad


# ---------------------------------------------------------------------------
# Kernels
# ---------------------------------------------------------------------------
def _km_kernel_single_block(x_ref, w1_ref, b1_ref, w2_ref, b2_ref, w3_ref,
                            b3_ref, o_ref):
    """num_k == 1: whole layer-1 reduction in one block -> straight-line MLP,
    no accumulator scratch, no pl.when branches."""
    h1 = jnp.dot(x_ref[...], w1_ref[...], preferred_element_type=jnp.float32)
    h1 = jnp.maximum(h1 + b1_ref[...], 0.0)                     # (tb, 256)
    h2 = jnp.dot(h1, w2_ref[...], preferred_element_type=jnp.float32)
    h2 = jnp.maximum(h2 + b2_ref[...], 0.0)                     # (tb, 128)
    out = jnp.dot(h2, w3_ref[...], preferred_element_type=jnp.float32)
    o_ref[...] = (out + b3_ref[...]).astype(o_ref.dtype)        # (tb, out)


def _km_kernel_k_tiled(x_ref, w1_ref, b1_ref, w2_ref, b2_ref, w3_ref, b3_ref,
                       o_ref, acc_ref):
    """grid = (num_b parallel, num_k arbitrary).  Layer-1 partial sums go into
    an f32 VMEM accumulator; layers 2/3 are fused into the last K step."""
    k = pl.program_id(1)

    @pl.when(k == 0)
    def _():
        acc_ref[...] = jnp.zeros_like(acc_ref)

    acc_ref[...] += jnp.dot(x_ref[...], w1_ref[...],
                            preferred_element_type=jnp.float32)

    @pl.when(k == pl.num_programs(1) - 1)
    def _():
        h1 = jnp.maximum(acc_ref[...] + b1_ref[...], 0.0)       # (tb, 256)
        h2 = jnp.dot(h1, w2_ref[...], preferred_element_type=jnp.float32)
        h2 = jnp.maximum(h2 + b2_ref[...], 0.0)                 # (tb, 128)
        out = jnp.dot(h2, w3_ref[...], preferred_element_type=jnp.float32)
        o_ref[...] = (out + b3_ref[...]).astype(o_ref.dtype)    # (tb, out)


# ---------------------------------------------------------------------------
# Wrapper
# ---------------------------------------------------------------------------
def km_generator_forward(params, feat_map, *, use_bf16_weights=False,
                         force_tb=None, force_max_tk=None):
    """Fused forward pass.  `feat_map` may be any shape whose size is
    B * n_feat (e.g. (B, 256, h, w)) -- matches feat_map.view(-1, n_feat).

    use_bf16_weights: stream x / w1 as bfloat16 (halves HBM traffic of the
    bandwidth-bound first layer); accumulation stays f32.  Default False to
    match PyTorch f32 numerics."""
    w1, b1 = params["w1"], params["b1"]
    w2, b2 = params["w2"], params["b2"]
    w3, b3 = params["w3"], params["b3"]
    n_feat, h1_dim = w1.shape
    h2_dim = w2.shape[1]
    out_size = w3.shape[1]

    compute_dtype = jnp.bfloat16 if use_bf16_weights else jnp.float32
    itemsize = 2 if use_bf16_weights else 4

    x = feat_map.reshape(-1, n_feat)                  # == .view(-1, n_feat)
    B = x.shape[0]

    vmem_limit = _vmem_limit_bytes()
    tb, num_b, b_pad, tk, num_k, k_pad = _choose_tiles(
        B, n_feat, h1_dim, h2_dim, out_size, itemsize, vmem_limit,
        force_tb=force_tb, force_max_tk=force_max_tk)

    # Zero-pad the reduction dim (numerically exact for the matmul) and the
    # batch dim (padded rows are sliced off after the call).
    x = x.astype(compute_dtype)
    w1c = w1.astype(compute_dtype)
    if b_pad != B or k_pad != n_feat:
        x = jnp.pad(x, ((0, b_pad - B), (0, k_pad - n_feat)))
    if k_pad != n_feat:
        w1c = jnp.pad(w1c, ((0, k_pad - n_feat), (0, 0)))

    b1f = jnp.reshape(b1, (1, h1_dim)).astype(jnp.float32)
    b2f = jnp.reshape(b2, (1, h2_dim)).astype(jnp.float32)
    b3f = jnp.reshape(b3, (1, out_size)).astype(jnp.float32)
    w2f = w2.astype(jnp.float32)
    w3f = w3.astype(jnp.float32)

    if num_k == 1:
        # Whole w1 fits the VMEM budget: no K grid, no accumulator, no pl.when.
        kernel = _km_kernel_single_block
        grid = (num_b,)
        in_specs = [
            pl.BlockSpec((tb, k_pad), lambda b: (b, 0)),            # x
            pl.BlockSpec((k_pad, h1_dim), lambda b: (0, 0)),        # w1
            pl.BlockSpec((1, h1_dim), lambda b: (0, 0)),            # b1
            pl.BlockSpec((h1_dim, h2_dim), lambda b: (0, 0)),       # w2
            pl.BlockSpec((1, h2_dim), lambda b: (0, 0)),            # b2
            pl.BlockSpec((h2_dim, out_size), lambda b: (0, 0)),     # w3
            pl.BlockSpec((1, out_size), lambda b: (0, 0)),          # b3
        ]
        out_specs = pl.BlockSpec((tb, out_size), lambda b: (b, 0))
        scratch_shapes = []
        semantics = ("parallel",)
    else:
        kernel = _km_kernel_k_tiled
        grid = (num_b, num_k)              # reduction axis last, innermost
        in_specs = [
            pl.BlockSpec((tb, tk), lambda b, k: (b, k)),            # x
            pl.BlockSpec((tk, h1_dim), lambda b, k: (k, 0)),        # w1
            pl.BlockSpec((1, h1_dim), lambda b, k: (0, 0)),         # b1
            pl.BlockSpec((h1_dim, h2_dim), lambda b, k: (0, 0)),    # w2
            pl.BlockSpec((1, h2_dim), lambda b, k: (0, 0)),         # b2
            pl.BlockSpec((h2_dim, out_size), lambda b, k: (0, 0)),  # w3
            pl.BlockSpec((1, out_size), lambda b, k: (0, 0)),       # b3
        ]
        out_specs = pl.BlockSpec((tb, out_size), lambda b, k: (b, 0))
        scratch_shapes = [pltpu.VMEM((tb, h1_dim), jnp.float32)]
        semantics = ("parallel", "arbitrary")

    out_full = pl.pallas_call(
        kernel,
        grid=grid,
        in_specs=in_specs,
        out_specs=out_specs,
        out_shape=jax.ShapeDtypeStruct((b_pad, out_size), jnp.float32),
        scratch_shapes=scratch_shapes,
        compiler_params=pltpu.CompilerParams(
            dimension_semantics=semantics,
            vmem_limit_bytes=vmem_limit),
    )(x, w1c, b1f, w2f, b2f, w3f, b3f)

    return out_full[:B] if b_pad != B else out_full


# ---------------------------------------------------------------------------
# Deterministic parameter init (stand-in for nn.Linear's init; weights stored
# (in, out) so the kernel does x @ W + b, matching PyTorch's x @ W.T + b).
# ---------------------------------------------------------------------------
def init_km_generator(key, out_size, input_feat_h, input_feat_w):
    n_feat = int(256 * input_feat_h * input_feat_w)
    ks = jax.random.split(key, 6)
    return {
        "w1": 0.02 * jax.random.normal(ks[0], (n_feat, 256), jnp.float32),
        "b1": 0.01 * jax.random.normal(ks[1], (1, 256), jnp.float32),
        "w2": 0.05 * jax.random.normal(ks[2], (256, 128), jnp.float32),
        "b2": 0.01 * jax.random.normal(ks[3], (1, 128), jnp.float32),
        "w3": 0.05 * jax.random.normal(ks[4], (128, out_size), jnp.float32),
        "b3": 0.01 * jax.random.normal(ks[5], (1, out_size), jnp.float32),
    }


def km_generator_reference(params, feat_map):
    """Pure-JAX reference of the PyTorch forward pass."""
    n_feat = params["w1"].shape[0]
    x = feat_map.reshape(-1, n_feat).astype(jnp.float32)
    hp = jax.lax.Precision.HIGHEST
    h1 = jnp.maximum(jnp.dot(x, params["w1"], precision=hp) + params["b1"], 0.0)
    h2 = jnp.maximum(jnp.dot(h1, params["w2"], precision=hp) + params["b2"], 0.0)
    return jnp.dot(h2, params["w3"], precision=hp) + params["b3"]


# ---------------------------------------------------------------------------
# main
# ---------------------------------------------------------------------------
if __name__ == "__main__":
    key = jax.random.PRNGKey(0)
    k1, k2, k3, k4 = jax.random.split(key, 4)

    out_size = 128

    # ---- Test 1: small config -> single-block fast path (n_feat = 4096) ----
    B, fh, fw = 2, 4, 4
    params = init_km_generator(k1, out_size, fh, fw)
    feat_map = jax.random.normal(k2, (B, 256, fh, fw), jnp.float32)

    out = km_generator_forward(params, feat_map)
    jax.block_until_ready(out)
    assert out.shape == (B, out_size)
    ref = km_generator_reference(params, feat_map)
    assert jnp.allclose(out, ref, atol=1e-2, rtol=1e-2), "single-block mismatch"

    # ---- Test 2: force the K-tiled + batch-tiled path (with K/B padding) ----
    B2, fh2, fw2 = 10, 2, 13                      # n_feat = 6656
    params2 = init_km_generator(k3, out_size, fh2, fw2)
    feat_map2 = jax.random.normal(k4, (B2, 256, fh2, fw2), jnp.float32)

    out2 = km_generator_forward(params2, feat_map2,
                                force_max_tk=1024, force_tb=8)
    jax.block_until_ready(out2)
    assert out2.shape == (B2, out_size)
    ref2 = km_generator_reference(params2, feat_map2)
    assert jnp.allclose(out2, ref2, atol=1e-2, rtol=1e-2), "tiled mismatch"

    # ---- Test 3: optional bf16-weights fast path (reduced precision) ----
    out3 = km_generator_forward(params, feat_map, use_bf16_weights=True)
    jax.block_until_ready(out3)
    assert out3.shape == (B, out_size)
    assert bool(jnp.all(jnp.isfinite(out3)))

    print("KERNEL_OK")
</pallas_src>

<mosaic_0001>
module attributes {stable_mosaic.version = 11 : i64} {
  func.func @_km_kernel_single_block(%arg0: i32, %arg1: memref<2x4096xf32, #tpu.memory_space<vmem>>, %arg2: memref<4096x256xf32, #tpu.memory_space<vmem>>, %arg3: memref<1x256xf32, #tpu.memory_space<vmem>>, %arg4: memref<256x128xf32, #tpu.memory_space<vmem>>, %arg5: memref<1x128xf32, #tpu.memory_space<vmem>>, %arg6: memref<128x128xf32, #tpu.memory_space<vmem>>, %arg7: memref<1x128xf32, #tpu.memory_space<vmem>>, %arg8: memref<2x128xf32, #tpu.memory_space<vmem>>) attributes {dimension_semantics = [#tpu.dimension_semantics<parallel>], iteration_bounds = array<i64: 1>, scalar_prefetch = 0 : i64, scratch_operands = 0 : i64, tpu.core_type = #tpu.core_type<tc>, window_params = [{transform_indices = @transform_0, window_bounds = array<i64: 2, 4096>}, {pipeline_mode = #tpu.pipeline_mode<synchronous>, transform_indices = @transform_1, window_bounds = array<i64: 4096, 256>}, {pipeline_mode = #tpu.pipeline_mode<synchronous>, transform_indices = @transform_2, window_bounds = array<i64: 1, 256>}, {pipeline_mode = #tpu.pipeline_mode<synchronous>, transform_indices = @transform_3, window_bounds = array<i64: 256, 128>}, {pipeline_mode = #tpu.pipeline_mode<synchronous>, transform_indices = @transform_4, window_bounds = array<i64: 1, 128>}, {pipeline_mode = #tpu.pipeline_mode<synchronous>, transform_indices = @transform_5, window_bounds = array<i64: 128, 128>}, {pipeline_mode = #tpu.pipeline_mode<synchronous>, transform_indices = @transform_6, window_bounds = array<i64: 1, 128>}, {transform_indices = @transform_7, window_bounds = array<i64: 2, 128>}]} {
    %c0 = arith.constant 0 : index
    %c0_0 = arith.constant 0 : index
    %0 = vector.load %arg1[%c0, %c0_0] : memref<2x4096xf32, #tpu.memory_space<vmem>>, vector<2x4096xf32>
    %c0_1 = arith.constant 0 : index
    %c0_2 = arith.constant 0 : index
    %1 = vector.load %arg2[%c0_1, %c0_2] : memref<4096x256xf32, #tpu.memory_space<vmem>>, vector<4096x256xf32>
    %cst = arith.constant dense<0.000000e+00> : vector<2x256xf32>
    %2 = tpu.matmul %0, %1, %cst {dimension_numbers = #tpu.dot_dimension_numbers<[1], [0], [0], [1], [0, 0, 1, 1], [], []>} : vector<2x4096xf32>, vector<4096x256xf32>, vector<2x256xf32> -> vector<2x256xf32>
    %c0_3 = arith.constant 0 : index
    %c0_4 = arith.constant 0 : index
    %3 = vector.load %arg3[%c0_3, %c0_4] : memref<1x256xf32, #tpu.memory_space<vmem>>, vector<1x256xf32>
    %4 = vector.broadcast %3 : vector<1x256xf32> to vector<2x256xf32>
    %5 = arith.addf %2, %4 : vector<2x256xf32>
    %cst_5 = arith.constant 0.000000e+00 : f32
    %6 = vector.broadcast %cst_5 : f32 to vector<2x256xf32>
    %7 = arith.maximumf %5, %6 : vector<2x256xf32>
    %c0_6 = arith.constant 0 : index
    %c0_7 = arith.constant 0 : index
    %8 = vector.load %arg4[%c0_6, %c0_7] : memref<256x128xf32, #tpu.memory_space<vmem>>, vector<256x128xf32>
    %cst_8 = arith.constant dense<0.000000e+00> : vector<2x128xf32>
    %9 = tpu.matmul %7, %8, %cst_8 {dimension_numbers = #tpu.dot_dimension_numbers<[1], [0], [0], [1], [0, 0, 1, 1], [], []>} : vector<2x256xf32>, vector<256x128xf32>, vector<2x128xf32> -> vector<2x128xf32>
    %c0_9 = arith.constant 0 : index
    %c0_10 = arith.constant 0 : index
    %10 = vector.load %arg5[%c0_9, %c0_10] : memref<1x128xf32, #tpu.memory_space<vmem>>, vector<1x128xf32>
    %11 = vector.broadcast %10 : vector<1x128xf32> to vector<2x128xf32>
    %12 = arith.addf %9, %11 : vector<2x128xf32>
    %cst_11 = arith.constant 0.000000e+00 : f32
    %13 = vector.broadcast %cst_11 : f32 to vector<2x128xf32>
    %14 = arith.maximumf %12, %13 : vector<2x128xf32>
    %c0_12 = arith.constant 0 : index
    %c0_13 = arith.constant 0 : index
    %15 = vector.load %arg6[%c0_12, %c0_13] : memref<128x128xf32, #tpu.memory_space<vmem>>, vector<128x128xf32>
    %cst_14 = arith.constant dense<0.000000e+00> : vector<2x128xf32>
    %16 = tpu.matmul %14, %15, %cst_14 {dimension_numbers = #tpu.dot_dimension_numbers<[1], [0], [0], [1], [0, 0, 1, 1], [], []>} : vector<2x128xf32>, vector<128x128xf32>, vector<2x128xf32> -> vector<2x128xf32>
    %c0_15 = arith.constant 0 : index
    %c0_16 = arith.constant 0 : index
    %17 = vector.load %arg7[%c0_15, %c0_16] : memref<1x128xf32, #tpu.memory_space<vmem>>, vector<1x128xf32>
    %18 = vector.broadcast %17 : vector<1x128xf32> to vector<2x128xf32>
    %19 = arith.addf %16, %18 : vector<2x128xf32>
    %c0_17 = arith.constant 0 : index
    %c0_18 = arith.constant 0 : index
    %20 = vector.load %arg8[%c0_17, %c0_18] : memref<2x128xf32, #tpu.memory_space<vmem>>, vector<2x128xf32>
    tpu.vector_store %arg8[%c0_17, %c0_18], %19 {strides = array<i32>} : memref<2x128xf32, #tpu.memory_space<vmem>>, vector<2x128xf32>,
    return
  }
  func.func @transform_0(%arg0: i32) -> (i32, i32) {
    %c0_i32 = arith.constant 0 : i32
    %c0_i32_0 = arith.constant 0 : i32
    return %arg0, %c0_i32 : i32, i32
  }
  func.func @transform_1(%arg0: i32) -> (i32, i32) {
    %c0_i32 = arith.constant 0 : i32
    %c0_i32_0 = arith.constant 0 : i32
    %c0_i32_1 = arith.constant 0 : i32
    return %c0_i32, %c0_i32_0 : i32, i32
  }
  func.func @transform_2(%arg0: i32) -> (i32, i32) {
    %c0_i32 = arith.constant 0 : i32
    %c0_i32_0 = arith.constant 0 : i32
    %c0_i32_1 = arith.constant 0 : i32
    return %c0_i32, %c0_i32_0 : i32, i32
  }
  func.func @transform_3(%arg0: i32) -> (i32, i32) {
    %c0_i32 = arith.constant 0 : i32
    %c0_i32_0 = arith.constant 0 : i32
    %c0_i32_1 = arith.constant 0 : i32
    return %c0_i32, %c0_i32_0 : i32, i32
  }
  func.func @transform_4(%arg0: i32) -> (i32, i32) {
    %c0_i32 = arith.constant 0 : i32
    %c0_i32_0 = arith.constant 0 : i32
    %c0_i32_1 = arith.constant 0 : i32
    return %c0_i32, %c0_i32_0 : i32, i32
  }
  func.func @transform_5(%arg0: i32) -> (i32, i32) {
    %c0_i32 = arith.constant 0 : i32
    %c0_i32_0 = arith.constant 0 : i32
    %c0_i32_1 = arith.constant 0 : i32
    return %c0_i32, %c0_i32_0 : i32, i32
  }
  func.func @transform_6(%arg0: i32) -> (i32, i32) {
    %c0_i32 = arith.constant 0 : i32
    %c0_i32_0 = arith.constant 0 : i32
    %c0_i32_1 = arith.constant 0 : i32
    return %c0_i32, %c0_i32_0 : i32, i32
  }
  func.func @transform_7(%arg0: i32) -> (i32, i32) {
    %c0_i32 = arith.constant 0 : i32
    %c0_i32_0 = arith.constant 0 : i32
    return %arg0, %c0_i32 : i32, i32
  }
}

</mosaic_0001>

<llo_original>
// kernel: tpu_custom_call.1
$region0: #{tpu_custom_call.1}
  #allocation0 [shape = 'u32[]', space=smem, size = 0x4, offset = 0x4, fixed_abs, tag = 'smem constant byte address 0x4 - core index']
  #allocation1 [shape = 'u32[144,128]{1,0:T(1,128)}', space=vmem, size = 0x12000, scoped, tag = 'internal scratch']
  %s0 = inlined_call_operand.hbm [shape: f32[2,4096], index: 0, kind: input, shape index: {}]
  %s1 = inlined_call_operand.hbm [shape: f32[4096,256], index: 1, kind: input, shape index: {}]
  %s2 = inlined_call_operand.hbm [shape: f32[1,256], index: 2, kind: input, shape index: {}]
  %s3 = inlined_call_operand.hbm [shape: f32[256,128], index: 3, kind: input, shape index: {}]
  %s4 = inlined_call_operand.hbm [shape: f32[1,128], index: 4, kind: input, shape index: {}]
  %s5 = inlined_call_operand.hbm [shape: f32[128,128], index: 5, kind: input, shape index: {}]
  %s6 = inlined_call_operand.hbm [shape: f32[1,128], index: 6, kind: input, shape index: {}]
  %s7 = inlined_call_operand.hbm [shape: f32[2,128], index: 7, kind: output, shape index: {}]
  %s8 = sld [smem:[#allocation0]]
  $region66: #{tpu_custom_call.1} parent=0
    _
  %s10 = ssub.s32 1, %s8
  %s11 = scalar_select 0, %s10, %s8
  $region1: #{tpu_custom_call.1} parent=0
    #allocation2 [shape = 'u8[32768]{0}', space=vmem, size = 0x8000, scoped, tag = 'input window, operand 0, single buffered']
    #allocation3 [shape = 's32[1]{0}', space=sflag, size = 0x4, scoped, tag = 'scoped memory for tpu_custom_call.1']
    #allocation4 [shape = 's32[1]{0}', space=sflag, size = 0x4, scoped, tag = 'scoped memory for tpu_custom_call.1']
    #allocation5 [shape = 'u8[4194304]{0}', space=vmem, size = 0x400000, scoped, tag = 'input window, operand 1, single buffered']
    #allocation6 [shape = 's32[1]{0}', space=sflag, size = 0x4, scoped, tag = 'scoped memory for tpu_custom_call.1']
    #allocation7 [shape = 'u8[1024]{0}', space=vmem, size = 0x400, scoped, tag = 'input window, operand 2, single buffered']
    #allocation8 [shape = 'u8[131072]{0}', space=vmem, size = 0x20000, scoped, tag = 'input window, operand 3, single buffered']
    #allocation9 [shape = 's32[1]{0}', space=sflag, size = 0x4, scoped, tag = 'scoped memory for tpu_custom_call.1']
    #allocation10 [shape = 'u8[512]{0}', space=vmem, size = 0x400, scoped, tag = 'input window, operand 4, single buffered']
    #allocation11 [shape = 'u8[65536]{0}', space=vmem, size = 0x10000, scoped, tag = 'input window, operand 5, single buffered']
    #allocation12 [shape = 's32[1]{0}', space=sflag, size = 0x4, scoped, tag = 'scoped memory for tpu_custom_call.1']
    #allocation13 [shape = 'u8[512]{0}', space=vmem, size = 0x400, scoped, tag = 'input window, operand 6, single buffered']
    #allocation14 [shape = 'u8[1024]{0}', space=vmem, size = 0x400, scoped, tag = 'output window, operand 0, single buffered']
    %12 = vsyncpa [#allocation3], 0
    %13 = vsyncpa [#allocation6], 0
    %14 = vsyncpa [#allocation9], 0
    %15 = vsyncpa [#allocation12], 0
    %16 = vsyncpa [#allocation4], 0
    // Predicated region
    $region2: #{tpu_custom_call.1} parent=1 // pred_check
      _
    $region3: #{tpu_custom_call.1} parent=1 // pred_check_branch
      %18 = sbr.rel (0) target = $region5
    $region4: #{tpu_custom_call.1} parent=1 // pred_region
      %s20 = ssub.s32 1024, 1024
      %21 = vsyncadd [#allocation3], %s20
      %s23 = sshll.u32 [#allocation2], 4
      %s24 = int_to_ptr.vmem [resolvable:$true] %s23
      %26 = dma.hbm_to_vmem [thread:$0]  %s0, 1024, %s24, [#allocation3]
    $region5: #{tpu_custom_call.1} parent=1 // pred_fallthru
      _
    // Predicated region
    $region6: #{tpu_custom_call.1} parent=1 // pred_check
      _
    $region7: #{tpu_custom_call.1} parent=1 // pred_check_branch
      %28 = sbr.rel (0) target = $region9
    $region8: #{tpu_custom_call.1} parent=1 // pred_region
      %s30 = ssub.s32 131072, 131072
      %31 = vsyncadd [#allocation6], %s30
      %s32 = sshll.u32 [#allocation5], 4
      %s33 = int_to_ptr.vmem [resolvable:$true] %s32
      %38 = dma.hbm_to_vmem [thread:$0]  %s1, 131072, %s33, [#allocation6], 256, 256, 16
    $region9: #{tpu_custom_call.1} parent=1 // pred_fallthru
      _
    // Predicated region
    $region10: #{tpu_custom_call.1} parent=1 // pred_check
      _
    $region11: #{tpu_custom_call.1} parent=1 // pred_check_branch
      %40 = sbr.rel (0) target = $region13
    $region12: #{tpu_custom_call.1} parent=1 // pred_region
      %s42 = ssub.s32 32, 32
      %43 = vsyncadd [#allocation6], %s42
      %s45 = sshll.u32 [#allocation7], 4
      %s46 = int_to_ptr.vmem [resolvable:$true] %s45
      %48 = dma.hbm_to_vmem [thread:$0]  %s2, 32, %s46, [#allocation6]
    $region13: #{tpu_custom_call.1} parent=1 // pred_fallthru
      _
    // Predicated region
    $region14: #{tpu_custom_call.1} parent=1 // pred_check
      _
    $region15: #{tpu_custom_call.1} parent=1 // pred_check_branch
      %50 = sbr.rel (0) target = $region17
    $region16: #{tpu_custom_call.1} parent=1 // pred_region
      %s52 = ssub.s32 4096, 4096
      %53 = vsyncadd [#allocation9], %s52
      %s54 = sshll.u32 [#allocation8], 4
      %s55 = int_to_ptr.vmem [resolvable:$true] %s54
      %60 = dma.hbm_to_vmem [thread:$0]  %s3, 4096, %s55, [#allocation9], 128, 128, 8
    $region17: #{tpu_custom_call.1} parent=1 // pred_fallthru
      _
    // Predicated region
    $region18: #{tpu_custom_call.1} parent=1 // pred_check
      _
    $region19: #{tpu_custom_call.1} parent=1 // pred_check_branch
      %62 = sbr.rel (0) target = $region21
    $region20: #{tpu_custom_call.1} parent=1 // pred_region
      %s64 = ssub.s32 16, 16
      %65 = vsyncadd [#allocation9], %s64
      %s67 = sshll.u32 [#allocation10], 4
      %s68 = int_to_ptr.vmem [resolvable:$true] %s67
      %70 = dma.hbm_to_vmem [thread:$0]  %s4, 16, %s68, [#allocation9]
    $region21: #{tpu_custom_call.1} parent=1 // pred_fallthru
      _
    // Predicated region
    $region22: #{tpu_custom_call.1} parent=1 // pred_check
      _
    $region23: #{tpu_custom_call.1} parent=1 // pred_check_branch
      %72 = sbr.rel (0) target = $region25
    $region24: #{tpu_custom_call.1} parent=1 // pred_region
      %s74 = ssub.s32 2048, 2048
      %75 = vsyncadd [#allocation12], %s74
      %s76 = sshll.u32 [#allocation11], 4
      %s77 = int_to_ptr.vmem [resolvable:$true] %s76
      %82 = dma.hbm_to_vmem [thread:$0]  %s5, 2048, %s77, [#allocation12], 128, 128, 8
    $region25: #{tpu_custom_call.1} parent=1 // pred_fallthru
      _
    // Predicated region
    $region26: #{tpu_custom_call.1} parent=1 // pred_check
      _
    $region27: #{tpu_custom_call.1} parent=1 // pred_check_branch
      %84 = sbr.rel (0) target = $region29
    $region28: #{tpu_custom_call.1} parent=1 // pred_region
      %s86 = ssub.s32 16, 16
      %87 = vsyncadd [#allocation12], %s86
      %s89 = sshll.u32 [#allocation13], 4
      %s90 = int_to_ptr.vmem [resolvable:$true] %s89
      %92 = dma.hbm_to_vmem [thread:$0]  %s6, 16, %s90, [#allocation12]
    $region29: #{tpu_custom_call.1} parent=1 // pred_fallthru
      _
    // Predicated region
    $region30: #{tpu_custom_call.1} parent=1 // pred_check
      _
    $region31: #{tpu_custom_call.1} parent=1 // pred_check_branch
      %94 = sbr.rel (0) target = $region33
    $region32: #{tpu_custom_call.1} parent=1 // pred_region
      %95 = dma.done [#allocation3], 1024
    $region33: #{tpu_custom_call.1} parent=1 // pred_fallthru
      _
    // Predicated region
    $region34: #{tpu_custom_call.1} parent=1 // pred_check
      _
    $region35: #{tpu_custom_call.1} parent=1 // pred_check_branch
      %97 = sbr.rel (0) target = $region37
    $region36: #{tpu_custom_call.1} parent=1 // pred_region
      %98 = dma.done [#allocation6], 131072
    $region37: #{tpu_custom_call.1} parent=1 // pred_fallthru
      _
    // Predicated region
    $region38: #{tpu_custom_call.1} parent=1 // pred_check
      _
    $region39: #{tpu_custom_call.1} parent=1 // pred_check_branch
      %100 = sbr.rel (0) target = $region41
    $region40: #{tpu_custom_call.1} parent=1 // pred_region
      %101 = dma.done [#allocation6], 32
    $region41: #{tpu_custom_call.1} parent=1 // pred_fallthru
      _
    // Predicated region
    $region42: #{tpu_custom_call.1} parent=1 // pred_check
      _
    $region43: #{tpu_custom_call.1} parent=1 // pred_check_branch
      %103 = sbr.rel (0) target = $region45
    $region44: #{tpu_custom_call.1} parent=1 // pred_region
      %104 = dma.done [#allocation9], 4096
    $region45: #{tpu_custom_call.1} parent=1 // pred_fallthru
      _
    // Predicated region
    $region46: #{tpu_custom_call.1} parent=1 // pred_check
      _
    $region47: #{tpu_custom_call.1} parent=1 // pred_check_branch
      %106 = sbr.rel (0) target = $region49
    $region48: #{tpu_custom_call.1} parent=1 // pred_region
      %107 = dma.done [#allocation9], 16
    $region49: #{tpu_custom_call.1} parent=1 // pred_fallthru
      _
    // Predicated region
    $region50: #{tpu_custom_call.1} parent=1 // pred_check
      _
    $region51: #{tpu_custom_call.1} parent=1 // pred_check_branch
      %109 = sbr.rel (0) target = $region53
    $region52: #{tpu_custom_call.1} parent=1 // pred_region
      %110 = dma.done [#allocation12], 2048
    $region53: #{tpu_custom_call.1} parent=1 // pred_fallthru
      _
    // Predicated region
    $region54: #{tpu_custom_call.1} parent=1 // pred_check
      _
    $region55: #{tpu_custom_call.1} parent=1 // pred_check_branch
      %112 = sbr.rel (0) target = $region57
    $region56: #{tpu_custom_call.1} parent=1 // pred_region
      %113 = dma.done [#allocation12], 16
    $region57: #{tpu_custom_call.1} parent=1 // pred_fallthru
      _
    %v114 = vld [vmem:[#allocation2] sm:$0xff]
    %v115 = vld [vmem:[#allocation2 + $0x8] sm:$0xff]
    %v116 = vld [vmem:[#allocation2 + $0x10] sm:$0xff]
    %v117 = vld [vmem:[#allocation2 + $0x18] sm:$0xff]
    %v118 = vld [vmem:[#allocation2 + $0x20] sm:$0xff]
    %v119 = vld [vmem:[#allocation2 + $0x28] sm:$0xff]
    %v120 = vld [vmem:[#allocation2 + $0x30] sm:$0xff]
    %v121 = vld [vmem:[#allocation2 + $0x38] sm:$0xff]
    %v122 = vld [vmem:[#allocation5] sm:$0xff]
    %v123 = vld [vmem:[#allocation5 + $0x8] sm:$0xff]
    %v124 = vld [vmem:[#allocation5 + $0x10] sm:$0xff]
    %v125 = vld [vmem:[#allocation5 + $0x18] sm:$0xff]
    %v126 = vld [vmem:[#allocation5 + $0x20] sm:$0xff]
    %v127 = vld [vmem:[#allocation5 + $0x28] sm:$0xff]
    %v128 = vld [vmem:[#allocation5 + $0x30] sm:$0xff]
    %v129 = vld [vmem:[#allocation5 + $0x38] sm:$0xff]
    %v130 = vld [vmem:[#allocation5 + $0x40] sm:$0xff]
    %v131 = vld [vmem:[#allocation5 + $0x48] sm:$0xff]
    %v132 = vld [vmem:[#allocation5 + $0x50] sm:$0xff]
    %v133 = vld [vmem:[#allocation5 + $0x58] sm:$0xff]
    %v134 = vld [vmem:[#allocation5 + $0x60] sm:$0xff]
    %v135 = vld [vmem:[#allocation5 + $0x68] sm:$0xff]
    %v136 = vld [vmem:[#allocation5 + $0x70] sm:$0xff]
    %v137 = vld [vmem:[#allocation5 + $0x78] sm:$0xff]
    %v138 = vld [vmem:[#allocation5 + $0x80] sm:$0xff]
    %v139 = vld [vmem:[#allocation5 + $0x88] sm:$0xff]
    %v140 = vld [vmem:[#allocation5 + $0x90] sm:$0xff]
    %v141 = vld [vmem:[#allocation5 + $0x98] sm:$0xff]
    %v142 = vld [vmem:[#allocation5 + $0xa0] sm:$0xff]
    %v143 = vld [vmem:[#allocation5 + $0xa8] sm:$0xff]
    %v144 = vld [vmem:[#allocation5 + $0xb0] sm:$0xff]
    %v145 = vld [vmem:[#allocation5 + $0xb8] sm:$0xff]
    %v146 = vld [vmem:[#allocation5 + $0xc0] sm:$0xff]
    %v147 = vld [vmem:[#allocation5 + $0xc8] sm:$0xff]
    %v148 = vld [vmem:[#allocation5 + $0xd0] sm:$0xff]
    %v149 = vld [vmem:[#allocation5 + $0xd8] sm:$0xff]
    %v150 = vld [vmem:[#allocation5 + $0xe0] sm:$0xff]
    %v151 = vld [vmem:[#allocation5 + $0xe8] sm:$0xff]
    %v152 = vld [vmem:[#allocation5 + $0xf0] sm:$0xff]
    %v153 = vld [vmem:[#allocation5 + $0xf8] sm:$0xff]
    %v154 = vld [vmem:[#allocation5 + $0x100] sm:$0xff]
    %v155 = vld [vmem:[#allocation5 + $0x108] sm:$0xff]
    %v156 = vld [vmem:[#allocation5 + $0x110] sm:$0xff]
    %v157 = vld [vmem:[#allocation5 + $0x118] sm:$0xff]
    %v158 = vld [vmem:[#allocation5 + $0x120] sm:$0xff]
    %v159 = vld [vmem:[#allocation5 + $0x128] sm:$0xff]
    %v160 = vld [vmem:[#allocation5 + $0x130] sm:$0xff]
    %v161 = vld [vmem:[#allocation5 + $0x138] sm:$0xff]
    %v162 = vld [vmem:[#allocation5 + $0x140] sm:$0xff]
    %v163 = vld [vmem:[#allocation5 + $0x148] sm:$0xff]
    %v164 = vld [vmem:[#allocation5 + $0x150] sm:$0xff]
    %v165 = vld [vmem:[#allocation5 + $0x158] sm:$0xff]
    %v166 = vld [vmem:[#allocation5 + $0x160] sm:$0xff]
    %v167 = vld [vmem:[#allocation5 + $0x168] sm:$0xff]
    %v168 = vld [vmem:[#allocation5 + $0x170] sm:$0xff]
    %v169 = vld [vmem:[#allocation5 + $0x178] sm:$0xff]
    %v170 = vld [vmem:[#allocation5 + $0x180] sm:$0xff]
    %v171 = vld [vmem:[#allocation5 + $0x188] sm:$0xff]
    %v172 = vld [vmem:[#allocation5 + $0x190] sm:$0xff]
    %v173 = vld [vmem:[#allocation5 + $0x198] sm:$0xff]
    %v174 = vld [vmem:[#allocation5 + $0x1a0] sm:$0xff]
    %v175 = vld [vmem:[#allocation5 + $0x1a8] sm:$0xff]
    %v176 = vld [vmem:[#allocation5 + $0x1b0] sm:$0xff]
    %v177 = vld [vmem:[#allocation5 + $0x1b8] sm:$0xff]
    %v178 = vld [vmem:[#allocation5 + $0x1c0] sm:$0xff]
    %v179 = vld [vmem:[#allocation5 + $0x1c8] sm:$0xff]
    %v180 = vld [vmem:[#allocation5 + $0x1d0] sm:$0xff]
    %v181 = vld [vmem:[#allocation5 + $0x1d8] sm:$0xff]
    %v182 = vld [vmem:[#allocation5 + $0x1e0] sm:$0xff]
    %v183 = vld [vmem:[#allocation5 + $0x1e8] sm:$0xff]
    %v184 = vld [vmem:[#allocation5 + $0x1f0] sm:$0xff]
    %v185 = vld [vmem:[#allocation5 + $0x1f8] sm:$0xff]
    %v186 = vld [vmem:[#allocation5 + $0x200] sm:$0xff]
    %v187 = vld [vmem:[#allocation5 + $0x208] sm:$0xff]
    %v188 = vld [vmem:[#allocation5 + $0x210] sm:$0xff]
    %v189 = vld [vmem:[#allocation5 + $0x218] sm:$0xff]
    %v190 = vld [vmem:[#allocation5 + $0x220] sm:$0xff]
    %v191 = vld [vmem:[#allocation5 + $0x228] sm:$0xff]
    %v192 = vld [vmem:[#allocation5 + $0x230] sm:$0xff]
    %v193 = vld [vmem:[#allocation5 + $0x238] sm:$0xff]
    %v194 = vld [vmem:[#allocation5 + $0x240] sm:$0xff]
    %v195 = vld [vmem:[#allocation5 + $0x248] sm:$0xff]
    %v196 = vld [vmem:[#allocation5 + $0x250] sm:$0xff]
    %v197 = vld [vmem:[#allocation5 + $0x258] sm:$0xff]
    %v198 = vld [vmem:[#allocation5 + $0x260] sm:$0xff]
    %v199 = vld [vmem:[#allocation5 + $0x268] sm:$0xff]
    %v200 = vld [vmem:[#allocation5 + $0x270] sm:$0xff]
    %v201 = vld [vmem:[#allocation5 + $0x278] sm:$0xff]
    %v202 = vld [vmem:[#allocation5 + $0x280] sm:$0xff]
    %v203 = vld [vmem:[#allocation5 + $0x288] sm:$0xff]
    %v204 = vld [vmem:[#allocation5 + $0x290] sm:$0xff]
    %v205 = vld [vmem:[#allocation5 + $0x298] sm:$0xff]
    %v206 = vld [vmem:[#allocation5 + $0x2a0] sm:$0xff]
    %v207 = vld [vmem:[#allocation5 + $0x2a8] sm:$0xff]
    %v208 = vld [vmem:[#allocation5 + $0x2b0] sm:$0xff]
    %v209 = vld [vmem:[#allocation5 + $0x2b8] sm:$0xff]
    %v210 = vld [vmem:[#allocation5 + $0x2c0] sm:$0xff]
    %v211 = vld [vmem:[#allocation5 + $0x2c8] sm:$0xff]
    %v212 = vld [vmem:[#allocation5 + $0x2d0] sm:$0xff]
    %v213 = vld [vmem:[#allocation5 + $0x2d8] sm:$0xff]
    %v214 = vld [vmem:[#allocation5 + $0x2e0] sm:$0xff]
    %v215 = vld [vmem:[#allocation5 + $0x2e8] sm:$0xff]
    %v216 = vld [vmem:[#allocation5 + $0x2f0] sm:$0xff]
    %v217 = vld [vmem:[#allocation5 + $0x2f8] sm:$0xff]
    %v218 = vld [vmem:[#allocation5 + $0x300] sm:$0xff]
    %v219 = vld [vmem:[#allocation5 + $0x308] sm:$0xff]
    %v220 = vld [vmem:[#allocation5 + $0x310] sm:$0xff]
    %v221 = vld [vmem:[#allocation5 + $0x318] sm:$0xff]
    %v222 = vld [vmem:[#allocation5 + $0x320] sm:$0xff]
    %v223 = vld [vmem:[#allocation5 + $0x328] sm:$0xff]
    %v224 = vld [vmem:[#allocation5 + $0x330] sm:$0xff]
    %v225 = vld [vmem:[#allocation5 + $0x338] sm:$0xff]
    %v226 = vld [vmem:[#allocation5 + $0x340] sm:$0xff]
    %v227 = vld [vmem:[#allocation5 + $0x348] sm:$0xff]
    %v228 = vld [vmem:[#allocation5 + $0x350] sm:$0xff]
    %v229 = vld [vmem:[#allocation5 + $0x358] sm:$0xff]
    %v230 = vld [vmem:[#allocation5 + $0x360] sm:$0xff]
    %v231 = vld [vmem:[#allocation5 + $0x368] sm:$0xff]
    %v232 = vld [vmem:[#allocation5 + $0x370] sm:$0xff]
    %v233 = vld [vmem:[#allocation5 + $0x378] sm:$0xff]
    %v234 = vld [vmem:[#allocation5 + $0x380] sm:$0xff]
    %v235 = vld [vmem:[#allocation5 + $0x388] sm:$0xff]
    %v236 = vld [vmem:[#allocation5 + $0x390] sm:$0xff]
    %v237 = vld [vmem:[#allocation5 + $0x398] sm:$0xff]
    %v238 = vld [vmem:[#allocation5 + $0x3a0] sm:$0xff]
    %v239 = vld [vmem:[#allocation5 + $0x3a8] sm:$0xff]
    %v240 = vld [vmem:[#allocation5 + $0x3b0] sm:$0xff]
    %v241 = vld [vmem:[#allocation5 + $0x3b8] sm:$0xff]
    %v242 = vld [vmem:[#allocation5 + $0x3c0] sm:$0xff]
    %v243 = vld [vmem:[#allocation5 + $0x3c8] sm:$0xff]
    %v244 = vld [vmem:[#allocation5 + $0x3d0] sm:$0xff]
    %v245 = vld [vmem:[#allocation5 + $0x3d8] sm:$0xff]
    %v246 = vld [vmem:[#allocation5 + $0x3e0] sm:$0xff]
    %v247 = vld [vmem:[#allocation5 + $0x3e8] sm:$0xff]
    %v248 = vld [vmem:[#allocation5 + $0x3f0] sm:$0xff]
    %v249 = vld [vmem:[#allocation5 + $0x3f8] sm:$0xff]
    %v250 = vld [vmem:[#allocation5 + $0x400] sm:$0xff]
    %v251 = vld [vmem:[#allocation5 + $0x408] sm:$0xff]
    %v252 = vld [vmem:[#allocation5 + $0x410] sm:$0xff]
    %v253 = vld [vmem:[#allocation5 + $0x418] sm:$0xff]
    %v254 = vld [vmem:[#allocation5 + $0x420] sm:$0xff]
    %v255 = vld [vmem:[#allocation5 + $0x428] sm:$0xff]
    %v256 = vld [vmem:[#allocation5 + $0x430] sm:$0xff]
    %v257 = vld [vmem:[#allocation5 + $0x438] sm:$0xff]
    %v258 = vld [vmem:[#allocation5 + $0x440] sm:$0xff]
    %v259 = vld [vmem:[#allocation5 + $0x448] sm:$0xff]
    %v260 = vld [vmem:[#allocation5 + $0x450] sm:$0xff]
    %v261 = vld [vmem:[#allocation5 + $0x458] sm:$0xff]
    %v262 = vld [vmem:[#allocation5 + $0x460] sm:$0xff]
    %v263 = vld [vmem:[#allocation5 + $0x468] sm:$0xff]
    %v264 = vld [vmem:[#allocation5 + $0x470] sm:$0xff]
    %v265 = vld [vmem:[#allocation5 + $0x478] sm:$0xff]
    %v266 = vld [vmem:[#allocation5 + $0x480] sm:$0xff]
    %v267 = vld [vmem:[#allocation5 + $0x488] sm:$0xff]
    %v268 = vld [vmem:[#allocation5 + $0x490] sm:$0xff]
    %v269 = vld [vmem:[#allocation5 + $0x498] sm:$0xff]
    %v270 = vld [vmem:[#allocation5 + $0x4a0] sm:$0xff]
    %v271 = vld [vmem:[#allocation5 + $0x4a8] sm:$0xff]
    %v272 = vld [vmem:[#allocation5 + $0x4b0] sm:$0xff]
    %v273 = vld [vmem:[#allocation5 + $0x4b8] sm:$0xff]
    %v274 = vld [vmem:[#allocation5 + $0x4c0] sm:$0xff]
    %v275 = vld [vmem:[#allocation5 + $0x4c8] sm:$0xff]
    %v276 = vld [vmem:[#allocation5 + $0x4d0] sm:$0xff]
    %v277 = vld [vmem:[#allocation5 + $0x4d8] sm:$0xff]
    %v278 = vld [vmem:[#allocation5 + $0x4e0] sm:$0xff]
    %v279 = vld [vmem:[#allocation5 + $0x4e8] sm:$0xff]
    %v280 = vld [vmem:[#allocation5 + $0x4f0] sm:$0xff]
    %v281 = vld [vmem:[#allocation5 + $0x4f8] sm:$0xff]
    %v282 = vld [vmem:[#allocation5 + $0x500] sm:$0xff]
    %v283 = vld [vmem:[#allocation5 + $0x508] sm:$0xff]
    %v284 = vld [vmem:[#allocation5 + $0x510] sm:$0xff]
    %v285 = vld [vmem:[#allocation5 + $0x518] sm:$0xff]
    %v286 = vld [vmem:[#allocation5 + $0x520] sm:$0xff]
    %v287 = vld [vmem:[#allocation5 + $0x528] sm:$0xff]
    %v288 = vld [vmem:[#allocation5 + $0x530] sm:$0xff]
    %v289 = vld [vmem:[#allocation5 + $0x538] sm:$0xff]
    %v290 = vld [vmem:[#allocation5 + $0x540] sm:$0xff]
    %v291 = vld [vmem:[#allocation5 + $0x548] sm:$0xff]
    %v292 = vld [vmem:[#allocation5 + $0x550] sm:$0xff]
    %v293 = vld [vmem:[#allocation5 + $0x558] sm:$0xff]
    %v294 = vld [vmem:[#allocation5 + $0x560] sm:$0xff]
    %v295 = vld [vmem:[#allocation5 + $0x568] sm:$0xff]
    %v296 = vld [vmem:[#allocation5 + $0x570] sm:$0xff]
    %v297 = vld [vmem:[#allocation5 + $0x578] sm:$0xff]
    %v298 = vld [vmem:[#allocation5 + $0x580] sm:$0xff]
    %v299 = vld [vmem:[#allocation5 + $0x588] sm:$0xff]
    %v300 = vld [vmem:[#allocation5 + $0x590] sm:$0xff]
    %v301 = vld [vmem:[#allocation5 + $0x598] sm:$0xff]
    %v302 = vld [vmem:[#allocation5 + $0x5a0] sm:$0xff]
    %v303 = vld [vmem:[#allocation5 + $0x5a8] sm:$0xff]
    %v304 = vld [vmem:[#allocation5 + $0x5b0] sm:$0xff]
    %v305 = vld [vmem:[#allocation5 + $0x5b8] sm:$0xff]
    %v306 = vld [vmem:[#allocation5 + $0x5c0] sm:$0xff]
    %v307 = vld [vmem:[#allocation5 + $0x5c8] sm:$0xff]
    %v308 = vld [vmem:[#allocation5 + $0x5d0] sm:$0xff]
    %v309 = vld [vmem:[#allocation5 + $0x5d8] sm:$0xff]
    %v310 = vld [vmem:[#allocation5 + $0x5e0] sm:$0xff]
    %v311 = vld [vmem:[#allocation5 + $0x5e8] sm:$0xff]
    %v312 = vld [vmem:[#allocation5 + $0x5f0] sm:$0xff]
    %v313 = vld [vmem:[#allocation5 + $0x5f8] sm:$0xff]
    %v314 = vld [vmem:[#allocation5 + $0x600] sm:$0xff]
    %v315 = vld [vmem:[#allocation5 + $0x608] sm:$0xff]
    %v316 = vld [vmem:[#allocation5 + $0x610] sm:$0xff]
    %v317 = vld [vmem:[#allocation5 + $0x618] sm:$0xff]
    %v318 = vld [vmem:[#allocation5 + $0x620] sm:$0xff]
    %v319 = vld [vmem:[#allocation5 + $0x628] sm:$0xff]
    %v320 = vld [vmem:[#allocation5 + $0x630] sm:$0xff]
    %v321 = vld [vmem:[#allocation5 + $0x638] sm:$0xff]
    %v322 = vld [vmem:[#allocation5 + $0x640] sm:$0xff]
    %v323 = vld [vmem:[#allocation5 + $0x648] sm:$0xff]
    %v324 = vld [vmem:[#allocation5 + $0x650] sm:$0xff]
    %v325 = vld [vmem:[#allocation5 + $0x658] sm:$0xff]
    %v326 = vld [vmem:[#allocation5 + $0x660] sm:$0xff]
    %v327 = vld [vmem:[#allocation5 + $0x668] sm:$0xff]
    %v328 = vld [vmem:[#allocation5 + $0x670] sm:$0xff]
    %v329 = vld [vmem:[#allocation5 + $0x678] sm:$0xff]
    %v330 = vld [vmem:[#allocation5 + $0x680] sm:$0xff]
    %v331 = vld [vmem:[#allocation5 + $0x688] sm:$0xff]
    %v332 = vld [vmem:[#allocation5 + $0x690] sm:$0xff]
    %v333 = vld [vmem:[#allocation5 + $0x698] sm:$0xff]
    %v334 = vld [vmem:[#allocation5 + $0x6a0] sm:$0xff]
    %v335 = vld [vmem:[#allocation5 + $0x6a8] sm:$0xff]
    %v336 = vld [vmem:[#allocation5 + $0x6b0] sm:$0xff]
    %v337 = vld [vmem:[#allocation5 + $0x6b8] sm:$0xff]
    %v338 = vld [vmem:[#allocation5 + $0x6c0] sm:$0xff]
    %v339 = vld [vmem:[#allocation5 + $0x6c8] sm:$0xff]
    %v340 = vld [vmem:[#allocation5 + $0x6d0] sm:$0xff]
    %v341 = vld [vmem:[#allocation5 + $0x6d8] sm:$0xff]
    %v342 = vld [vmem:[#allocation5 + $0x6e0] sm:$0xff]
    %v343 = vld [vmem:[#allocation5 + $0x6e8] sm:$0xff]
    %v344 = vld [vmem:[#allocation5 + $0x6f0] sm:$0xff]
    %v345 = vld [vmem:[#allocation5 + $0x6f8] sm:$0xff]
    %v346 = vld [vmem:[#allocation5 + $0x700] sm:$0xff]
    %v347 = vld [vmem:[#allocation5 + $0x708] sm:$0xff]
    %v348 = vld [vmem:[#allocation5 + $0x710] sm:$0xff]
    %v349 = vld [vmem:[#allocation5 + $0x718] sm:$0xff]
    %v350 = vld [vmem:[#allocation5 + $0x720] sm:$0xff]
    %v351 = vld [vmem:[#allocation5 + $0x728] sm:$0xff]
    %v352 = vld [vmem:[#allocation5 + $0x730] sm:$0xff]
    %v353 = vld [vmem:[#allocation5 + $0x738] sm:$0xff]
    %v354 = vld [vmem:[#allocation5 + $0x740] sm:$0xff]
    %v355 = vld [vmem:[#allocation5 + $0x748] sm:$0xff]
    %v356 = vld [vmem:[#allocation5 + $0x750] sm:$0xff]
    %v357 = vld [vmem:[#allocation5 + $0x758] sm:$0xff]
    %v358 = vld [vmem:[#allocation5 + $0x760] sm:$0xff]
    %v359 = vld [vmem:[#allocation5 + $0x768] sm:$0xff]
    %v360 = vld [vmem:[#allocation5 + $0x770] sm:$0xff]
    %v361 = vld [vmem:[#allocation5 + $0x778] sm:$0xff]
    %v362 = vld [vmem:[#allocation5 + $0x780] sm:$0xff]
    %v363 = vld [vmem:[#allocation5 + $0x788] sm:$0xff]
    %v364 = vld [vmem:[#allocation5 + $0x790] sm:$0xff]
    %v365 = vld [vmem:[#allocation5 + $0x798] sm:$0xff]
    %v366 = vld [vmem:[#allocation5 + $0x7a0] sm:$0xff]
    %v367 = vld [vmem:[#allocation5 + $0x7a8] sm:$0xff]
    %v368 = vld [vmem:[#allocation5 + $0x7b0] sm:$0xff]
    %v369 = vld [vmem:[#allocation5 + $0x7b8] sm:$0xff]
    %v370 = vld [vmem:[#allocation5 + $0x7c0] sm:$0xff]
    %v371 = vld [vmem:[#allocation5 + $0x7c8] sm:$0xff]
    %v372 = vld [vmem:[#allocation5 + $0x7d0] sm:$0xff]
    %v373 = vld [vmem:[#allocation5 + $0x7d8] sm:$0xff]
    %v374 = vld [vmem:[#allocation5 + $0x7e0] sm:$0xff]
    %v375 = vld [vmem:[#allocation5 + $0x7e8] sm:$0xff]
    %v376 = vld [vmem:[#allocation5 + $0x7f0] sm:$0xff]
    %v377 = vld [vmem:[#allocation5 + $0x7f8] sm:$0xff]
    %v378 = vld [vmem:[#allocation5 + $0x800] sm:$0xff]
    %v379 = vld [vmem:[#allocation5 + $0x808] sm:$0xff]
    %v380 = vld [vmem:[#allocation5 + $0x810] sm:$0xff]
    %v381 = vld [vmem:[#allocation5 + $0x818] sm:$0xff]
    %v382 = vld [vmem:[#allocation5 + $0x820] sm:$0xff]
    %v383 = vld [vmem:[#allocation5 + $0x828] sm:$0xff]
    %v384 = vld [vmem:[#allocation5 + $0x830] sm:$0xff]
    %v385 = vld [vmem:[#allocation5 + $0x838] sm:$0xff]
    %v386 = vld [vmem:[#allocation5 + $0x840] sm:$0xff]
    %v387 = vld [vmem:[#allocation5 + $0x848] sm:$0xff]
    %v388 = vld [vmem:[#allocation5 + $0x850] sm:$0xff]
    %v389 = vld [vmem:[#allocation5 + $0x858] sm:$0xff]
    %v390 = vld [vmem:[#allocation5 + $0x860] sm:$0xff]
    %v391 = vld [vmem:[#allocation5 + $0x868] sm:$0xff]
    %v392 = vld [vmem:[#allocation5 + $0x870] sm:$0xff]
    %v393 = vld [vmem:[#allocation5 + $0x878] sm:$0xff]
    %v394 = vld [vmem:[#allocation5 + $0x880] sm:$0xff]
    %v395 = vld [vmem:[#allocation5 + $0x888] sm:$0xff]
    %v396 = vld [vmem:[#allocation5 + $0x890] sm:$0xff]
    %v397 = vld [vmem:[#allocation5 + $0x898] sm:$0xff]
    %v398 = vld [vmem:[#allocation5 + $0x8a0] sm:$0xff]
    %v399 = vld [vmem:[#allocation5 + $0x8a8] sm:$0xff]
    %v400 = vld [vmem:[#allocation5 + $0x8b0] sm:$0xff]
    %v401 = vld [vmem:[#allocation5 + $0x8b8] sm:$0xff]
    %v402 = vld [vmem:[#allocation5 + $0x8c0] sm:$0xff]
    %v403 = vld [vmem:[#allocation5 + $0x8c8] sm:$0xff]
    %v404 = vld [vmem:[#allocation5 + $0x8d0] sm:$0xff]
    %v405 = vld [vmem:[#allocation5 + $0x8d8] sm:$0xff]
    %v406 = vld [vmem:[#allocation5 + $0x8e0] sm:$0xff]
    %v407 = vld [vmem:[#allocation5 + $0x8e8] sm:$0xff]
    %v408 = vld [vmem:[#allocation5 + $0x8f0] sm:$0xff]
    %v409 = vld [vmem:[#allocation5 + $0x8f8] sm:$0xff]
    %v410 = vld [vmem:[#allocation5 + $0x900] sm:$0xff]
    %v411 = vld [vmem:[#allocation5 + $0x908] sm:$0xff]
    %v412 = vld [vmem:[#allocation5 + $0x910] sm:$0xff]
    %v413 = vld [vmem:[#allocation5 + $0x918] sm:$0xff]
    %v414 = vld [vmem:[#allocation5 + $0x920] sm:$0xff]
    %v415 = vld [vmem:[#allocation5 + $0x928] sm:$0xff]
    %v416 = vld [vmem:[#allocation5 + $0x930] sm:$0xff]
    %v417 = vld [vmem:[#allocation5 + $0x938] sm:$0xff]
    %v418 = vld [vmem:[#allocation5 + $0x940] sm:$0xff]
    %v419 = vld [vmem:[#allocation5 + $0x948] sm:$0xff]
    %v420 = vld [vmem:[#allocation5 + $0x950] sm:$0xff]
    %v421 = vld [vmem:[#allocation5 + $0x958] sm:$0xff]
    %v422 = vld [vmem:[#allocation5 + $0x960] sm:$0xff]
    %v423 = vld [vmem:[#allocation5 + $0x968] sm:$0xff]
    %v424 = vld [vmem:[#allocation5 + $0x970] sm:$0xff]
    %v425 = vld [vmem:[#allocation5 + $0x978] sm:$0xff]
    %v426 = vld [vmem:[#allocation5 + $0x980] sm:$0xff]
    %v427 = vld [vmem:[#allocation5 + $0x988] sm:$0xff]
    %v428 = vld [vmem:[#allocation5 + $0x990] sm:$0xff]
    %v429 = vld [vmem:[#allocation5 + $0x998] sm:$0xff]
    %v430 = vld [vmem:[#allocation5 + $0x9a0] sm:$0xff]
    %v431 = vld [vmem:[#allocation5 + $0x9a8] sm:$0xff]
    %v432 = vld [vmem:[#allocation5 + $0x9b0] sm:$0xff]
    %v433 = vld [vmem:[#allocation5 + $0x9b8] sm:$0xff]
    %v434 = vld [vmem:[#allocation5 + $0x9c0] sm:$0xff]
    %v435 = vld [vmem:[#allocation5 + $0x9c8] sm:$0xff]
    %v436 = vld [vmem:[#allocation5 + $0x9d0] sm:$0xff]
    %v437 = vld [vmem:[#allocation5 + $0x9d8] sm:$0xff]
    %v438 = vld [vmem:[#allocation5 + $0x9e0] sm:$0xff]
    %v439 = vld [vmem:[#allocation5 + $0x9e8] sm:$0xff]
    %v440 = vld [vmem:[#allocation5 + $0x9f0] sm:$0xff]
    %v441 = vld [vmem:[#allocation5 + $0x9f8] sm:$0xff]
    %v442 = vld [vmem:[#allocation5 + $0xa00] sm:$0xff]
    %v443 = vld [vmem:[#allocation5 + $0xa08] sm:$0xff]
    %v444 = vld [vmem:[#allocation5 + $0xa10] sm:$0xff]
    %v445 = vld [vmem:[#allocation5 + $0xa18] sm:$0xff]
    %v446 = vld [vmem:[#allocation5 + $0xa20] sm:$0xff]
    %v447 = vld [vmem:[#allocation5 + $0xa28] sm:$0xff]
    %v448 = vld [vmem:[#allocation5 + $0xa30] sm:$0xff]
    %v449 = vld [vmem:[#allocation5 + $0xa38] sm:$0xff]
    %v450 = vld [vmem:[#allocation5 + $0xa40] sm:$0xff]
    %v451 = vld [vmem:[#allocation5 + $0xa48] sm:$0xff]
    %v452 = vld [vmem:[#allocation5 + $0xa50] sm:$0xff]
    %v453 = vld [vmem:[#allocation5 + $0xa58] sm:$0xff]
    %v454 = vld [vmem:[#allocation5 + $0xa60] sm:$0xff]
    %v455 = vld [vmem:[#allocation5 + $0xa68] sm:$0xff]
    %v456 = vld [vmem:[#allocation5 + $0xa70] sm:$0xff]
    %v457 = vld [vmem:[#allocation5 + $0xa78] sm:$0xff]
    %v458 = vld [vmem:[#allocation5 + $0xa80] sm:$0xff]
    %v459 = vld [vmem:[#allocation5 + $0xa88] sm:$0xff]
    %v460 = vld [vmem:[#allocation5 + $0xa90] sm:$0xff]
    %v461 = vld [vmem:[#allocation5 + $0xa98] sm:$0xff]
    %v462 = vld [vmem:[#allocation5 + $0xaa0] sm:$0xff]
    %v463 = vld [vmem:[#allocation5 + $0xaa8] sm:$0xff]
    %v464 = vld [vmem:[#allocation5 + $0xab0] sm:$0xff]
    %v465 = vld [vmem:[#allocation5 + $0xab8] sm:$0xff]
    %v466 = vld [vmem:[#allocation5 + $0xac0] sm:$0xff]
    %v467 = vld [vmem:[#allocation5 + $0xac8] sm:$0xff]
    %v468 = vld [vmem:[#allocation5 + $0xad0] sm:$0xff]
    %v469 = vld [vmem:[#allocation5 + $0xad8] sm:$0xff]
    %v470 = vld [vmem:[#allocation5 + $0xae0] sm:$0xff]
    %v471 = vld [vmem:[#allocation5 + $0xae8] sm:$0xff]
    %v472 = vld [vmem:[#allocation5 + $0xaf0] sm:$0xff]
    %v473 = vld [vmem:[#allocation5 + $0xaf8] sm:$0xff]
    %v474 = vld [vmem:[#allocation5 + $0xb00] sm:$0xff]
    %v475 = vld [vmem:[#allocation5 + $0xb08] sm:$0xff]
    %v476 = vld [vmem:[#allocation5 + $0xb10] sm:$0xff]
    %v477 = vld [vmem:[#allocation5 + $0xb18] sm:$0xff]
    %v478 = vld [vmem:[#allocation5 + $0xb20] sm:$0xff]
    %v479 = vld [vmem:[#allocation5 + $0xb28] sm:$0xff]
    %v480 = vld [vmem:[#allocation5 + $0xb30] sm:$0xff]
    %v481 = vld [vmem:[#allocation5 + $0xb38] sm:$0xff]
    %v482 = vld [vmem:[#allocation5 + $0xb40] sm:$0xff]
    %v483 = vld [vmem:[#allocation5 + $0xb48] sm:$0xff]
    %v484 = vld [vmem:[#allocation5 + $0xb50] sm:$0xff]
    %v485 = vld [vmem:[#allocation5 + $0xb58] sm:$0xff]
    %v486 = vld [vmem:[#allocation5 + $0xb60] sm:$0xff]
    %v487 = vld [vmem:[#allocation5 + $0xb68] sm:$0xff]
    %v488 = vld [vmem:[#allocation5 + $0xb70] sm:$0xff]
    %v489 = vld [vmem:[#allocation5 + $0xb78] sm:$0xff]
    %v490 = vld [vmem:[#allocation5 + $0xb80] sm:$0xff]
    %v491 = vld [vmem:[#allocation5 + $0xb88] sm:$0xff]
    %v492 = vld [vmem:[#allocation5 + $0xb90] sm:$0xff]
    %v493 = vld [vmem:[#allocation5 + $0xb98] sm:$0xff]
    %v494 = vld [vmem:[#allocation5 + $0xba0] sm:$0xff]
    %v495 = vld [vmem:[#allocation5 + $0xba8] sm:$0xff]
    %v496 = vld [vmem:[#allocation5 + $0xbb0] sm:$0xff]
    %v497 = vld [vmem:[#allocation5 + $0xbb8] sm:$0xff]
    %v498 = vld [vmem:[#allocation5 + $0xbc0] sm:$0xff]
    %v499 = vld [vmem:[#allocation5 + $0xbc8] sm:$0xff]
    %v500 = vld [vmem:[#allocation5 + $0xbd0] sm:$0xff]
    %v501 = vld [vmem:[#allocation5 + $0xbd8] sm:$0xff]
    %v502 = vld [vmem:[#allocation5 + $0xbe0] sm:$0xff]
    %v503 = vld [vmem:[#allocation5 + $0xbe8] sm:$0xff]
    %v504 = vld [vmem:[#allocation5 + $0xbf0] sm:$0xff]
    %v505 = vld [vmem:[#allocation5 + $0xbf8] sm:$0xff]
    %v506 = vld [vmem:[#allocation5 + $0xc00] sm:$0xff]
    %v507 = vld [vmem:[#allocation5 + $0xc08] sm:$0xff]
    %v508 = vld [vmem:[#allocation5 + $0xc10] sm:$0xff]
    %v509 = vld [vmem:[#allocation5 + $0xc18] sm:$0xff]
    %v510 = vld [vmem:[#allocation5 + $0xc20] sm:$0xff]
    %v511 = vld [vmem:[#allocation5 + $0xc28] sm:$0xff]
    %v512 = vld [vmem:[#allocation5 + $0xc30] sm:$0xff]
    %v513 = vld [vmem:[#allocation5 + $0xc38] sm:$0xff]
    %v514 = vld [vmem:[#allocation5 + $0xc40] sm:$0xff]
    %v515 = vld [vmem:[#allocation5 + $0xc48] sm:$0xff]
    %v516 = vld [vmem:[#allocation5 + $0xc50] sm:$0xff]
    %v517 = vld [vmem:[#allocation5 + $0xc58] sm:$0xff]
    %v518 = vld [vmem:[#allocation5 + $0xc60] sm:$0xff]
    %v519 = vld [vmem:[#allocation5 + $0xc68] sm:$0xff]
    %v520 = vld [vmem:[#allocation5 + $0xc70] sm:$0xff]
    %v521 = vld [vmem:[#allocation5 + $0xc78] sm:$0xff]
    %v522 = vld [vmem:[#allocation5 + $0xc80] sm:$0xff]
    %v523 = vld [vmem:[#allocation5 + $0xc88] sm:$0xff]
    %v524 = vld [vmem:[#allocation5 + $0xc90] sm:$0xff]
    %v525 = vld [vmem:[#allocation5 + $0xc98] sm:$0xff]
    %v526 = vld [vmem:[#allocation5 + $0xca0] sm:$0xff]
    %v527 = vld [vmem:[#allocation5 + $0xca8] sm:$0xff]
    %v528 = vld [vmem:[#allocation5 + $0xcb0] sm:$0xff]
    %v529 = vld [vmem:[#allocation5 + $0xcb8] sm:$0xff]
    %v530 = vld [vmem:[#allocation5 + $0xcc0] sm:$0xff]
    %v531 = vld [vmem:[#allocation5 + $0xcc8] sm:$0xff]
    %v532 = vld [vmem:[#allocation5 + $0xcd0] sm:$0xff]
    %v533 = vld [vmem:[#allocation5 + $0xcd8] sm:$0xff]
    %v534 = vld [vmem:[#allocation5 + $0xce0] sm:$0xff]
    %v535 = vld [vmem:[#allocation5 + $0xce8] sm:$0xff]
    %v536 = vld [vmem:[#allocation5 + $0xcf0] sm:$0xff]
    %v537 = vld [vmem:[#allocation5 + $0xcf8] sm:$0xff]
    %v538 = vld [vmem:[#allocation5 + $0xd00] sm:$0xff]
    %v539 = vld [vmem:[#allocation5 + $0xd08] sm:$0xff]
    %v540 = vld [vmem:[#allocation5 + $0xd10] sm:$0xff]
    %v541 = vld [vmem:[#allocation5 + $0xd18] sm:$0xff]
    %v542 = vld [vmem:[#allocation5 + $0xd20] sm:$0xff]
    %v543 = vld [vmem:[#allocation5 + $0xd28] sm:$0xff]
    %v544 = vld [vmem:[#allocation5 + $0xd30] sm:$0xff]
    %v545 = vld [vmem:[#allocation5 + $0xd38] sm:$0xff]
    %v546 = vld [vmem:[#allocation5 + $0xd40] sm:$0xff]
    %v547 = vld [vmem:[#allocation5 + $0xd48] sm:$0xff]
    %v548 = vld [vmem:[#allocation5 + $0xd50] sm:$0xff]
    %v549 = vld [vmem:[#allocation5 + $0xd58] sm:$0xff]
    %v550 = vld [vmem:[#allocation5 + $0xd60] sm:$0xff]
    %v551 = vld [vmem:[#allocation5 + $0xd68] sm:$0xff]
    %v552 = vld [vmem:[#allocation5 + $0xd70] sm:$0xff]
    %v553 = vld [vmem:[#allocation5 + $0xd78] sm:$0xff]
    %v554 = vld [vmem:[#allocation5 + $0xd80] sm:$0xff]
    %v555 = vld [vmem:[#allocation5 + $0xd88] sm:$0xff]
    %v556 = vld [vmem:[#allocation5 + $0xd90] sm:$0xff]
    %v557 = vld [vmem:[#allocation5 + $0xd98] sm:$0xff]
    %v558 = vld [vmem:[#allocation5 + $0xda0] sm:$0xff]
    %v559 = vld [vmem:[#allocation5 + $0xda8] sm:$0xff]
    %v560 = vld [vmem:[#allocation5 + $0xdb0] sm:$0xff]
    %v561 = vld [vmem:[#allocation5 + $0xdb8] sm:$0xff]
    %v562 = vld [vmem:[#allocation5 + $0xdc0] sm:$0xff]
    %v563 = vld [vmem:[#allocation5 + $0xdc8] sm:$0xff]
    %v564 = vld [vmem:[#allocation5 + $0xdd0] sm:$0xff]
    %v565 = vld [vmem:[#allocation5 + $0xdd8] sm:$0xff]
    %v566 = vld [vmem:[#allocation5 + $0xde0] sm:$0xff]
    %v567 = vld [vmem:[#allocation5 + $0xde8] sm:$0xff]
    %v568 = vld [vmem:[#allocation5 + $0xdf0] sm:$0xff]
    %v569 = vld [vmem:[#allocation5 + $0xdf8] sm:$0xff]
    %v570 = vld [vmem:[#allocation5 + $0xe00] sm:$0xff]
    %v571 = vld [vmem:[#allocation5 + $0xe08] sm:$0xff]
    %v572 = vld [vmem:[#allocation5 + $0xe10] sm:$0xff]
    %v573 = vld [vmem:[#allocation5 + $0xe18] sm:$0xff]
    %v574 = vld [vmem:[#allocation5 + $0xe20] sm:$0xff]
    %v575 = vld [vmem:[#allocation5 + $0xe28] sm:$0xff]
    %v576 = vld [vmem:[#allocation5 + $0xe30] sm:$0xff]
    %v577 = vld [vmem:[#allocation5 + $0xe38] sm:$0xff]
    %v578 = vld [vmem:[#allocation5 + $0xe40] sm:$0xff]
    %v579 = vld [vmem:[#allocation5 + $0xe48] sm:$0xff]
    %v580 = vld [vmem:[#allocation5 + $0xe50] sm:$0xff]
    %v581 = vld [vmem:[#allocation5 + $0xe58] sm:$0xff]
    %v582 = vld [vmem:[#allocation5 + $0xe60] sm:$0xff]
    %v583 = vld [vmem:[#allocation5 + $0xe68] sm:$0xff]
    %v584 = vld [vmem:[#allocation5 + $0xe70] sm:$0xff]
    %v585 = vld [vmem:[#allocation5 + $0xe78] sm:$0xff]
    %v586 = vld [vmem:[#allocation5 + $0xe80] sm:$0xff]
    %v587 = vld [vmem:[#allocation5 + $0xe88] sm:$0xff]
    %v588 = vld [vmem:[#allocation5 + $0xe90] sm:$0xff]
    %v589 = vld [vmem:[#allocation5 + $0xe98] sm:$0xff]
    %v590 = vld [vmem:[#allocation5 + $0xea0] sm:$0xff]
    %v591 = vld [vmem:[#allocation5 + $0xea8] sm:$0xff]
    %v592 = vld [vmem:[#allocation5 + $0xeb0] sm:$0xff]
    %v593 = vld [vmem:[#allocation5 + $0xeb8] sm:$0xff]
    %v594 = vld [vmem:[#allocation5 + $0xec0] sm:$0xff]
    %v595 = vld [vmem:[#allocation5 + $0xec8] sm:$0xff]
    %v596 = vld [vmem:[#allocation5 + $0xed0] sm:$0xff]
    %v597 = vld [vmem:[#allocation5 + $0xed8] sm:$0xff]
    %v598 = vld [vmem:[#allocation5 + $0xee0] sm:$0xff]
    %v599 = vld [vmem:[#allocation5 + $0xee8] sm:$0xff]
    %v600 = vld [vmem:[#allocation5 + $0xef0] sm:$0xff]
    %v601 = vld [vmem:[#allocation5 + $0xef8] sm:$0xff]
    %v602 = vld [vmem:[#allocation5 + $0xf00] sm:$0xff]
    %v603 = vld [vmem:[#allocation5 + $0xf08] sm:$0xff]
    %v604 = vld [vmem:[#allocation5 + $0xf10] sm:$0xff]
    %v605 = vld [vmem:[#allocation5 + $0xf18] sm:$0xff]
    %v606 = vld [vmem:[#allocation5 + $0xf20] sm:$0xff]
    %v607 = vld [vmem:[#allocation5 + $0xf28] sm:$0xff]
    %v608 = vld [vmem:[#allocation5 + $0xf30] sm:$0xff]
    %v609 = vld [vmem:[#allocation5 + $0xf38] sm:$0xff]
    %v610 = vld [vmem:[#allocation5 + $0xf40] sm:$0xff]
    %v611 = vld [vmem:[#allocation5 + $0xf48] sm:$0xff]
    %v612 = vld [vmem:[#allocation5 + $0xf50] sm:$0xff]
    %v613 = vld [vmem:[#allocation5 + $0xf58] sm:$0xff]
    %v614 = vld [vmem:[#allocation5 + $0xf60] sm:$0xff]
    %v615 = vld [vmem:[#allocation5 + $0xf68] sm:$0xff]
    %v616 = vld [vmem:[#allocation5 + $0xf70] sm:$0xff]
    %v617 = vld [vmem:[#allocation5 + $0xf78] sm:$0xff]
    %v618 = vld [vmem:[#allocation5 + $0xf80] sm:$0xff]
    %v619 = vld [vmem:[#allocation5 + $0xf88] sm:$0xff]
    %v620 = vld [vmem:[#allocation5 + $0xf90] sm:$0xff]
    %v621 = vld [vmem:[#allocation5 + $0xf98] sm:$0xff]
    %v622 = vld [vmem:[#allocation5 + $0xfa0] sm:$0xff]
    %v623 = vld [vmem:[#allocation5 + $0xfa8] sm:$0xff]
    %v624 = vld [vmem:[#allocation5 + $0xfb0] sm:$0xff]
    %v625 = vld [vmem:[#allocation5 + $0xfb8] sm:$0xff]
    %v626 = vld [vmem:[#allocation5 + $0xfc0] sm:$0xff]
    %v627 = vld [vmem:[#allocation5 + $0xfc8] sm:$0xff]
    %v628 = vld [vmem:[#allocation5 + $0xfd0] sm:$0xff]
    %v629 = vld [vmem:[#allocation5 + $0xfd8] sm:$0xff]
    %v630 = vld [vmem:[#allocation5 + $0xfe0] sm:$0xff]
    %v631 = vld [vmem:[#allocation5 + $0xfe8] sm:$0xff]
    %v632 = vld [vmem:[#allocation5 + $0xff0] sm:$0xff]
    %v633 = vld [vmem:[#allocation5 + $0xff8] sm:$0xff]
    %v634 = vld [vmem:[#allocation5 + $0x1000] sm:$0xff]
    %v635 = vld [vmem:[#allocation5 + $0x1008] sm:$0xff]
    %v636 = vld [vmem:[#allocation5 + $0x1010] sm:$0xff]
    %v637 = vld [vmem:[#allocation5 + $0x1018] sm:$0xff]
    %v638 = vld [vmem:[#allocation5 + $0x1020] sm:$0xff]
    %v639 = vld [vmem:[#allocation5 + $0x1028] sm:$0xff]
    %v640 = vld [vmem:[#allocation5 + $0x1030] sm:$0xff]
    %v641 = vld [vmem:[#allocation5 + $0x1038] sm:$0xff]
    %v642 = vld [vmem:[#allocation5 + $0x1040] sm:$0xff]
    %v643 = vld [vmem:[#allocation5 + $0x1048] sm:$0xff]
    %v644 = vld [vmem:[#allocation5 + $0x1050] sm:$0xff]
    %v645 = vld [vmem:[#allocation5 + $0x1058] sm:$0xff]
    %v646 = vld [vmem:[#allocation5 + $0x1060] sm:$0xff]
    %v647 = vld [vmem:[#allocation5 + $0x1068] sm:$0xff]
    %v648 = vld [vmem:[#allocation5 + $0x1070] sm:$0xff]
    %v649 = vld [vmem:[#allocation5 + $0x1078] sm:$0xff]
    %v650 = vld [vmem:[#allocation5 + $0x1080] sm:$0xff]
    %v651 = vld [vmem:[#allocation5 + $0x1088] sm:$0xff]
    %v652 = vld [vmem:[#allocation5 + $0x1090] sm:$0xff]
    %v653 = vld [vmem:[#allocation5 + $0x1098] sm:$0xff]
    %v654 = vld [vmem:[#allocation5 + $0x10a0] sm:$0xff]
    %v655 = vld [vmem:[#allocation5 + $0x10a8] sm:$0xff]
    %v656 = vld [vmem:[#allocation5 + $0x10b0] sm:$0xff]
    %v657 = vld [vmem:[#allocation5 + $0x10b8] sm:$0xff]
    %v658 = vld [vmem:[#allocation5 + $0x10c0] sm:$0xff]
    %v659 = vld [vmem:[#allocation5 + $0x10c8] sm:$0xff]
    %v660 = vld [vmem:[#allocation5 + $0x10d0] sm:$0xff]
    %v661 = vld [vmem:[#allocation5 + $0x10d8] sm:$0xff]
    %v662 = vld [vmem:[#allocation5 + $0x10e0] sm:$0xff]
    %v663 = vld [vmem:[#allocation5 + $0x10e8] sm:$0xff]
    %v664 = vld [vmem:[#allocation5 + $0x10f0] sm:$0xff]
    %v665 = vld [vmem:[#allocation5 + $0x10f8] sm:$0xff]
    %v666 = vld [vmem:[#allocation5 + $0x1100] sm:$0xff]
    %v667 = vld [vmem:[#allocation5 + $0x1108] sm:$0xff]
    %v668 = vld [vmem:[#allocation5 + $0x1110] sm:$0xff]
    %v669 = vld [vmem:[#allocation5 + $0x1118] sm:$0xff]
    %v670 = vld [vmem:[#allocation5 + $0x1120] sm:$0xff]
    %v671 = vld [vmem:[#allocation5 + $0x1128] sm:$0xff]
    %v672 = vld [vmem:[#allocation5 + $0x1130] sm:$0xff]
    %v673 = vld [vmem:[#allocation5 + $0x1138] sm:$0xff]
    %v674 = vld [vmem:[#allocation5 + $0x1140] sm:$0xff]
    %v675 = vld [vmem:[#allocation5 + $0x1148] sm:$0xff]
    %v676 = vld [vmem:[#allocation5 + $0x1150] sm:$0xff]
    %v677 = vld [vmem:[#allocation5 + $0x1158] sm:$0xff]
    %v678 = vld [vmem:[#allocation5 + $0x1160] sm:$0xff]
    %v679 = vld [vmem:[#allocation5 + $0x1168] sm:$0xff]
    %v680 = vld [vmem:[#allocation5 + $0x1170] sm:$0xff]
    %v681 = vld [vmem:[#allocation5 + $0x1178] sm:$0xff]
    %v682 = vld [vmem:[#allocation5 + $0x1180] sm:$0xff]
    %v683 = vld [vmem:[#allocation5 + $0x1188] sm:$0xff]
    %v684 = vld [vmem:[#allocation5 + $0x1190] sm:$0xff]
    %v685 = vld [vmem:[#allocation5 + $0x1198] sm:$0xff]
    %v686 = vld [vmem:[#allocation5 + $0x11a0] sm:$0xff]
    %v687 = vld [vmem:[#allocation5 + $0x11a8] sm:$0xff]
    %v688 = vld [vmem:[#allocation5 + $0x11b0] sm:$0xff]
    %v689 = vld [vmem:[#allocation5 + $0x11b8] sm:$0xff]
    %v690 = vld [vmem:[#allocation5 + $0x11c0] sm:$0xff]
    %v691 = vld [vmem:[#allocation5 + $0x11c8] sm:$0xff]
    %v692 = vld [vmem:[#allocation5 + $0x11d0] sm:$0xff]
    %v693 = vld [vmem:[#allocation5 + $0x11d8] sm:$0xff]
    %v694 = vld [vmem:[#allocation5 + $0x11e0] sm:$0xff]
    %v695 = vld [vmem:[#allocation5 + $0x11e8] sm:$0xff]
    %v696 = vld [vmem:[#allocation5 + $0x11f0] sm:$0xff]
    %v697 = vld [vmem:[#allocation5 + $0x11f8] sm:$0xff]
    %v698 = vld [vmem:[#allocation5 + $0x1200] sm:$0xff]
    %v699 = vld [vmem:[#allocation5 + $0x1208] sm:$0xff]
    %v700 = vld [vmem:[#allocation5 + $0x1210] sm:$0xff]
    %v701 = vld [vmem:[#allocation5 + $0x1218] sm:$0xff]
    %v702 = vld [vmem:[#allocation5 + $0x1220] sm:$0xff]
    %v703 = vld [vmem:[#allocation5 + $0x1228] sm:$0xff]
    %v704 = vld [vmem:[#allocation5 + $0x1230] sm:$0xff]
    %v705 = vld [vmem:[#allocation5 + $0x1238] sm:$0xff]
    %v706 = vld [vmem:[#allocation5 + $0x1240] sm:$0xff]
    %v707 = vld [vmem:[#allocation5 + $0x1248] sm:$0xff]
    %v708 = vld [vmem:[#allocation5 + $0x1250] sm:$0xff]
    %v709 = vld [vmem:[#allocation5 + $0x1258] sm:$0xff]
    %v710 = vld [vmem:[#allocation5 + $0x1260] sm:$0xff]
    %v711 = vld [vmem:[#allocation5 + $0x1268] sm:$0xff]
    %v712 = vld [vmem:[#allocation5 + $0x1270] sm:$0xff]
    %v713 = vld [vmem:[#allocation5 + $0x1278] sm:$0xff]
    %v714 = vld [vmem:[#allocation5 + $0x1280] sm:$0xff]
    %v715 = vld [vmem:[#allocation5 + $0x1288] sm:$0xff]
    %v716 = vld [vmem:[#allocation5 + $0x1290] sm:$0xff]
    %v717 = vld [vmem:[#allocation5 + $0x1298] sm:$0xff]
    %v718 = vld [vmem:[#allocation5 + $0x12a0] sm:$0xff]
    %v719 = vld [vmem:[#allocation5 + $0x12a8] sm:$0xff]
    %v720 = vld [vmem:[#allocation5 + $0x12b0] sm:$0xff]
    %v721 = vld [vmem:[#allocation5 + $0x12b8] sm:$0xff]
    %v722 = vld [vmem:[#allocation5 + $0x12c0] sm:$0xff]
    %v723 = vld [vmem:[#allocation5 + $0x12c8] sm:$0xff]
    %v724 = vld [vmem:[#allocation5 + $0x12d0] sm:$0xff]
    %v725 = vld [vmem:[#allocation5 + $0x12d8] sm:$0xff]
    %v726 = vld [vmem:[#allocation5 + $0x12e0] sm:$0xff]
    %v727 = vld [vmem:[#allocation5 + $0x12e8] sm:$0xff]
    %v728 = vld [vmem:[#allocation5 + $0x12f0] sm:$0xff]
    %v729 = vld [vmem:[#allocation5 + $0x12f8] sm:$0xff]
    %v730 = vld [vmem:[#allocation5 + $0x1300] sm:$0xff]
    %v731 = vld [vmem:[#allocation5 + $0x1308] sm:$0xff]
    %v732 = vld [vmem:[#allocation5 + $0x1310] sm:$0xff]
    %v733 = vld [vmem:[#allocation5 + $0x1318] sm:$0xff]
    %v734 = vld [vmem:[#allocation5 + $0x1320] sm:$0xff]
    %v735 = vld [vmem:[#allocation5 + $0x1328] sm:$0xff]
    %v736 = vld [vmem:[#allocation5 + $0x1330] sm:$0xff]
    %v737 = vld [vmem:[#allocation5 + $0x1338] sm:$0xff]
    %v738 = vld [vmem:[#allocation5 + $0x1340] sm:$0xff]
    %v739 = vld [vmem:[#allocation5 + $0x1348] sm:$0xff]
    %v740 = vld [vmem:[#allocation5 + $0x1350] sm:$0xff]
    %v741 = vld [vmem:[#allocation5 + $0x1358] sm:$0xff]
    %v742 = vld [vmem:[#allocation5 + $0x1360] sm:$0xff]
    %v743 = vld [vmem:[#allocation5 + $0x1368] sm:$0xff]
    %v744 = vld [vmem:[#allocation5 + $0x1370] sm:$0xff]
    %v745 = vld [vmem:[#allocation5 + $0x1378] sm:$0xff]
    %v746 = vld [vmem:[#allocation5 + $0x1380] sm:$0xff]
    %v747 = vld [vmem:[#allocation5 + $0x1388] sm:$0xff]
    %v748 = vld [vmem:[#allocation5 + $0x1390] sm:$0xff]
    %v749 = vld [vmem:[#allocation5 + $0x1398] sm:$0xff]
    %v750 = vld [vmem:[#allocation5 + $0x13a0] sm:$0xff]
    %v751 = vld [vmem:[#allocation5 + $0x13a8] sm:$0xff]
    %v752 = vld [vmem:[#allocation5 + $0x13b0] sm:$0xff]
    %v753 = vld [vmem:[#allocation5 + $0x13b8] sm:$0xff]
    %v754 = vld [vmem:[#allocation5 + $0x13c0] sm:$0xff]
    %v755 = vld [vmem:[#allocation5 + $0x13c8] sm:$0xff]
    %v756 = vld [vmem:[#allocation5 + $0x13d0] sm:$0xff]
    %v757 = vld [vmem:[#allocation5 + $0x13d8] sm:$0xff]
    %v758 = vld [vmem:[#allocation5 + $0x13e0] sm:$0xff]
    %v759 = vld [vmem:[#allocation5 + $0x13e8] sm:$0xff]
    %v760 = vld [vmem:[#allocation5 + $0x13f0] sm:$0xff]
    %v761 = vld [vmem:[#allocation5 + $0x13f8] sm:$0xff]
    %v762 = vld [vmem:[#allocation5 + $0x1400] sm:$0xff]
    %v763 = vld [vmem:[#allocation5 + $0x1408] sm:$0xff]
    %v764 = vld [vmem:[#allocation5 + $0x1410] sm:$0xff]
    %v765 = vld [vmem:[#allocation5 + $0x1418] sm:$0xff]
    %v766 = vld [vmem:[#allocation5 + $0x1420] sm:$0xff]
    %v767 = vld [vmem:[#allocation5 + $0x1428] sm:$0xff]
    %v768 = vld [vmem:[#allocation5 + $0x1430] sm:$0xff]
    %v769 = vld [vmem:[#allocation5 + $0x1438] sm:$0xff]
    %v770 = vld [vmem:[#allocation5 + $0x1440] sm:$0xff]
    %v771 = vld [vmem:[#allocation5 + $0x1448] sm:$0xff]
    %v772 = vld [vmem:[#allocation5 + $0x1450] sm:$0xff]
    %v773 = vld [vmem:[#allocation5 + $0x1458] sm:$0xff]
    %v774 = vld [vmem:[#allocation5 + $0x1460] sm:$0xff]
    %v775 = vld [vmem:[#allocation5 + $0x1468] sm:$0xff]
    %v776 = vld [vmem:[#allocation5 + $0x1470] sm:$0xff]
    %v777 = vld [vmem:[#allocation5 + $0x1478] sm:$0xff]
    %v778 = vld [vmem:[#allocation5 + $0x1480] sm:$0xff]
    %v779 = vld [vmem:[#allocation5 + $0x1488] sm:$0xff]
    %v780 = vld [vmem:[#allocation5 + $0x1490] sm:$0xff]
    %v781 = vld [vmem:[#allocation5 + $0x1498] sm:$0xff]
    %v782 = vld [vmem:[#allocation5 + $0x14a0] sm:$0xff]
    %v783 = vld [vmem:[#allocation5 + $0x14a8] sm:$0xff]
    %v784 = vld [vmem:[#allocation5 + $0x14b0] sm:$0xff]
    %v785 = vld [vmem:[#allocation5 + $0x14b8] sm:$0xff]
    %v786 = vld [vmem:[#allocation5 + $0x14c0] sm:$0xff]
    %v787 = vld [vmem:[#allocation5 + $0x14c8] sm:$0xff]
    %v788 = vld [vmem:[#allocation5 + $0x14d0] sm:$0xff]
    %v789 = vld [vmem:[#allocation5 + $0x14d8] sm:$0xff]
    %v790 = vld [vmem:[#allocation5 + $0x14e0] sm:$0xff]
    %v791 = vld [vmem:[#allocation5 + $0x14e8] sm:$0xff]
    %v792 = vld [vmem:[#allocation5 + $0x14f0] sm:$0xff]
    %v793 = vld [vmem:[#allocation5 + $0x14f8] sm:$0xff]
    %v794 = vld [vmem:[#allocation5 + $0x1500] sm:$0xff]
    %v795 = vld [vmem:[#allocation5 + $0x1508] sm:$0xff]
    %v796 = vld [vmem:[#allocation5 + $0x1510] sm:$0xff]
    %v797 = vld [vmem:[#allocation5 + $0x1518] sm:$0xff]
    %v798 = vld [vmem:[#allocation5 + $0x1520] sm:$0xff]
    %v799 = vld [vmem:[#allocation5 + $0x1528] sm:$0xff]
    %v800 = vld [vmem:[#allocation5 + $0x1530] sm:$0xff]
    %v801 = vld [vmem:[#allocation5 + $0x1538] sm:$0xff]
    %v802 = vld [vmem:[#allocation5 + $0x1540] sm:$0xff]
    %v803 = vld [vmem:[#allocation5 + $0x1548] sm:$0xff]
    %v804 = vld [vmem:[#allocation5 + $0x1550] sm:$0xff]
    %v805 = vld [vmem:[#allocation5 + $0x1558] sm:$0xff]
    %v806 = vld [vmem:[#allocation5 + $0x1560] sm:$0xff]
    %v807 = vld [vmem:[#allocation5 + $0x1568] sm:$0xff]
    %v808 = vld [vmem:[#allocation5 + $0x1570] sm:$0xff]
    %v809 = vld [vmem:[#allocation5 + $0x1578] sm:$0xff]
    %v810 = vld [vmem:[#allocation5 + $0x1580] sm:$0xff]
    %v811 = vld [vmem:[#allocation5 + $0x1588] sm:$0xff]
    %v812 = vld [vmem:[#allocation5 + $0x1590] sm:$0xff]
    %v813 = vld [vmem:[#allocation5 + $0x1598] sm:$0xff]
    %v814 = vld [vmem:[#allocation5 + $0x15a0] sm:$0xff]
    %v815 = vld [vmem:[#allocation5 + $0x15a8] sm:$0xff]
    %v816 = vld [vmem:[#allocation5 + $0x15b0] sm:$0xff]
    %v817 = vld [vmem:[#allocation5 + $0x15b8] sm:$0xff]
    %v818 = vld [vmem:[#allocation5 + $0x15c0] sm:$0xff]
    %v819 = vld [vmem:[#allocation5 + $0x15c8] sm:$0xff]
    %v820 = vld [vmem:[#allocation5 + $0x15d0] sm:$0xff]
    %v821 = vld [vmem:[#allocation5 + $0x15d8] sm:$0xff]
    %v822 = vld [vmem:[#allocation5 + $0x15e0] sm:$0xff]
    %v823 = vld [vmem:[#allocation5 + $0x15e8] sm:$0xff]
    %v824 = vld [vmem:[#allocation5 + $0x15f0] sm:$0xff]
    %v825 = vld [vmem:[#allocation5 + $0x15f8] sm:$0xff]
    %v826 = vld [vmem:[#allocation5 + $0x1600] sm:$0xff]
    %v827 = vld [vmem:[#allocation5 + $0x1608] sm:$0xff]
    %v828 = vld [vmem:[#allocation5 + $0x1610] sm:$0xff]
    %v829 = vld [vmem:[#allocation5 + $0x1618] sm:$0xff]
    %v830 = vld [vmem:[#allocation5 + $0x1620] sm:$0xff]
    %v831 = vld [vmem:[#allocation5 + $0x1628] sm:$0xff]
    %v832 = vld [vmem:[#allocation5 + $0x1630] sm:$0xff]
    %v833 = vld [vmem:[#allocation5 + $0x1638] sm:$0xff]
    %v834 = vld [vmem:[#allocation5 + $0x1640] sm:$0xff]
    %v835 = vld [vmem:[#allocation5 + $0x1648] sm:$0xff]
    %v836 = vld [vmem:[#allocation5 + $0x1650] sm:$0xff]
    %v837 = vld [vmem:[#allocation5 + $0x1658] sm:$0xff]
    %v838 = vld [vmem:[#allocation5 + $0x1660] sm:$0xff]
    %v839 = vld [vmem:[#allocation5 + $0x1668] sm:$0xff]
    %v840 = vld [vmem:[#allocation5 + $0x1670] sm:$0xff]
    %v841 = vld [vmem:[#allocation5 + $0x1678] sm:$0xff]
    %v842 = vld [vmem:[#allocation5 + $0x1680] sm:$0xff]
    %v843 = vld [vmem:[#allocation5 + $0x1688] sm:$0xff]
    %v844 = vld [vmem:[#allocation5 + $0x1690] sm:$0xff]
    %v845 = vld [vmem:[#allocation5 + $0x1698] sm:$0xff]
    %v846 = vld [vmem:[#allocation5 + $0x16a0] sm:$0xff]
    %v847 = vld [vmem:[#allocation5 + $0x16a8] sm:$0xff]
    %v848 = vld [vmem:[#allocation5 + $0x16b0] sm:$0xff]
    %v849 = vld [vmem:[#allocation5 + $0x16b8] sm:$0xff]
    %v850 = vld [vmem:[#allocation5 + $0x16c0] sm:$0xff]
    %v851 = vld [vmem:[#allocation5 + $0x16c8] sm:$0xff]
    %v852 = vld [vmem:[#allocation5 + $0x16d0] sm:$0xff]
    %v853 = vld [vmem:[#allocation5 + $0x16d8] sm:$0xff]
    %v854 = vld [vmem:[#allocation5 + $0x16e0] sm:$0xff]
    %v855 = vld [vmem:[#allocation5 + $0x16e8] sm:$0xff]
    %v856 = vld [vmem:[#allocation5 + $0x16f0] sm:$0xff]
    %v857 = vld [vmem:[#allocation5 + $0x16f8] sm:$0xff]
    %v858 = vld [vmem:[#allocation5 + $0x1700] sm:$0xff]
    %v859 = vld [vmem:[#allocation5 + $0x1708] sm:$0xff]
    %v860 = vld [vmem:[#allocation5 + $0x1710] sm:$0xff]
    %v861 = vld [vmem:[#allocation5 + $0x1718] sm:$0xff]
    %v862 = vld [vmem:[#allocation5 + $0x1720] sm:$0xff]
    %v863 = vld [vmem:[#allocation5 + $0x1728] sm:$0xff]
    %v864 = vld [vmem:[#allocation5 + $0x1730] sm:$0xff]
    %v865 = vld [vmem:[#allocation5 + $0x1738] sm:$0xff]
    %v866 = vld [vmem:[#allocation5 + $0x1740] sm:$0xff]
    %v867 = vld [vmem:[#allocation5 + $0x1748] sm:$0xff]
    %v868 = vld [vmem:[#allocation5 + $0x1750] sm:$0xff]
    %v869 = vld [vmem:[#allocation5 + $0x1758] sm:$0xff]
    %v870 = vld [vmem:[#allocation5 + $0x1760] sm:$0xff]
    %v871 = vld [vmem:[#allocation5 + $0x1768] sm:$0xff]
    %v872 = vld [vmem:[#allocation5 + $0x1770] sm:$0xff]
    %v873 = vld [vmem:[#allocation5 + $0x1778] sm:$0xff]
    %v874 = vld [vmem:[#allocation5 + $0x1780] sm:$0xff]
    %v875 = vld [vmem:[#allocation5 + $0x1788] sm:$0xff]
    %v876 = vld [vmem:[#allocation5 + $0x1790] sm:$0xff]
    %v877 = vld [vmem:[#allocation5 + $0x1798] sm:$0xff]
    %v878 = vld [vmem:[#allocation5 + $0x17a0] sm:$0xff]
    %v879 = vld [vmem:[#allocation5 + $0x17a8] sm:$0xff]
    %v880 = vld [vmem:[#allocation5 + $0x17b0] sm:$0xff]
    %v881 = vld [vmem:[#allocation5 + $0x17b8] sm:$0xff]
    %v882 = vld [vmem:[#allocation5 + $0x17c0] sm:$0xff]
    %v883 = vld [vmem:[#allocation5 + $0x17c8] sm:$0xff]
    %v884 = vld [vmem:[#allocation5 + $0x17d0] sm:$0xff]
    %v885 = vld [vmem:[#allocation5 + $0x17d8] sm:$0xff]
    %v886 = vld [vmem:[#allocation5 + $0x17e0] sm:$0xff]
    %v887 = vld [vmem:[#allocation5 + $0x17e8] sm:$0xff]
    %v888 = vld [vmem:[#allocation5 + $0x17f0] sm:$0xff]
    %v889 = vld [vmem:[#allocation5 + $0x17f8] sm:$0xff]
    %v890 = vld [vmem:[#allocation5 + $0x1800] sm:$0xff]
    %v891 = vld [vmem:[#allocation5 + $0x1808] sm:$0xff]
    %v892 = vld [vmem:[#allocation5 + $0x1810] sm:$0xff]
    %v893 = vld [vmem:[#allocation5 + $0x1818] sm:$0xff]
    %v894 = vld [vmem:[#allocation5 + $0x1820] sm:$0xff]
    %v895 = vld [vmem:[#allocation5 + $0x1828] sm:$0xff]
    %v896 = vld [vmem:[#allocation5 + $0x1830] sm:$0xff]
    %v897 = vld [vmem:[#allocation5 + $0x1838] sm:$0xff]
    %v898 = vld [vmem:[#allocation5 + $0x1840] sm:$0xff]
    %v899 = vld [vmem:[#allocation5 + $0x1848] sm:$0xff]
    %v900 = vld [vmem:[#allocation5 + $0x1850] sm:$0xff]
    %v901 = vld [vmem:[#allocation5 + $0x1858] sm:$0xff]
    %v902 = vld [vmem:[#allocation5 + $0x1860] sm:$0xff]
    %v903 = vld [vmem:[#allocation5 + $0x1868] sm:$0xff]
    %v904 = vld [vmem:[#allocation5 + $0x1870] sm:$0xff]
    %v905 = vld [vmem:[#allocation5 + $0x1878] sm:$0xff]
    %v906 = vld [vmem:[#allocation5 + $0x1880] sm:$0xff]
    %v907 = vld [vmem:[#allocation5 + $0x1888] sm:$0xff]
    %v908 = vld [vmem:[#allocation5 + $0x1890] sm:$0xff]
    %v909 = vld [vmem:[#allocation5 + $0x1898] sm:$0xff]
    %v910 = vld [vmem:[#allocation5 + $0x18a0] sm:$0xff]
    %v911 = vld [vmem:[#allocation5 + $0x18a8] sm:$0xff]
    %v912 = vld [vmem:[#allocation5 + $0x18b0] sm:$0xff]
    %v913 = vld [vmem:[#allocation5 + $0x18b8] sm:$0xff]
    %v914 = vld [vmem:[#allocation5 + $0x18c0] sm:$0xff]
    %v915 = vld [vmem:[#allocation5 + $0x18c8] sm:$0xff]
    %v916 = vld [vmem:[#allocation5 + $0x18d0] sm:$0xff]
    %v917 = vld [vmem:[#allocation5 + $0x18d8] sm:$0xff]
    %v918 = vld [vmem:[#allocation5 + $0x18e0] sm:$0xff]
    %v919 = vld [vmem:[#allocation5 + $0x18e8] sm:$0xff]
    %v920 = vld [vmem:[#allocation5 + $0x18f0] sm:$0xff]
    %v921 = vld [vmem:[#allocation5 + $0x18f8] sm:$0xff]
    %v922 = vld [vmem:[#allocation5 + $0x1900] sm:$0xff]
    %v923 = vld [vmem:[#allocation5 + $0x1908] sm:$0xff]
    %v924 = vld [vmem:[#allocation5 + $0x1910] sm:$0xff]
    %v925 = vld [vmem:[#allocation5 + $0x1918] sm:$0xff]
    %v926 = vld [vmem:[#allocation5 + $0x1920] sm:$0xff]
    %v927 = vld [vmem:[#allocation5 + $0x1928] sm:$0xff]
    %v928 = vld [vmem:[#allocation5 + $0x1930] sm:$0xff]
    %v929 = vld [vmem:[#allocation5 + $0x1938] sm:$0xff]
    %v930 = vld [vmem:[#allocation5 + $0x1940] sm:$0xff]
    %v931 = vld [vmem:[#allocation5 + $0x1948] sm:$0xff]
    %v932 = vld [vmem:[#allocation5 + $0x1950] sm:$0xff]
    %v933 = vld [vmem:[#allocation5 + $0x1958] sm:$0xff]
    %v934 = vld [vmem:[#allocation5 + $0x1960] sm:$0xff]
    %v935 = vld [vmem:[#allocation5 + $0x1968] sm:$0xff]
    %v936 = vld [vmem:[#allocation5 + $0x1970] sm:$0xff]
    %v937 = vld [vmem:[#allocation5 + $0x1978] sm:$0xff]
    %v938 = vld [vmem:[#allocation5 + $0x1980] sm:$0xff]
    %v939 = vld [vmem:[#allocation5 + $0x1988] sm:$0xff]
    %v940 = vld [vmem:[#allocation5 + $0x1990] sm:$0xff]
    %v941 = vld [vmem:[#allocation5 + $0x1998] sm:$0xff]
    %v942 = vld [vmem:[#allocation5 + $0x19a0] sm:$0xff]
    %v943 = vld [vmem:[#allocation5 + $0x19a8] sm:$0xff]
    %v944 = vld [vmem:[#allocation5 + $0x19b0] sm:$0xff]
    %v945 = vld [vmem:[#allocation5 + $0x19b8] sm:$0xff]
    %v946 = vld [vmem:[#allocation5 + $0x19c0] sm:$0xff]
    %v947 = vld [vmem:[#allocation5 + $0x19c8] sm:$0xff]
    %v948 = vld [vmem:[#allocation5 + $0x19d0] sm:$0xff]
    %v949 = vld [vmem:[#allocation5 + $0x19d8] sm:$0xff]
    %v950 = vld [vmem:[#allocation5 + $0x19e0] sm:$0xff]
    %v951 = vld [vmem:[#allocation5 + $0x19e8] sm:$0xff]
    %v952 = vld [vmem:[#allocation5 + $0x19f0] sm:$0xff]
    %v953 = vld [vmem:[#allocation5 + $0x19f8] sm:$0xff]
    %v954 = vld [vmem:[#allocation5 + $0x1a00] sm:$0xff]
    %v955 = vld [vmem:[#allocation5 + $0x1a08] sm:$0xff]
    %v956 = vld [vmem:[#allocation5 + $0x1a10] sm:$0xff]
    %v957 = vld [vmem:[#allocation5 + $0x1a18] sm:$0xff]
    %v958 = vld [vmem:[#allocation5 + $0x1a20] sm:$0xff]
    %v959 = vld [vmem:[#allocation5 + $0x1a28] sm:$0xff]
    %v960 = vld [vmem:[#allocation5 + $0x1a30] sm:$0xff]
    %v961 = vld [vmem:[#allocation5 + $0x1a38] sm:$0xff]
    %v962 = vld [vmem:[#allocation5 + $0x1a40] sm:$0xff]
    %v963 = vld [vmem:[#allocation5 + $0x1a48] sm:$0xff]
    %v964 = vld [vmem:[#allocation5 + $0x1a50] sm:$0xff]
    %v965 = vld [vmem:[#allocation5 + $0x1a58] sm:$0xff]
    %v966 = vld [vmem:[#allocation5 + $0x1a60] sm:$0xff]
    %v967 = vld [vmem:[#allocation5 + $0x1a68] sm:$0xff]
    %v968 = vld [vmem:[#allocation5 + $0x1a70] sm:$0xff]
    %v969 = vld [vmem:[#allocation5 + $0x1a78] sm:$0xff]
    %v970 = vld [vmem:[#allocation5 + $0x1a80] sm:$0xff]
    %v971 = vld [vmem:[#allocation5 + $0x1a88] sm:$0xff]
    %v972 = vld [vmem:[#allocation5 + $0x1a90] sm:$0xff]
    %v973 = vld [vmem:[#allocation5 + $0x1a98] sm:$0xff]
    %v974 = vld [vmem:[#allocation5 + $0x1aa0] sm:$0xff]
    %v975 = vld [vmem:[#allocation5 + $0x1aa8] sm:$0xff]
    %v976 = vld [vmem:[#allocation5 + $0x1ab0] sm:$0xff]
    %v977 = vld [vmem:[#allocation5 + $0x1ab8] sm:$0xff]
    %v978 = vld [vmem:[#allocation5 + $0x1ac0] sm:$0xff]
    %v979 = vld [vmem:[#allocation5 + $0x1ac8] sm:$0xff]
    %v980 = vld [vmem:[#allocation5 + $0x1ad0] sm:$0xff]
    %v981 = vld [vmem:[#allocation5 + $0x1ad8] sm:$0xff]
    %v982 = vld [vmem:[#allocation5 + $0x1ae0] sm:$0xff]
    %v983 = vld [vmem:[#allocation5 + $0x1ae8] sm:$0xff]
    %v984 = vld [vmem:[#allocation5 + $0x1af0] sm:$0xff]
    %v985 = vld [vmem:[#allocation5 + $0x1af8] sm:$0xff]
    %v986 = vld [vmem:[#allocation5 + $0x1b00] sm:$0xff]
    %v987 = vld [vmem:[#allocation5 + $0x1b08] sm:$0xff]
    %v988 = vld [vmem:[#allocation5 + $0x1b10] sm:$0xff]
    %v989 = vld [vmem:[#allocation5 + $0x1b18] sm:$0xff]
    %v990 = vld [vmem:[#allocation5 + $0x1b20] sm:$0xff]
    %v991 = vld [vmem:[#allocation5 + $0x1b28] sm:$0xff]
    %v992 = vld [vmem:[#allocation5 + $0x1b30] sm:$0xff]
    %v993 = vld [vmem:[#allocation5 + $0x1b38] sm:$0xff]
    %v994 = vld [vmem:[#allocation5 + $0x1b40] sm:$0xff]
    %v995 = vld [vmem:[#allocation5 + $0x1b48] sm:$0xff]
    %v996 = vld [vmem:[#allocation5 + $0x1b50] sm:$0xff]
    %v997 = vld [vmem:[#allocation5 + $0x1b58] sm:$0xff]
    %v998 = vld [vmem:[#allocation5 + $0x1b60] sm:$0xff]
    %v999 = vld [vmem:[#allocation5 + $0x1b68] sm:$0xff]
    %v1000 = vld [vmem:[#allocation5 + $0x1b70] sm:$0xff]
    %v1001 = vld [vmem:[#allocation5 + $0x1b78] sm:$0xff]
    %v1002 = vld [vmem:[#allocation5 + $0x1b80] sm:$0xff]
    %v1003 = vld [vmem:[#allocation5 + $0x1b88] sm:$0xff]
    %v1004 = vld [vmem:[#allocation5 + $0x1b90] sm:$0xff]
    %v1005 = vld [vmem:[#allocation5 + $0x1b98] sm:$0xff]
    %v1006 = vld [vmem:[#allocation5 + $0x1ba0] sm:$0xff]
    %v1007 = vld [vmem:[#allocation5 + $0x1ba8] sm:$0xff]
    %v1008 = vld [vmem:[#allocation5 + $0x1bb0] sm:$0xff]
    %v1009 = vld [vmem:[#allocation5 + $0x1bb8] sm:$0xff]
    %v1010 = vld [vmem:[#allocation5 + $0x1bc0] sm:$0xff]
    %v1011 = vld [vmem:[#allocation5 + $0x1bc8] sm:$0xff]
    %v1012 = vld [vmem:[#allocation5 + $0x1bd0] sm:$0xff]
    %v1013 = vld [vmem:[#allocation5 + $0x1bd8] sm:$0xff]
    %v1014 = vld [vmem:[#allocation5 + $0x1be0] sm:$0xff]
    %v1015 = vld [vmem:[#allocation5 + $0x1be8] sm:$0xff]
    %v1016 = vld [vmem:[#allocation5 + $0x1bf0] sm:$0xff]
    %v1017 = vld [vmem:[#allocation5 + $0x1bf8] sm:$0xff]
    %v1018 = vld [vmem:[#allocation5 + $0x1c00] sm:$0xff]
    %v1019 = vld [vmem:[#allocation5 + $0x1c08] sm:$0xff]
    %v1020 = vld [vmem:[#allocation5 + $0x1c10] sm:$0xff]
    %v1021 = vld [vmem:[#allocation5 + $0x1c18] sm:$0xff]
    %v1022 = vld [vmem:[#allocation5 + $0x1c20] sm:$0xff]
    %v1023 = vld [vmem:[#allocation5 + $0x1c28] sm:$0xff]
    %v1024 = vld [vmem:[#allocation5 + $0x1c30] sm:$0xff]
    %v1025 = vld [vmem:[#allocation5 + $0x1c38] sm:$0xff]
    %v1026 = vld [vmem:[#allocation5 + $0x1c40] sm:$0xff]
    %v1027 = vld [vmem:[#allocation5 + $0x1c48] sm:$0xff]
    %v1028 = vld [vmem:[#allocation5 + $0x1c50] sm:$0xff]
    %v1029 = vld [vmem:[#allocation5 + $0x1c58] sm:$0xff]
    %v1030 = vld [vmem:[#allocation5 + $0x1c60] sm:$0xff]
    %v1031 = vld [vmem:[#allocation5 + $0x1c68] sm:$0xff]
    %v1032 = vld [vmem:[#allocation5 + $0x1c70] sm:$0xff]
    %v1033 = vld [vmem:[#allocation5 + $0x1c78] sm:$0xff]
    %v1034 = vld [vmem:[#allocation5 + $0x1c80] sm:$0xff]
    %v1035 = vld [vmem:[#allocation5 + $0x1c88] sm:$0xff]
    %v1036 = vld [vmem:[#allocation5 + $0x1c90] sm:$0xff]
    %v1037 = vld [vmem:[#allocation5 + $0x1c98] sm:$0xff]
    %v1038 = vld [vmem:[#allocation5 + $0x1ca0] sm:$0xff]
    %v1039 = vld [vmem:[#allocation5 + $0x1ca8] sm:$0xff]
    %v1040 = vld [vmem:[#allocation5 + $0x1cb0] sm:$0xff]
    %v1041 = vld [vmem:[#allocation5 + $0x1cb8] sm:$0xff]
    %v1042 = vld [vmem:[#allocation5 + $0x1cc0] sm:$0xff]
    %v1043 = vld [vmem:[#allocation5 + $0x1cc8] sm:$0xff]
    %v1044 = vld [vmem:[#allocation5 + $0x1cd0] sm:$0xff]
    %v1045 = vld [vmem:[#allocation5 + $0x1cd8] sm:$0xff]
    %v1046 = vld [vmem:[#allocation5 + $0x1ce0] sm:$0xff]
    %v1047 = vld [vmem:[#allocation5 + $0x1ce8] sm:$0xff]
    %v1048 = vld [vmem:[#allocation5 + $0x1cf0] sm:$0xff]
    %v1049 = vld [vmem:[#allocation5 + $0x1cf8] sm:$0xff]
    %v1050 = vld [vmem:[#allocation5 + $0x1d00] sm:$0xff]
    %v1051 = vld [vmem:[#allocation5 + $0x1d08] sm:$0xff]
    %v1052 = vld [vmem:[#allocation5 + $0x1d10] sm:$0xff]
    %v1053 = vld [vmem:[#allocation5 + $0x1d18] sm:$0xff]
    %v1054 = vld [vmem:[#allocation5 + $0x1d20] sm:$0xff]
    %v1055 = vld [vmem:[#allocation5 + $0x1d28] sm:$0xff]
    %v1056 = vld [vmem:[#allocation5 + $0x1d30] sm:$0xff]
    %v1057 = vld [vmem:[#allocation5 + $0x1d38] sm:$0xff]
    %v1058 = vld [vmem:[#allocation5 + $0x1d40] sm:$0xff]
    %v1059 = vld [vmem:[#allocation5 + $0x1d48] sm:$0xff]
    %v1060 = vld [vmem:[#allocation5 + $0x1d50] sm:$0xff]
    %v1061 = vld [vmem:[#allocation5 + $0x1d58] sm:$0xff]
    %v1062 = vld [vmem:[#allocation5 + $0x1d60] sm:$0xff]
    %v1063 = vld [vmem:[#allocation5 + $0x1d68] sm:$0xff]
    %v1064 = vld [vmem:[#allocation5 + $0x1d70] sm:$0xff]
    %v1065 = vld [vmem:[#allocation5 + $0x1d78] sm:$0xff]
    %v1066 = vld [vmem:[#allocation5 + $0x1d80] sm:$0xff]
    %v1067 = vld [vmem:[#allocation5 + $0x1d88] sm:$0xff]
    %v1068 = vld [vmem:[#allocation5 + $0x1d90] sm:$0xff]
    %v1069 = vld [vmem:[#allocation5 + $0x1d98] sm:$0xff]
    %v1070 = vld [vmem:[#allocation5 + $0x1da0] sm:$0xff]
    %v1071 = vld [vmem:[#allocation5 + $0x1da8] sm:$0xff]
    %v1072 = vld [vmem:[#allocation5 + $0x1db0] sm:$0xff]
    %v1073 = vld [vmem:[#allocation5 + $0x1db8] sm:$0xff]
    %v1074 = vld [vmem:[#allocation5 + $0x1dc0] sm:$0xff]
    %v1075 = vld [vmem:[#allocation5 + $0x1dc8] sm:$0xff]
    %v1076 = vld [vmem:[#allocation5 + $0x1dd0] sm:$0xff]
    %v1077 = vld [vmem:[#allocation5 + $0x1dd8] sm:$0xff]
    %v1078 = vld [vmem:[#allocation5 + $0x1de0] sm:$0xff]
    %v1079 = vld [vmem:[#allocation5 + $0x1de8] sm:$0xff]
    %v1080 = vld [vmem:[#allocation5 + $0x1df0] sm:$0xff]
    %v1081 = vld [vmem:[#allocation5 + $0x1df8] sm:$0xff]
    %v1082 = vld [vmem:[#allocation5 + $0x1e00] sm:$0xff]
    %v1083 = vld [vmem:[#allocation5 + $0x1e08] sm:$0xff]
    %v1084 = vld [vmem:[#allocation5 + $0x1e10] sm:$0xff]
    %v1085 = vld [vmem:[#allocation5 + $0x1e18] sm:$0xff]
    %v1086 = vld [vmem:[#allocation5 + $0x1e20] sm:$0xff]
    %v1087 = vld [vmem:[#allocation5 + $0x1e28] sm:$0xff]
    %v1088 = vld [vmem:[#allocation5 + $0x1e30] sm:$0xff]
    %v1089 = vld [vmem:[#allocation5 + $0x1e38] sm:$0xff]
    %v1090 = vld [vmem:[#allocation5 + $0x1e40] sm:$0xff]
    %v1091 = vld [vmem:[#allocation5 + $0x1e48] sm:$0xff]
    %v1092 = vld [vmem:[#allocation5 + $0x1e50] sm:$0xff]
    %v1093 = vld [vmem:[#allocation5 + $0x1e58] sm:$0xff]
    %v1094 = vld [vmem:[#allocation5 + $0x1e60] sm:$0xff]
    %v1095 = vld [vmem:[#allocation5 + $0x1e68] sm:$0xff]
    %v1096 = vld [vmem:[#allocation5 + $0x1e70] sm:$0xff]
    %v1097 = vld [vmem:[#allocation5 + $0x1e78] sm:$0xff]
    %v1098 = vld [vmem:[#allocation5 + $0x1e80] sm:$0xff]
    %v1099 = vld [vmem:[#allocation5 + $0x1e88] sm:$0xff]
    %v1100 = vld [vmem:[#allocation5 + $0x1e90] sm:$0xff]
    %v1101 = vld [vmem:[#allocation5 + $0x1e98] sm:$0xff]
    %v1102 = vld [vmem:[#allocation5 + $0x1ea0] sm:$0xff]
    %v1103 = vld [vmem:[#allocation5 + $0x1ea8] sm:$0xff]
    %v1104 = vld [vmem:[#allocation5 + $0x1eb0] sm:$0xff]
    %v1105 = vld [vmem:[#allocation5 + $0x1eb8] sm:$0xff]
    %v1106 = vld [vmem:[#allocation5 + $0x1ec0] sm:$0xff]
    %v1107 = vld [vmem:[#allocation5 + $0x1ec8] sm:$0xff]
    %v1108 = vld [vmem:[#allocation5 + $0x1ed0] sm:$0xff]
    %v1109 = vld [vmem:[#allocation5 + $0x1ed8] sm:$0xff]
    %v1110 = vld [vmem:[#allocation5 + $0x1ee0] sm:$0xff]
    %v1111 = vld [vmem:[#allocation5 + $0x1ee8] sm:$0xff]
    %v1112 = vld [vmem:[#allocation5 + $0x1ef0] sm:$0xff]
    %v1113 = vld [vmem:[#allocation5 + $0x1ef8] sm:$0xff]
    %v1114 = vld [vmem:[#allocation5 + $0x1f00] sm:$0xff]
    %v1115 = vld [vmem:[#allocation5 + $0x1f08] sm:$0xff]
    %v1116 = vld [vmem:[#allocation5 + $0x1f10] sm:$0xff]
    %v1117 = vld [vmem:[#allocation5 + $0x1f18] sm:$0xff]
    %v1118 = vld [vmem:[#allocation5 + $0x1f20] sm:$0xff]
    %v1119 = vld [vmem:[#allocation5 + $0x1f28] sm:$0xff]
    %v1120 = vld [vmem:[#allocation5 + $0x1f30] sm:$0xff]
    %v1121 = vld [vmem:[#allocation5 + $0x1f38] sm:$0xff]
    %v1122 = vld [vmem:[#allocation5 + $0x1f40] sm:$0xff]
    %v1123 = vld [vmem:[#allocation5 + $0x1f48] sm:$0xff]
    %v1124 = vld [vmem:[#allocation5 + $0x1f50] sm:$0xff]
    %v1125 = vld [vmem:[#allocation5 + $0x1f58] sm:$0xff]
    %v1126 = vld [vmem:[#allocation5 + $0x1f60] sm:$0xff]
    %v1127 = vld [vmem:[#allocation5 + $0x1f68] sm:$0xff]
    %v1128 = vld [vmem:[#allocation5 + $0x1f70] sm:$0xff]
    %v1129 = vld [vmem:[#allocation5 + $0x1f78] sm:$0xff]
    %v1130 = vld [vmem:[#allocation5 + $0x1f80] sm:$0xff]
    %v1131 = vld [vmem:[#allocation5 + $0x1f88] sm:$0xff]
    %v1132 = vld [vmem:[#allocation5 + $0x1f90] sm:$0xff]
    %v1133 = vld [vmem:[#allocation5 + $0x1f98] sm:$0xff]
    %v1134 = vld [vmem:[#allocation5 + $0x1fa0] sm:$0xff]
    %v1135 = vld [vmem:[#allocation5 + $0x1fa8] sm:$0xff]
    %v1136 = vld [vmem:[#allocation5 + $0x1fb0] sm:$0xff]
    %v1137 = vld [vmem:[#allocation5 + $0x1fb8] sm:$0xff]
    %v1138 = vld [vmem:[#allocation5 + $0x1fc0] sm:$0xff]
    %v1139 = vld [vmem:[#allocation5 + $0x1fc8] sm:$0xff]
    %v1140 = vld [vmem:[#allocation5 + $0x1fd0] sm:$0xff]
    %v1141 = vld [vmem:[#allocation5 + $0x1fd8] sm:$0xff]
    %v1142 = vld [vmem:[#allocation5 + $0x1fe0] sm:$0xff]
    %v1143 = vld [vmem:[#allocation5 + $0x1fe8] sm:$0xff]
    %v1144 = vld [vmem:[#allocation5 + $0x1ff0] sm:$0xff]
    %v1145 = vld [vmem:[#allocation5 + $0x1ff8] sm:$0xff]
    %v1146 = vld [vmem:[#allocation7] sm:$0x3]
    %v1148 = vlaneseq
    %v1149 = vshrl.u32 %v1148, 7
    %v1150 = vsub.s32 0, %v1149
    %v1151 = vrot.slane %v1146, %v1150
    %v1152 = vlaneseq
    %v1153 = vshrl.u32 %v1152, 7
    %v1154 = vsub.s32 1, %v1153
    %v1155 = vrot.slane %v1146, %v1154
    %v1166 = vcombine.high %v114, %v114
    %v1168 = vunpack.c.l.s4 1983009808
    %v1169 = vunpack.c.0.s8 %v1168
    %v1170 = vlaneseq
    %v1171 = vshrl.u32 %v1170, 7
    %v1172 = vsub.s32 %v1169, %v1171
    %v1173 = vrot.slane %v114, %v1172
    %v1175 = vunpack.c.l.s4 1983009808
    %v1176 = vunpack.c.0.s8 %v1175
    %v1177 = vlaneseq
    %v1178 = vshrl.u32 %v1177, 7
    %v1179 = vsub.s32 %v1176, %v1178
    %v1180 = vrot.slane %v1166, %v1179
    %v1181 = vcombine.high %v1173, %v1173
    %v1182 = vcombine.high %v1180, %v1180
    %v1183 = vcombine.high %v115, %v115
    %v1185 = vunpack.c.l.s4 1983009808
    %v1186 = vunpack.c.0.s8 %v1185
    %v1187 = vlaneseq
    %v1188 = vshrl.u32 %v1187, 7
    %v1189 = vsub.s32 %v1186, %v1188
    %v1190 = vrot.slane %v115, %v1189
    %v1192 = vunpack.c.l.s4 1983009808
    %v1193 = vunpack.c.0.s8 %v1192
    %v1194 = vlaneseq
    %v1195 = vshrl.u32 %v1194, 7
    %v1196 = vsub.s32 %v1193, %v1195
    %v1197 = vrot.slane %v1183, %v1196
    %v1198 = vcombine.high %v1190, %v1190
    %v1199 = vcombine.high %v1197, %v1197
    %v1200 = vcombine.high %v116, %v116
    %v1202 = vunpack.c.l.s4 1983009808
    %v1203 = vunpack.c.0.s8 %v1202
    %v1204 = vlaneseq
    %v1205 = vshrl.u32 %v1204, 7
    %v1206 = vsub.s32 %v1203, %v1205
    %v1207 = vrot.slane %v116, %v1206
    %v1209 = vunpack.c.l.s4 1983009808
    %v1210 = vunpack.c.0.s8 %v1209
    %v1211 = vlaneseq
    %v1212 = vshrl.u32 %v1211, 7
    %v1213 = vsub.s32 %v1210, %v1212
    %v1214 = vrot.slane %v1200, %v1213
    %v1215 = vcombine.high %v1207, %v1207
    %v1216 = vcombine.high %v1214, %v1214
    %v1217 = vcombine.high %v117, %v117
    %v1219 = vunpack.c.l.s4 1983009808
    %v1220 = vunpack.c.0.s8 %v1219
    %v1221 = vlaneseq
    %v1222 = vshrl.u32 %v1221, 7
    %v1223 = vsub.s32 %v1220, %v1222
    %v1224 = vrot.slane %v117, %v1223
    %v1226 = vunpack.c.l.s4 1983009808
    %v1227 = vunpack.c.0.s8 %v1226
    %v1228 = vlaneseq
    %v1229 = vshrl.u32 %v1228, 7
    %v1230 = vsub.s32 %v1227, %v1229
    %v1231 = vrot.slane %v1217, %v1230
    %v1232 = vcombine.high %v1224, %v1224
    %v1233 = vcombine.high %v1231, %v1231
    %v1234 = vcombine.high %v118, %v118
    %v1236 = vunpack.c.l.s4 1983009808
    %v1237 = vunpack.c.0.s8 %v1236
    %v1238 = vlaneseq
    %v1239 = vshrl.u32 %v1238, 7
    %v1240 = vsub.s32 %v1237, %v1239
    %v1241 = vrot.slane %v118, %v1240
    %v1243 = vunpack.c.l.s4 1983009808
    %v1244 = vunpack.c.0.s8 %v1243
    %v1245 = vlaneseq
    %v1246 = vshrl.u32 %v1245, 7
    %v1247 = vsub.s32 %v1244, %v1246
    %v1248 = vrot.slane %v1234, %v1247
    %v1249 = vcombine.high %v1241, %v1241
    %v1250 = vcombine.high %v1248, %v1248
    %v1251 = vcombine.high %v119, %v119
    %v1253 = vunpack.c.l.s4 1983009808
    %v1254 = vunpack.c.0.s8 %v1253
    %v1255 = vlaneseq
    %v1256 = vshrl.u32 %v1255, 7
    %v1257 = vsub.s32 %v1254, %v1256
    %v1258 = vrot.slane %v119, %v1257
    %v1260 = vunpack.c.l.s4 1983009808
    %v1261 = vunpack.c.0.s8 %v1260
    %v1262 = vlaneseq
    %v1263 = vshrl.u32 %v1262, 7
    %v1264 = vsub.s32 %v1261, %v1263
    %v1265 = vrot.slane %v1251, %v1264
    %v1266 = vcombine.high %v1258, %v1258
    %v1267 = vcombine.high %v1265, %v1265
    %v1268 = vcombine.high %v120, %v120
    %v1270 = vunpack.c.l.s4 1983009808
    %v1271 = vunpack.c.0.s8 %v1270
    %v1272 = vlaneseq
    %v1273 = vshrl.u32 %v1272, 7
    %v1274 = vsub.s32 %v1271, %v1273
    %v1275 = vrot.slane %v120, %v1274
    %v1277 = vunpack.c.l.s4 1983009808
    %v1278 = vunpack.c.0.s8 %v1277
    %v1279 = vlaneseq
    %v1280 = vshrl.u32 %v1279, 7
    %v1281 = vsub.s32 %v1278, %v1280
    %v1282 = vrot.slane %v1268, %v1281
    %v1283 = vcombine.high %v1275, %v1275
    %v1284 = vcombine.high %v1282, %v1282
    %v1285 = vcombine.high %v121, %v121
    %v1287 = vunpack.c.l.s4 1983009808
    %v1288 = vunpack.c.0.s8 %v1287
    %v1289 = vlaneseq
    %v1290 = vshrl.u32 %v1289, 7
    %v1291 = vsub.s32 %v1288, %v1290
    %v1292 = vrot.slane %v121, %v1291
    %v1294 = vunpack.c.l.s4 1983009808
    %v1295 = vunpack.c.0.s8 %v1294
    %v1296 = vlaneseq
    %v1297 = vshrl.u32 %v1296, 7
    %v1298 = vsub.s32 %v1295, %v1297
    %v1299 = vrot.slane %v1285, %v1298
    %v1300 = vcombine.high %v1292, %v1292
    %v1301 = vcombine.high %v1299, %v1299
    %1334 = vmatprep.subr.mxu0 %v123
    %1335 = vmatpush1.msra.mxu0 %v122
    %1336 = vmatprep.subr.mxu0 %v125
    %1337 = vmatpush1.msra.mxu0 %v124
    %1338 = vmatprep.subr.mxu0 %v127
    %1339 = vmatpush1.msra.mxu0 %v126
    %1340 = vmatprep.subr.mxu0 %v129
    %1341 = vmatpush1.msra.mxu0 %v128
    %1342 = vmatprep.subr.mxu0 %v131
    %1343 = vmatpush1.msra.mxu0 %v130
    %1344 = vmatprep.subr.mxu0 %v133
    %1345 = vmatpush1.msra.mxu0 %v132
    %1346 = vmatprep.subr.mxu0 %v135
    %1347 = vmatpush1.msra.mxu0 %v134
    %1348 = vmatprep.subr.mxu0 %v137
    %1349 = vmatpush1.msra.mxu0 %v136
    %1350 = vmatprep.subr.mxu0 %v139
    %1351 = vmatpush1.msra.mxu0 %v138
    %1352 = vmatprep.subr.mxu0 %v141
    %1353 = vmatpush1.msra.mxu0 %v140
    %1354 = vmatprep.subr.mxu0 %v143
    %1355 = vmatpush1.msra.mxu0 %v142
    %1356 = vmatprep.subr.mxu0 %v145
    %1357 = vmatpush1.msra.mxu0 %v144
    %1358 = vmatprep.subr.mxu0 %v147
    %1359 = vmatpush1.msra.mxu0 %v146
    %1360 = vmatprep.subr.mxu0 %v149
    %1361 = vmatpush1.msra.mxu0 %v148
    %1362 = vmatprep.subr.mxu0 %v151
    %1363 = vmatpush1.msra.mxu0 %v150
    %1364 = vmatprep.subr.mxu0 %v153
    %1365 = vmatpush1.msra.mxu0 %v152
    %1366 = vmatprep.subr.mxu0 %v155
    %1367 = vmatpush1.msra.mxu0 %v154
    %1368 = vmatprep.subr.mxu0 %v157
    %1369 = vmatpush1.msra.mxu0 %v156
    %1370 = vmatprep.subr.mxu0 %v159
    %1371 = vmatpush1.msra.mxu0 %v158
    %1372 = vmatprep.subr.mxu0 %v161
    %1373 = vmatpush1.msra.mxu0 %v160
    %1374 = vmatprep.subr.mxu0 %v163
    %1375 = vmatpush1.msra.mxu0 %v162
    %1376 = vmatprep.subr.mxu0 %v165
    %1377 = vmatpush1.msra.mxu0 %v164
    %1378 = vmatprep.subr.mxu0 %v167
    %1379 = vmatpush1.msra.mxu0 %v166
    %1380 = vmatprep.subr.mxu0 %v169
    %1381 = vmatpush1.msra.mxu0 %v168
    %1382 = vmatprep.subr.mxu0 %v171
    %1383 = vmatpush1.msra.mxu0 %v170
    %1384 = vmatprep.subr.mxu0 %v173
    %1385 = vmatpush1.msra.mxu0 %v172
    %1386 = vmatprep.subr.mxu0 %v175
    %1387 = vmatpush1.msra.mxu0 %v174
    %1388 = vmatprep.subr.mxu0 %v177
    %1389 = vmatpush1.msra.mxu0 %v176
    %1390 = vmatprep.subr.mxu0 %v179
    %1391 = vmatpush1.msra.mxu0 %v178
    %1392 = vmatprep.subr.mxu0 %v181
    %1393 = vmatpush1.msra.mxu0 %v180
    %1394 = vmatprep.subr.mxu0 %v183
    %1395 = vmatpush1.msra.mxu0 %v182
    %1396 = vmatprep.subr.mxu0 %v185
    %1397 = vmatpush1.msra.mxu0 %v184
    %1398 = vmatprep.mubr.f32.mxu0 %v1181
    %1399 = vmatmul.mubr.f32.gmra.mrb[0].mxu0 %v1173
    %v1400 = vpop.f32.mrb[0].mxu0
    %v1401 = vadd.f32 %v1151, %v1400
    %v1402 = vpop.f32.mrb[0].mxu0
    %v1403 = vadd.f32 %v1155, %v1402
    %1404 = vdwg.mxu0
    %1405 = vmatprep.subr.mxu0 %v187
    %1406 = vmatpush1.msra.mxu0 %v186
    %1407 = vmatprep.subr.mxu0 %v189
    %1408 = vmatpush1.msra.mxu0 %v188
    %1409 = vmatprep.subr.mxu0 %v191
    %1410 = vmatpush1.msra.mxu0 %v190
    %1411 = vmatprep.subr.mxu0 %v193
    %1412 = vmatpush1.msra.mxu0 %v192
    %1413 = vmatprep.subr.mxu0 %v195
    %1414 = vmatpush1.msra.mxu0 %v194
    %1415 = vmatprep.subr.mxu0 %v197
    %1416 = vmatpush1.msra.mxu0 %v196
    %1417 = vmatprep.subr.mxu0 %v199
    %1418 = vmatpush1.msra.mxu0 %v198
    %1419 = vmatprep.subr.mxu0 %v201
    %1420 = vmatpush1.msra.mxu0 %v200
    %1421 = vmatprep.subr.mxu0 %v203
    %1422 = vmatpush1.msra.mxu0 %v202
    %1423 = vmatprep.subr.mxu0 %v205
    %1424 = vmatpush1.msra.mxu0 %v204
    %1425 = vmatprep.subr.mxu0 %v207
    %1426 = vmatpush1.msra.mxu0 %v206
    %1427 = vmatprep.subr.mxu0 %v209
    %1428 = vmatpush1.msra.mxu0 %v208
    %1429 = vmatprep.subr.mxu0 %v211
    %1430 = vmatpush1.msra.mxu0 %v210
    %1431 = vmatprep.subr.mxu0 %v213
    %1432 = vmatpush1.msra.mxu0 %v212
    %1433 = vmatprep.subr.mxu0 %v215
    %1434 = vmatpush1.msra.mxu0 %v214
    %1435 = vmatprep.subr.mxu0 %v217
    %1436 = vmatpush1.msra.mxu0 %v216
    %1437 = vmatprep.subr.mxu0 %v219
    %1438 = vmatpush1.msra.mxu0 %v218
    %1439 = vmatprep.subr.mxu0 %v221
    %1440 = vmatpush1.msra.mxu0 %v220
    %1441 = vmatprep.subr.mxu0 %v223
    %1442 = vmatpush1.msra.mxu0 %v222
    %1443 = vmatprep.subr.mxu0 %v225
    %1444 = vmatpush1.msra.mxu0 %v224
    %1445 = vmatprep.subr.mxu0 %v227
    %1446 = vmatpush1.msra.mxu0 %v226
    %1447 = vmatprep.subr.mxu0 %v229
    %1448 = vmatpush1.msra.mxu0 %v228
    %1449 = vmatprep.subr.mxu0 %v231
    %1450 = vmatpush1.msra.mxu0 %v230
    %1451 = vmatprep.subr.mxu0 %v233
    %1452 = vmatpush1.msra.mxu0 %v232
    %1453 = vmatprep.subr.mxu0 %v235
    %1454 = vmatpush1.msra.mxu0 %v234
    %1455 = vmatprep.subr.mxu0 %v237
    %1456 = vmatpush1.msra.mxu0 %v236
    %1457 = vmatprep.subr.mxu0 %v239
    %1458 = vmatpush1.msra.mxu0 %v238
    %1459 = vmatprep.subr.mxu0 %v241
    %1460 = vmatpush1.msra.mxu0 %v240
    %1461 = vmatprep.subr.mxu0 %v243
    %1462 = vmatpush1.msra.mxu0 %v242
    %1463 = vmatprep.subr.mxu0 %v245
    %1464 = vmatpush1.msra.mxu0 %v244
    %1465 = vmatprep.subr.mxu0 %v247
    %1466 = vmatpush1.msra.mxu0 %v246
    %1467 = vmatprep.subr.mxu0 %v249
    %1468 = vmatpush1.msra.mxu0 %v248
    %1469 = vmatprep.mubr.f32.mxu0 %v1182
    %1470 = vmatmul.mubr.f32.gmra.mrb[0].mxu0 %v1180
    %v1471 = vpop.f32.mrb[0].mxu0
    %v1472 = vadd.f32 %v1401, %v1471
    %v1473 = vpop.f32.mrb[0].mxu0
    %v1474 = vadd.f32 %v1403, %v1473
    %1475 = vdwg.mxu0
    %1476 = vmatprep.subr.mxu0 %v251
    %1477 = vmatpush1.msra.mxu0 %v250
    %1478 = vmatprep.subr.mxu0 %v253
    %1479 = vmatpush1.msra.mxu0 %v252
    %1480 = vmatprep.subr.mxu0 %v255
    %1481 = vmatpush1.msra.mxu0 %v254
    %1482 = vmatprep.subr.mxu0 %v257
    %1483 = vmatpush1.msra.mxu0 %v256
    %1484 = vmatprep.subr.mxu0 %v259
    %1485 = vmatpush1.msra.mxu0 %v258
    %1486 = vmatprep.subr.mxu0 %v261
    %1487 = vmatpush1.msra.mxu0 %v260
    %1488 = vmatprep.subr.mxu0 %v263
    %1489 = vmatpush1.msra.mxu0 %v262
    %1490 = vmatprep.subr.mxu0 %v265
    %1491 = vmatpush1.msra.mxu0 %v264
    %1492 = vmatprep.subr.mxu0 %v267
    %1493 = vmatpush1.msra.mxu0 %v266
    %1494 = vmatprep.subr.mxu0 %v269
    %1495 = vmatpush1.msra.mxu0 %v268
    %1496 = vmatprep.subr.mxu0 %v271
    %1497 = vmatpush1.msra.mxu0 %v270
    %1498 = vmatprep.subr.mxu0 %v273
    %1499 = vmatpush1.msra.mxu0 %v272
    %1500 = vmatprep.subr.mxu0 %v275
    %1501 = vmatpush1.msra.mxu0 %v274
    %1502 = vmatprep.subr.mxu0 %v277
    %1503 = vmatpush1.msra.mxu0 %v276
    %1504 = vmatprep.subr.mxu0 %v279
    %1505 = vmatpush1.msra.mxu0 %v278
    %1506 = vmatprep.subr.mxu0 %v281
    %1507 = vmatpush1.msra.mxu0 %v280
    %1508 = vmatprep.subr.mxu0 %v283
    %1509 = vmatpush1.msra.mxu0 %v282
    %1510 = vmatprep.subr.mxu0 %v285
    %1511 = vmatpush1.msra.mxu0 %v284
    %1512 = vmatprep.subr.mxu0 %v287
    %1513 = vmatpush1.msra.mxu0 %v286
    %1514 = vmatprep.subr.mxu0 %v289
    %1515 = vmatpush1.msra.mxu0 %v288
    %1516 = vmatprep.subr.mxu0 %v291
    %1517 = vmatpush1.msra.mxu0 %v290
    %1518 = vmatprep.subr.mxu0 %v293
    %1519 = vmatpush1.msra.mxu0 %v292
    %1520 = vmatprep.subr.mxu0 %v295
    %1521 = vmatpush1.msra.mxu0 %v294
    %1522 = vmatprep.subr.mxu0 %v297
    %1523 = vmatpush1.msra.mxu0 %v296
    %1524 = vmatprep.subr.mxu0 %v299
    %1525 = vmatpush1.msra.mxu0 %v298
    %1526 = vmatprep.subr.mxu0 %v301
    %1527 = vmatpush1.msra.mxu0 %v300
    %1528 = vmatprep.subr.mxu0 %v303
    %1529 = vmatpush1.msra.mxu0 %v302
    %1530 = vmatprep.subr.mxu0 %v305
    %1531 = vmatpush1.msra.mxu0 %v304
    %1532 = vmatprep.subr.mxu0 %v307
    %1533 = vmatpush1.msra.mxu0 %v306
    %1534 = vmatprep.subr.mxu0 %v309
    %1535 = vmatpush1.msra.mxu0 %v308
    %1536 = vmatprep.subr.mxu0 %v311
    %1537 = vmatpush1.msra.mxu0 %v310
    %1538 = vmatprep.subr.mxu0 %v313
    %1539 = vmatpush1.msra.mxu0 %v312
    %1540 = vmatprep.mubr.f32.mxu0 %v1198
    %1541 = vmatmul.mubr.f32.gmra.mrb[0].mxu0 %v1190
    %v1542 = vpop.f32.mrb[0].mxu0
    %v1543 = vadd.f32 %v1472, %v1542
    %v1544 = vpop.f32.mrb[0].mxu0
    %v1545 = vadd.f32 %v1474, %v1544
    %1546 = vdwg.mxu0
    %1547 = vmatprep.subr.mxu0 %v315
    %1548 = vmatpush1.msra.mxu0 %v314
    %1549 = vmatprep.subr.mxu0 %v317
    %1550 = vmatpush1.msra.mxu0 %v316
    %1551 = vmatprep.subr.mxu0 %v319
    %1552 = vmatpush1.msra.mxu0 %v318
    %1553 = vmatprep.subr.mxu0 %v321
    %1554 = vmatpush1.msra.mxu0 %v320
    %1555 = vmatprep.subr.mxu0 %v323
    %1556 = vmatpush1.msra.mxu0 %v322
    %1557 = vmatprep.subr.mxu0 %v325
    %1558 = vmatpush1.msra.mxu0 %v324
    %1559 = vmatprep.subr.mxu0 %v327
    %1560 = vmatpush1.msra.mxu0 %v326
    %1561 = vmatprep.subr.mxu0 %v329
    %1562 = vmatpush1.msra.mxu0 %v328
    %1563 = vmatprep.subr.mxu0 %v331
    %1564 = vmatpush1.msra.mxu0 %v330
    %1565 = vmatprep.subr.mxu0 %v333
    %1566 = vmatpush1.msra.mxu0 %v332
    %1567 = vmatprep.subr.mxu0 %v335
    %1568 = vmatpush1.msra.mxu0 %v334
    %1569 = vmatprep.subr.mxu0 %v337
    %1570 = vmatpush1.msra.mxu0 %v336
    %1571 = vmatprep.subr.mxu0 %v339
    %1572 = vmatpush1.msra.mxu0 %v338
    %1573 = vmatprep.subr.mxu0 %v341
    %1574 = vmatpush1.msra.mxu0 %v340
    %1575 = vmatprep.subr.mxu0 %v343
    %1576 = vmatpush1.msra.mxu0 %v342
    %1577 = vmatprep.subr.mxu0 %v345
    %1578 = vmatpush1.msra.mxu0 %v344
    %1579 = vmatprep.subr.mxu0 %v347
    %1580 = vmatpush1.msra.mxu0 %v346
    %1581 = vmatprep.subr.mxu0 %v349
    %1582 = vmatpush1.msra.mxu0 %v348
    %1583 = vmatprep.subr.mxu0 %v351
    %1584 = vmatpush1.msra.mxu0 %v350
    %1585 = vmatprep.subr.mxu0 %v353
    %1586 = vmatpush1.msra.mxu0 %v352
    %1587 = vmatprep.subr.mxu0 %v355
    %1588 = vmatpush1.msra.mxu0 %v354
    %1589 = vmatprep.subr.mxu0 %v357
    %1590 = vmatpush1.msra.mxu0 %v356
    %1591 = vmatprep.subr.mxu0 %v359
    %1592 = vmatpush1.msra.mxu0 %v358
    %1593 = vmatprep.subr.mxu0 %v361
    %1594 = vmatpush1.msra.mxu0 %v360
    %1595 = vmatprep.subr.mxu0 %v363
    %1596 = vmatpush1.msra.mxu0 %v362
    %1597 = vmatprep.subr.mxu0 %v365
    %1598 = vmatpush1.msra.mxu0 %v364
    %1599 = vmatprep.subr.mxu0 %v367
    %1600 = vmatpush1.msra.mxu0 %v366
    %1601 = vmatprep.subr.mxu0 %v369
    %1602 = vmatpush1.msra.mxu0 %v368
    %1603 = vmatprep.subr.mxu0 %v371
    %1604 = vmatpush1.msra.mxu0 %v370
    %1605 = vmatprep.subr.mxu0 %v373
    %1606 = vmatpush1.msra.mxu0 %v372
    %1607 = vmatprep.subr.mxu0 %v375
    %1608 = vmatpush1.msra.mxu0 %v374
    %1609 = vmatprep.subr.mxu0 %v377
    %1610 = vmatpush1.msra.mxu0 %v376
    %1611 = vmatprep.mubr.f32.mxu0 %v1199
    %1612 = vmatmul.mubr.f32.gmra.mrb[0].mxu0 %v1197
    %v1613 = vpop.f32.mrb[0].mxu0
    %v1614 = vadd.f32 %v1543, %v1613
    %v1615 = vpop.f32.mrb[0].mxu0
    %v1616 = vadd.f32 %v1545, %v1615
    %1617 = vdwg.mxu0
    %1618 = vmatprep.subr.mxu0 %v379
    %1619 = vmatpush1.msra.mxu0 %v378
    %1620 = vmatprep.subr.mxu0 %v381
    %1621 = vmatpush1.msra.mxu0 %v380
    %1622 = vmatprep.subr.mxu0 %v383
    %1623 = vmatpush1.msra.mxu0 %v382
    %1624 = vmatprep.subr.mxu0 %v385
    %1625 = vmatpush1.msra.mxu0 %v384
    %1626 = vmatprep.subr.mxu0 %v387
    %1627 = vmatpush1.msra.mxu0 %v386
    %1628 = vmatprep.subr.mxu0 %v389
    %1629 = vmatpush1.msra.mxu0 %v388
    %1630 = vmatprep.subr.mxu0 %v391
    %1631 = vmatpush1.msra.mxu0 %v390
    %1632 = vmatprep.subr.mxu0 %v393
    %1633 = vmatpush1.msra.mxu0 %v392
    %1634 = vmatprep.subr.mxu0 %v395
    %1635 = vmatpush1.msra.mxu0 %v394
    %1636 = vmatprep.subr.mxu0 %v397
    %1637 = vmatpush1.msra.mxu0 %v396
    %1638 = vmatprep.subr.mxu0 %v399
    %1639 = vmatpush1.msra.mxu0 %v398
    %1640 = vmatprep.subr.mxu0 %v401
    %1641 = vmatpush1.msra.mxu0 %v400
    %1642 = vmatprep.subr.mxu0 %v403
    %1643 = vmatpush1.msra.mxu0 %v402
    %1644 = vmatprep.subr.mxu0 %v405
    %1645 = vmatpush1.msra.mxu0 %v404
    %1646 = vmatprep.subr.mxu0 %v407
    %1647 = vmatpush1.msra.mxu0 %v406
    %1648 = vmatprep.subr.mxu0 %v409
    %1649 = vmatpush1.msra.mxu0 %v408
    %1650 = vmatprep.subr.mxu0 %v411
    %1651 = vmatpush1.msra.mxu0 %v410
    %1652 = vmatprep.subr.mxu0 %v413
    %1653 = vmatpush1.msra.mxu0 %v412
    %1654 = vmatprep.subr.mxu0 %v415
    %1655 = vmatpush1.msra.mxu0 %v414
    %1656 = vmatprep.subr.mxu0 %v417
    %1657 = vmatpush1.msra.mxu0 %v416
    %1658 = vmatprep.subr.mxu0 %v419
    %1659 = vmatpush1.msra.mxu0 %v418
    %1660 = vmatprep.subr.mxu0 %v421
    %1661 = vmatpush1.msra.mxu0 %v420
    %1662 = vmatprep.subr.mxu0 %v423
    %1663 = vmatpush1.msra.mxu0 %v422
    %1664 = vmatprep.subr.mxu0 %v425
    %1665 = vmatpush1.msra.mxu0 %v424
    %1666 = vmatprep.subr.mxu0 %v427
    %1667 = vmatpush1.msra.mxu0 %v426
    %1668 = vmatprep.subr.mxu0 %v429
    %1669 = vmatpush1.msra.mxu0 %v428
    %1670 = vmatprep.subr.mxu0 %v431
    %1671 = vmatpush1.msra.mxu0 %v430
    %1672 = vmatprep.subr.mxu0 %v433
    %1673 = vmatpush1.msra.mxu0 %v432
    %1674 = vmatprep.subr.mxu0 %v435
    %1675 = vmatpush1.msra.mxu0 %v434
    %1676 = vmatprep.subr.mxu0 %v437
    %1677 = vmatpush1.msra.mxu0 %v436
    %1678 = vmatprep.subr.mxu0 %v439
    %1679 = vmatpush1.msra.mxu0 %v438
    %1680 = vmatprep.subr.mxu0 %v441
    %1681 = vmatpush1.msra.mxu0 %v440
    %1682 = vmatprep.mubr.f32.mxu0 %v1215
    %1683 = vmatmul.mubr.f32.gmra.mrb[0].mxu0 %v1207
    %v1684 = vpop.f32.mrb[0].mxu0
    %v1685 = vadd.f32 %v1614, %v1684
    %v1686 = vpop.f32.mrb[0].mxu0
    %v1687 = vadd.f32 %v1616, %v1686
    %1688 = vdwg.mxu0
    %1689 = vmatprep.subr.mxu0 %v443
    %1690 = vmatpush1.msra.mxu0 %v442
    %1691 = vmatprep.subr.mxu0 %v445
    %1692 = vmatpush1.msra.mxu0 %v444
    %1693 = vmatprep.subr.mxu0 %v447
    %1694 = vmatpush1.msra.mxu0 %v446
    %1695 = vmatprep.subr.mxu0 %v449
    %1696 = vmatpush1.msra.mxu0 %v448
    %1697 = vmatprep.subr.mxu0 %v451
    %1698 = vmatpush1.msra.mxu0 %v450
    %1699 = vmatprep.subr.mxu0 %v453
    %1700 = vmatpush1.msra.mxu0 %v452
    %1701 = vmatprep.subr.mxu0 %v455
    %1702 = vmatpush1.msra.mxu0 %v454
    %1703 = vmatprep.subr.mxu0 %v457
    %1704 = vmatpush1.msra.mxu0 %v456
    %1705 = vmatprep.subr.mxu0 %v459
    %1706 = vmatpush1.msra.mxu0 %v458
    %1707 = vmatprep.subr.mxu0 %v461
    %1708 = vmatpush1.msra.mxu0 %v460
    %1709 = vmatprep.subr.mxu0 %v463
    %1710 = vmatpush1.msra.mxu0 %v462
    %1711 = vmatprep.subr.mxu0 %v465
    %1712 = vmatpush1.msra.mxu0 %v464
    %1713 = vmatprep.subr.mxu0 %v467
    %1714 = vmatpush1.msra.mxu0 %v466
    %1715 = vmatprep.subr.mxu0 %v469
    %1716 = vmatpush1.msra.mxu0 %v468
    %1717 = vmatprep.subr.mxu0 %v471
    %1718 = vmatpush1.msra.mxu0 %v470
    %1719 = vmatprep.subr.mxu0 %v473
    %1720 = vmatpush1.msra.mxu0 %v472
    %1721 = vmatprep.subr.mxu0 %v475
    %1722 = vmatpush1.msra.mxu0 %v474
    %1723 = vmatprep.subr.mxu0 %v477
    %1724 = vmatpush1.msra.mxu0 %v476
    %1725 = vmatprep.subr.mxu0 %v479
    %1726 = vmatpush1.msra.mxu0 %v478
    %1727 = vmatprep.subr.mxu0 %v481
    %1728 = vmatpush1.msra.mxu0 %v480
    %1729 = vmatprep.subr.mxu0 %v483
    %1730 = vmatpush1.msra.mxu0 %v482
    %1731 = vmatprep.subr.mxu0 %v485
    %1732 = vmatpush1.msra.mxu0 %v484
    %1733 = vmatprep.subr.mxu0 %v487
    %1734 = vmatpush1.msra.mxu0 %v486
    %1735 = vmatprep.subr.mxu0 %v489
    %1736 = vmatpush1.msra.mxu0 %v488
    %1737 = vmatprep.subr.mxu0 %v491
    %1738 = vmatpush1.msra.mxu0 %v490
    %1739 = vmatprep.subr.mxu0 %v493
    %1740 = vmatpush1.msra.mxu0 %v492
    %1741 = vmatprep.subr.mxu0 %v495
    %1742 = vmatpush1.msra.mxu0 %v494
    %1743 = vmatprep.subr.mxu0 %v497
    %1744 = vmatpush1.msra.mxu0 %v496
    %1745 = vmatprep.subr.mxu0 %v499
    %1746 = vmatpush1.msra.mxu0 %v498
    %1747 = vmatprep.subr.mxu0 %v501
    %1748 = vmatpush1.msra.mxu0 %v500
    %1749 = vmatprep.subr.mxu0 %v503
    %1750 = vmatpush1.msra.mxu0 %v502
    %1751 = vmatprep.subr.mxu0 %v505
    %1752 = vmatpush1.msra.mxu0 %v504
    %1753 = vmatprep.mubr.f32.mxu0 %v1216
    %1754 = vmatmul.mubr.f32.gmra.mrb[0].mxu0 %v1214
    %v1755 = vpop.f32.mrb[0].mxu0
    %v1756 = vadd.f32 %v1685, %v1755
    %v1757 = vpop.f32.mrb[0].mxu0
    %v1758 = vadd.f32 %v1687, %v1757
    %1759 = vdwg.mxu0
    %1760 = vmatprep.subr.mxu0 %v507
    %1761 = vmatpush1.msra.mxu0 %v506
    %1762 = vmatprep.subr.mxu0 %v509
    %1763 = vmatpush1.msra.mxu0 %v508
    %1764 = vmatprep.subr.mxu0 %v511
    %1765 = vmatpush1.msra.mxu0 %v510
    %1766 = vmatprep.subr.mxu0 %v513
    %1767 = vmatpush1.msra.mxu0 %v512
    %1768 = vmatprep.subr.mxu0 %v515
    %1769 = vmatpush1.msra.mxu0 %v514
    %1770 = vmatprep.subr.mxu0 %v517
    %1771 = vmatpush1.msra.mxu0 %v516
    %1772 = vmatprep.subr.mxu0 %v519
    %1773 = vmatpush1.msra.mxu0 %v518
    %1774 = vmatprep.subr.mxu0 %v521
    %1775 = vmatpush1.msra.mxu0 %v520
    %1776 = vmatprep.subr.mxu0 %v523
    %1777 = vmatpush1.msra.mxu0 %v522
    %1778 = vmatprep.subr.mxu0 %v525
    %1779 = vmatpush1.msra.mxu0 %v524
    %1780 = vmatprep.subr.mxu0 %v527
    %1781 = vmatpush1.msra.mxu0 %v526
    %1782 = vmatprep.subr.mxu0 %v529
    %1783 = vmatpush1.msra.mxu0 %v528
    %1784 = vmatprep.subr.mxu0 %v531
    %1785 = vmatpush1.msra.mxu0 %v530
    %1786 = vmatprep.subr.mxu0 %v533
    %1787 = vmatpush1.msra.mxu0 %v532
    %1788 = vmatprep.subr.mxu0 %v535
    %1789 = vmatpush1.msra.mxu0 %v534
    %1790 = vmatprep.subr.mxu0 %v537
    %1791 = vmatpush1.msra.mxu0 %v536
    %1792 = vmatprep.subr.mxu0 %v539
    %1793 = vmatpush1.msra.mxu0 %v538
    %1794 = vmatprep.subr.mxu0 %v541
    %1795 = vmatpush1.msra.mxu0 %v540
    %1796 = vmatprep.subr.mxu0 %v543
    %1797 = vmatpush1.msra.mxu0 %v542
    %1798 = vmatprep.subr.mxu0 %v545
    %1799 = vmatpush1.msra.mxu0 %v544
    %1800 = vmatprep.subr.mxu0 %v547
    %1801 = vmatpush1.msra.mxu0 %v546
    %1802 = vmatprep.subr.mxu0 %v549
    %1803 = vmatpush1.msra.mxu0 %v548
    %1804 = vmatprep.subr.mxu0 %v551
    %1805 = vmatpush1.msra.mxu0 %v550
    %1806 = vmatprep.subr.mxu0 %v553
    %1807 = vmatpush1.msra.mxu0 %v552
    %1808 = vmatprep.subr.mxu0 %v555
    %1809 = vmatpush1.msra.mxu0 %v554
    %1810 = vmatprep.subr.mxu0 %v557
    %1811 = vmatpush1.msra.mxu0 %v556
    %1812 = vmatprep.subr.mxu0 %v559
    %1813 = vmatpush1.msra.mxu0 %v558
    %1814 = vmatprep.subr.mxu0 %v561
    %1815 = vmatpush1.msra.mxu0 %v560
    %1816 = vmatprep.subr.mxu0 %v563
    %1817 = vmatpush1.msra.mxu0 %v562
    %1818 = vmatprep.subr.mxu0 %v565
    %1819 = vmatpush1.msra.mxu0 %v564
    %1820 = vmatprep.subr.mxu0 %v567
    %1821 = vmatpush1.msra.mxu0 %v566
    %1822 = vmatprep.subr.mxu0 %v569
    %1823 = vmatpush1.msra.mxu0 %v568
    %1824 = vmatprep.mubr.f32.mxu0 %v1232
    %1825 = vmatmul.mubr.f32.gmra.mrb[0].mxu0 %v1224
    %v1826 = vpop.f32.mrb[0].mxu0
    %v1827 = vadd.f32 %v1756, %v1826
    %v1828 = vpop.f32.mrb[0].mxu0
    %v1829 = vadd.f32 %v1758, %v1828
    %1830 = vdwg.mxu0
    %1831 = vmatprep.subr.mxu0 %v571
    %1832 = vmatpush1.msra.mxu0 %v570
    %1833 = vmatprep.subr.mxu0 %v573
    %1834 = vmatpush1.msra.mxu0 %v572
    %1835 = vmatprep.subr.mxu0 %v575
    %1836 = vmatpush1.msra.mxu0 %v574
    %1837 = vmatprep.subr.mxu0 %v577
    %1838 = vmatpush1.msra.mxu0 %v576
    %1839 = vmatprep.subr.mxu0 %v579
    %1840 = vmatpush1.msra.mxu0 %v578
    %1841 = vmatprep.subr.mxu0 %v581
    %1842 = vmatpush1.msra.mxu0 %v580
    %1843 = vmatprep.subr.mxu0 %v583
    %1844 = vmatpush1.msra.mxu0 %v582
    %1845 = vmatprep.subr.mxu0 %v585
    %1846 = vmatpush1.msra.mxu0 %v584
    %1847 = vmatprep.subr.mxu0 %v587
    %1848 = vmatpush1.msra.mxu0 %v586
    %1849 = vmatprep.subr.mxu0 %v589
    %1850 = vmatpush1.msra.mxu0 %v588
    %1851 = vmatprep.subr.mxu0 %v591
    %1852 = vmatpush1.msra.mxu0 %v590
    %1853 = vmatprep.subr.mxu0 %v593
    %1854 = vmatpush1.msra.mxu0 %v592
    %1855 = vmatprep.subr.mxu0 %v595
    %1856 = vmatpush1.msra.mxu0 %v594
    %1857 = vmatprep.subr.mxu0 %v597
    %1858 = vmatpush1.msra.mxu0 %v596
    %1859 = vmatprep.subr.mxu0 %v599
    %1860 = vmatpush1.msra.mxu0 %v598
    %1861 = vmatprep.subr.mxu0 %v601
    %1862 = vmatpush1.msra.mxu0 %v600
    %1863 = vmatprep.subr.mxu0 %v603
    %1864 = vmatpush1.msra.mxu0 %v602
    %1865 = vmatprep.subr.mxu0 %v605
    %1866 = vmatpush1.msra.mxu0 %v604
    %1867 = vmatprep.subr.mxu0 %v607
    %1868 = vmatpush1.msra.mxu0 %v606
    %1869 = vmatprep.subr.mxu0 %v609
    %1870 = vmatpush1.msra.mxu0 %v608
    %1871 = vmatprep.subr.mxu0 %v611
    %1872 = vmatpush1.msra.mxu0 %v610
    %1873 = vmatprep.subr.mxu0 %v613
    %1874 = vmatpush1.msra.mxu0 %v612
    %1875 = vmatprep.subr.mxu0 %v615
    %1876 = vmatpush1.msra.mxu0 %v614
    %1877 = vmatprep.subr.mxu0 %v617
    %1878 = vmatpush1.msra.mxu0 %v616
    %1879 = vmatprep.subr.mxu0 %v619
    %1880 = vmatpush1.msra.mxu0 %v618
    %1881 = vmatprep.subr.mxu0 %v621
    %1882 = vmatpush1.msra.mxu0 %v620
    %1883 = vmatprep.subr.mxu0 %v623
    %1884 = vmatpush1.msra.mxu0 %v622
    %1885 = vmatprep.subr.mxu0 %v625
    %1886 = vmatpush1.msra.mxu0 %v624
    %1887 = vmatprep.subr.mxu0 %v627
    %1888 = vmatpush1.msra.mxu0 %v626
    %1889 = vmatprep.subr.mxu0 %v629
    %1890 = vmatpush1.msra.mxu0 %v628
    %1891 = vmatprep.subr.mxu0 %v631
    %1892 = vmatpush1.msra.mxu0 %v630
    %1893 = vmatprep.subr.mxu0 %v633
    %1894 = vmatpush1.msra.mxu0 %v632
    %1895 = vmatprep.mubr.f32.mxu0 %v1233
    %1896 = vmatmul.mubr.f32.gmra.mrb[0].mxu0 %v1231
    %v1897 = vpop.f32.mrb[0].mxu0
    %v1898 = vadd.f32 %v1827, %v1897
    %v1899 = vpop.f32.mrb[0].mxu0
    %v1900 = vadd.f32 %v1829, %v1899
    %1901 = vdwg.mxu0
    %1902 = vmatprep.subr.mxu0 %v635
    %1903 = vmatpush1.msra.mxu0 %v634
    %1904 = vmatprep.subr.mxu0 %v637
    %1905 = vmatpush1.msra.mxu0 %v636
    %1906 = vmatprep.subr.mxu0 %v639
    %1907 = vmatpush1.msra.mxu0 %v638
    %1908 = vmatprep.subr.mxu0 %v641
    %1909 = vmatpush1.msra.mxu0 %v640
    %1910 = vmatprep.subr.mxu0 %v643
    %1911 = vmatpush1.msra.mxu0 %v642
    %1912 = vmatprep.subr.mxu0 %v645
    %1913 = vmatpush1.msra.mxu0 %v644
    %1914 = vmatprep.subr.mxu0 %v647
    %1915 = vmatpush1.msra.mxu0 %v646
    %1916 = vmatprep.subr.mxu0 %v649
    %1917 = vmatpush1.msra.mxu0 %v648
    %1918 = vmatprep.subr.mxu0 %v651
    %1919 = vmatpush1.msra.mxu0 %v650
    %1920 = vmatprep.subr.mxu0 %v653
    %1921 = vmatpush1.msra.mxu0 %v652
    %1922 = vmatprep.subr.mxu0 %v655
    %1923 = vmatpush1.msra.mxu0 %v654
    %1924 = vmatprep.subr.mxu0 %v657
    %1925 = vmatpush1.msra.mxu0 %v656
    %1926 = vmatprep.subr.mxu0 %v659
    %1927 = vmatpush1.msra.mxu0 %v658
    %1928 = vmatprep.subr.mxu0 %v661
    %1929 = vmatpush1.msra.mxu0 %v660
    %1930 = vmatprep.subr.mxu0 %v663
    %1931 = vmatpush1.msra.mxu0 %v662
    %1932 = vmatprep.subr.mxu0 %v665
    %1933 = vmatpush1.msra.mxu0 %v664
    %1934 = vmatprep.subr.mxu0 %v667
    %1935 = vmatpush1.msra.mxu0 %v666
    %1936 = vmatprep.subr.mxu0 %v669
    %1937 = vmatpush1.msra.mxu0 %v668
    %1938 = vmatprep.subr.mxu0 %v671
    %1939 = vmatpush1.msra.mxu0 %v670
    %1940 = vmatprep.subr.mxu0 %v673
    %1941 = vmatpush1.msra.mxu0 %v672
    %1942 = vmatprep.subr.mxu0 %v675
    %1943 = vmatpush1.msra.mxu0 %v674
    %1944 = vmatprep.subr.mxu0 %v677
    %1945 = vmatpush1.msra.mxu0 %v676
    %1946 = vmatprep.subr.mxu0 %v679
    %1947 = vmatpush1.msra.mxu0 %v678
    %1948 = vmatprep.subr.mxu0 %v681
    %1949 = vmatpush1.msra.mxu0 %v680
    %1950 = vmatprep.subr.mxu0 %v683
    %1951 = vmatpush1.msra.mxu0 %v682
    %1952 = vmatprep.subr.mxu0 %v685
    %1953 = vmatpush1.msra.mxu0 %v684
    %1954 = vmatprep.subr.mxu0 %v687
    %1955 = vmatpush1.msra.mxu0 %v686
    %1956 = vmatprep.subr.mxu0 %v689
    %1957 = vmatpush1.msra.mxu0 %v688
    %1958 = vmatprep.subr.mxu0 %v691
    %1959 = vmatpush1.msra.mxu0 %v690
    %1960 = vmatprep.subr.mxu0 %v693
    %1961 = vmatpush1.msra.mxu0 %v692
    %1962 = vmatprep.subr.mxu0 %v695
    %1963 = vmatpush1.msra.mxu0 %v694
    %1964 = vmatprep.subr.mxu0 %v697
    %1965 = vmatpush1.msra.mxu0 %v696
    %1966 = vmatprep.mubr.f32.mxu0 %v1249
    %1967 = vmatmul.mubr.f32.gmra.mrb[0].mxu0 %v1241
    %v1968 = vpop.f32.mrb[0].mxu0
    %v1969 = vadd.f32 %v1898, %v1968
    %v1970 = vpop.f32.mrb[0].mxu0
    %v1971 = vadd.f32 %v1900, %v1970
    %1972 = vdwg.mxu0
    %1973 = vmatprep.subr.mxu0 %v699
    %1974 = vmatpush1.msra.mxu0 %v698
    %1975 = vmatprep.subr.mxu0 %v701
    %1976 = vmatpush1.msra.mxu0 %v700
    %1977 = vmatprep.subr.mxu0 %v703
    %1978 = vmatpush1.msra.mxu0 %v702
    %1979 = vmatprep.subr.mxu0 %v705
    %1980 = vmatpush1.msra.mxu0 %v704
    %1981 = vmatprep.subr.mxu0 %v707
    %1982 = vmatpush1.msra.mxu0 %v706
    %1983 = vmatprep.subr.mxu0 %v709
    %1984 = vmatpush1.msra.mxu0 %v708
    %1985 = vmatprep.subr.mxu0 %v711
    %1986 = vmatpush1.msra.mxu0 %v710
    %1987 = vmatprep.subr.mxu0 %v713
    %1988 = vmatpush1.msra.mxu0 %v712
    %1989 = vmatprep.subr.mxu0 %v715
    %1990 = vmatpush1.msra.mxu0 %v714
    %1991 = vmatprep.subr.mxu0 %v717
    %1992 = vmatpush1.msra.mxu0 %v716
    %1993 = vmatprep.subr.mxu0 %v719
    %1994 = vmatpush1.msra.mxu0 %v718
    %1995 = vmatprep.subr.mxu0 %v721
    %1996 = vmatpush1.msra.mxu0 %v720
    %1997 = vmatprep.subr.mxu0 %v723
    %1998 = vmatpush1.msra.mxu0 %v722
    %1999 = vmatprep.subr.mxu0 %v725
    %2000 = vmatpush1.msra.mxu0 %v724
    %2001 = vmatprep.subr.mxu0 %v727
    %2002 = vmatpush1.msra.mxu0 %v726
    %2003 = vmatprep.subr.mxu0 %v729
    %2004 = vmatpush1.msra.mxu0 %v728
    %2005 = vmatprep.subr.mxu0 %v731
    %2006 = vmatpush1.msra.mxu0 %v730
    %2007 = vmatprep.subr.mxu0 %v733
    %2008 = vmatpush1.msra.mxu0 %v732
    %2009 = vmatprep.subr.mxu0 %v735
    %2010 = vmatpush1.msra.mxu0 %v734
    %2011 = vmatprep.subr.mxu0 %v737
    %2012 = vmatpush1.msra.mxu0 %v736
    %2013 = vmatprep.subr.mxu0 %v739
    %2014 = vmatpush1.msra.mxu0 %v738
    %2015 = vmatprep.subr.mxu0 %v741
    %2016 = vmatpush1.msra.mxu0 %v740
    %2017 = vmatprep.subr.mxu0 %v743
    %2018 = vmatpush1.msra.mxu0 %v742
    %2019 = vmatprep.subr.mxu0 %v745
    %2020 = vmatpush1.msra.mxu0 %v744
    %2021 = vmatprep.subr.mxu0 %v747
    %2022 = vmatpush1.msra.mxu0 %v746
    %2023 = vmatprep.subr.mxu0 %v749
    %2024 = vmatpush1.msra.mxu0 %v748
    %2025 = vmatprep.subr.mxu0 %v751
    %2026 = vmatpush1.msra.mxu0 %v750
    %2027 = vmatprep.subr.mxu0 %v753
    %2028 = vmatpush1.msra.mxu0 %v752
    %2029 = vmatprep.subr.mxu0 %v755
    %2030 = vmatpush1.msra.mxu0 %v754
    %2031 = vmatprep.subr.mxu0 %v757
    %2032 = vmatpush1.msra.mxu0 %v756
    %2033 = vmatprep.subr.mxu0 %v759
    %2034 = vmatpush1.msra.mxu0 %v758
    %2035 = vmatprep.subr.mxu0 %v761
    %2036 = vmatpush1.msra.mxu0 %v760
    %2037 = vmatprep.mubr.f32.mxu0 %v1250
    %2038 = vmatmul.mubr.f32.gmra.mrb[0].mxu0 %v1248
    %v2039 = vpop.f32.mrb[0].mxu0
    %v2040 = vadd.f32 %v1969, %v2039
    %v2041 = vpop.f32.mrb[0].mxu0
    %v2042 = vadd.f32 %v1971, %v2041
    %2043 = vdwg.mxu0
    %2044 = vmatprep.subr.mxu0 %v763
    %2045 = vmatpush1.msra.mxu0 %v762
    %2046 = vmatprep.subr.mxu0 %v765
    %2047 = vmatpush1.msra.mxu0 %v764
    %2048 = vmatprep.subr.mxu0 %v767
    %2049 = vmatpush1.msra.mxu0 %v766
    %2050 = vmatprep.subr.mxu0 %v769
    %2051 = vmatpush1.msra.mxu0 %v768
    %2052 = vmatprep.subr.mxu0 %v771
    %2053 = vmatpush1.msra.mxu0 %v770
    %2054 = vmatprep.subr.mxu0 %v773
    %2055 = vmatpush1.msra.mxu0 %v772
    %2056 = vmatprep.subr.mxu0 %v775
    %2057 = vmatpush1.msra.mxu0 %v774
    %2058 = vmatprep.subr.mxu0 %v777
    %2059 = vmatpush1.msra.mxu0 %v776
    %2060 = vmatprep.subr.mxu0 %v779
    %2061 = vmatpush1.msra.mxu0 %v778
    %2062 = vmatprep.subr.mxu0 %v781
    %2063 = vmatpush1.msra.mxu0 %v780
    %2064 = vmatprep.subr.mxu0 %v783
    %2065 = vmatpush1.msra.mxu0 %v782
    %2066 = vmatprep.subr.mxu0 %v785
    %2067 = vmatpush1.msra.mxu0 %v784
    %2068 = vmatprep.subr.mxu0 %v787
    %2069 = vmatpush1.msra.mxu0 %v786
    %2070 = vmatprep.subr.mxu0 %v789
    %2071 = vmatpush1.msra.mxu0 %v788
    %2072 = vmatprep.subr.mxu0 %v791
    %2073 = vmatpush1.msra.mxu0 %v790
    %2074 = vmatprep.subr.mxu0 %v793
    %2075 = vmatpush1.msra.mxu0 %v792
    %2076 = vmatprep.subr.mxu0 %v795
    %2077 = vmatpush1.msra.mxu0 %v794
    %2078 = vmatprep.subr.mxu0 %v797
    %2079 = vmatpush1.msra.mxu0 %v796
    %2080 = vmatprep.subr.mxu0 %v799
    %2081 = vmatpush1.msra.mxu0 %v798
    %2082 = vmatprep.subr.mxu0 %v801
    %2083 = vmatpush1.msra.mxu0 %v800
    %2084 = vmatprep.subr.mxu0 %v803
    %2085 = vmatpush1.msra.mxu0 %v802
    %2086 = vmatprep.subr.mxu0 %v805
    %2087 = vmatpush1.msra.mxu0 %v804
    %2088 = vmatprep.subr.mxu0 %v807
    %2089 = vmatpush1.msra.mxu0 %v806
    %2090 = vmatprep.subr.mxu0 %v809
    %2091 = vmatpush1.msra.mxu0 %v808
    %2092 = vmatprep.subr.mxu0 %v811
    %2093 = vmatpush1.msra.mxu0 %v810
    %2094 = vmatprep.subr.mxu0 %v813
    %2095 = vmatpush1.msra.mxu0 %v812
    %2096 = vmatprep.subr.mxu0 %v815
    %2097 = vmatpush1.msra.mxu0 %v814
    %2098 = vmatprep.subr.mxu0 %v817
    %2099 = vmatpush1.msra.mxu0 %v816
    %2100 = vmatprep.subr.mxu0 %v819
    %2101 = vmatpush1.msra.mxu0 %v818
    %2102 = vmatprep.subr.mxu0 %v821
    %2103 = vmatpush1.msra.mxu0 %v820
    %2104 = vmatprep.subr.mxu0 %v823
    %2105 = vmatpush1.msra.mxu0 %v822
    %2106 = vmatprep.subr.mxu0 %v825
    %2107 = vmatpush1.msra.mxu0 %v824
    %2108 = vmatprep.mubr.f32.mxu0 %v1266
    %2109 = vmatmul.mubr.f32.gmra.mrb[0].mxu0 %v1258
    %v2110 = vpop.f32.mrb[0].mxu0
    %v2111 = vadd.f32 %v2040, %v2110
    %v2112 = vpop.f32.mrb[0].mxu0
    %v2113 = vadd.f32 %v2042, %v2112
    %2114 = vdwg.mxu0
    %2115 = vmatprep.subr.mxu0 %v827
    %2116 = vmatpush1.msra.mxu0 %v826
    %2117 = vmatprep.subr.mxu0 %v829
    %2118 = vmatpush1.msra.mxu0 %v828
    %2119 = vmatprep.subr.mxu0 %v831
    %2120 = vmatpush1.msra.mxu0 %v830
    %2121 = vmatprep.subr.mxu0 %v833
    %2122 = vmatpush1.msra.mxu0 %v832
    %2123 = vmatprep.subr.mxu0 %v835
    %2124 = vmatpush1.msra.mxu0 %v834
    %2125 = vmatprep.subr.mxu0 %v837
    %2126 = vmatpush1.msra.mxu0 %v836
    %2127 = vmatprep.subr.mxu0 %v839
    %2128 = vmatpush1.msra.mxu0 %v838
    %2129 = vmatprep.subr.mxu0 %v841
    %2130 = vmatpush1.msra.mxu0 %v840
    %2131 = vmatprep.subr.mxu0 %v843
    %2132 = vmatpush1.msra.mxu0 %v842
    %2133 = vmatprep.subr.mxu0 %v845
    %2134 = vmatpush1.msra.mxu0 %v844
    %2135 = vmatprep.subr.mxu0 %v847
    %2136 = vmatpush1.msra.mxu0 %v846
    %2137 = vmatprep.subr.mxu0 %v849
    %2138 = vmatpush1.msra.mxu0 %v848
    %2139 = vmatprep.subr.mxu0 %v851
    %2140 = vmatpush1.msra.mxu0 %v850
    %2141 = vmatprep.subr.mxu0 %v853
    %2142 = vmatpush1.msra.mxu0 %v852
    %2143 = vmatprep.subr.mxu0 %v855
    %2144 = vmatpush1.msra.mxu0 %v854
    %2145 = vmatprep.subr.mxu0 %v857
    %2146 = vmatpush1.msra.mxu0 %v856
    %2147 = vmatprep.subr.mxu0 %v859
    %2148 = vmatpush1.msra.mxu0 %v858
    %2149 = vmatprep.subr.mxu0 %v861
    %2150 = vmatpush1.msra.mxu0 %v860
    %2151 = vmatprep.subr.mxu0 %v863
    %2152 = vmatpush1.msra.mxu0 %v862
    %2153 = vmatprep.subr.mxu0 %v865
    %2154 = vmatpush1.msra.mxu0 %v864
    %2155 = vmatprep.subr.mxu0 %v867
    %2156 = vmatpush1.msra.mxu0 %v866
    %2157 = vmatprep.subr.mxu0 %v869
    %2158 = vmatpush1.msra.mxu0 %v868
    %2159 = vmatprep.subr.mxu0 %v871
    %2160 = vmatpush1.msra.mxu0 %v870
    %2161 = vmatprep.subr.mxu0 %v873
    %2162 = vmatpush1.msra.mxu0 %v872
    %2163 = vmatprep.subr.mxu0 %v875
    %2164 = vmatpush1.msra.mxu0 %v874
    %2165 = vmatprep.subr.mxu0 %v877
    %2166 = vmatpush1.msra.mxu0 %v876
    %2167 = vmatprep.subr.mxu0 %v879
    %2168 = vmatpush1.msra.mxu0 %v878
    %2169 = vmatprep.subr.mxu0 %v881
    %2170 = vmatpush1.msra.mxu0 %v880
    %2171 = vmatprep.subr.mxu0 %v883
    %2172 = vmatpush1.msra.mxu0 %v882
    %2173 = vmatprep.subr.mxu0 %v885
    %2174 = vmatpush1.msra.mxu0 %v884
    %2175 = vmatprep.subr.mxu0 %v887
    %2176 = vmatpush1.msra.mxu0 %v886
    %2177 = vmatprep.subr.mxu0 %v889
    %2178 = vmatpush1.msra.mxu0 %v888
    %2179 = vmatprep.mubr.f32.mxu0 %v1267
    %2180 = vmatmul.mubr.f32.gmra.mrb[0].mxu0 %v1265
    %v2181 = vpop.f32.mrb[0].mxu0
    %v2182 = vadd.f32 %v2111, %v2181
    %v2183 = vpop.f32.mrb[0].mxu0
    %v2184 = vadd.f32 %v2113, %v2183
    %2185 = vdwg.mxu0
    %2186 = vmatprep.subr.mxu0 %v891
    %2187 = vmatpush1.msra.mxu0 %v890
    %2188 = vmatprep.subr.mxu0 %v893
    %2189 = vmatpush1.msra.mxu0 %v892
    %2190 = vmatprep.subr.mxu0 %v895
    %2191 = vmatpush1.msra.mxu0 %v894
    %2192 = vmatprep.subr.mxu0 %v897
    %2193 = vmatpush1.msra.mxu0 %v896
    %2194 = vmatprep.subr.mxu0 %v899
    %2195 = vmatpush1.msra.mxu0 %v898
    %2196 = vmatprep.subr.mxu0 %v901
    %2197 = vmatpush1.msra.mxu0 %v900
    %2198 = vmatprep.subr.mxu0 %v903
    %2199 = vmatpush1.msra.mxu0 %v902
    %2200 = vmatprep.subr.mxu0 %v905
    %2201 = vmatpush1.msra.mxu0 %v904
    %2202 = vmatprep.subr.mxu0 %v907
    %2203 = vmatpush1.msra.mxu0 %v906
    %2204 = vmatprep.subr.mxu0 %v909
    %2205 = vmatpush1.msra.mxu0 %v908
    %2206 = vmatprep.subr.mxu0 %v911
    %2207 = vmatpush1.msra.mxu0 %v910
    %2208 = vmatprep.subr.mxu0 %v913
    %2209 = vmatpush1.msra.mxu0 %v912
    %2210 = vmatprep.subr.mxu0 %v915
    %2211 = vmatpush1.msra.mxu0 %v914
    %2212 = vmatprep.subr.mxu0 %v917
    %2213 = vmatpush1.msra.mxu0 %v916
    %2214 = vmatprep.subr.mxu0 %v919
    %2215 = vmatpush1.msra.mxu0 %v918
    %2216 = vmatprep.subr.mxu0 %v921
    %2217 = vmatpush1.msra.mxu0 %v920
    %2218 = vmatprep.subr.mxu0 %v923
    %2219 = vmatpush1.msra.mxu0 %v922
    %2220 = vmatprep.subr.mxu0 %v925
    %2221 = vmatpush1.msra.mxu0 %v924
    %2222 = vmatprep.subr.mxu0 %v927
    %2223 = vmatpush1.msra.mxu0 %v926
    %2224 = vmatprep.subr.mxu0 %v929
    %2225 = vmatpush1.msra.mxu0 %v928
    %2226 = vmatprep.subr.mxu0 %v931
    %2227 = vmatpush1.msra.mxu0 %v930
    %2228 = vmatprep.subr.mxu0 %v933
    %2229 = vmatpush1.msra.mxu0 %v932
    %2230 = vmatprep.subr.mxu0 %v935
    %2231 = vmatpush1.msra.mxu0 %v934
    %2232 = vmatprep.subr.mxu0 %v937
    %2233 = vmatpush1.msra.mxu0 %v936
    %2234 = vmatprep.subr.mxu0 %v939
    %2235 = vmatpush1.msra.mxu0 %v938
    %2236 = vmatprep.subr.mxu0 %v941
    %2237 = vmatpush1.msra.mxu0 %v940
    %2238 = vmatprep.subr.mxu0 %v943
    %2239 = vmatpush1.msra.mxu0 %v942
    %2240 = vmatprep.subr.mxu0 %v945
    %2241 = vmatpush1.msra.mxu0 %v944
    %2242 = vmatprep.subr.mxu0 %v947
    %2243 = vmatpush1.msra.mxu0 %v946
    %2244 = vmatprep.subr.mxu0 %v949
    %2245 = vmatpush1.msra.mxu0 %v948
    %2246 = vmatprep.subr.mxu0 %v951
    %2247 = vmatpush1.msra.mxu0 %v950
    %2248 = vmatprep.subr.mxu0 %v953
    %2249 = vmatpush1.msra.mxu0 %v952
    %2250 = vmatprep.mubr.f32.mxu0 %v1283
    %2251 = vmatmul.mubr.f32.gmra.mrb[0].mxu0 %v1275
    %v2252 = vpop.f32.mrb[0].mxu0
    %v2253 = vadd.f32 %v2182, %v2252
    %v2254 = vpop.f32.mrb[0].mxu0
    %v2255 = vadd.f32 %v2184, %v2254
    %2256 = vdwg.mxu0
    %2257 = vmatprep.subr.mxu0 %v955
    %2258 = vmatpush1.msra.mxu0 %v954
    %2259 = vmatprep.subr.mxu0 %v957
    %2260 = vmatpush1.msra.mxu0 %v956
    %2261 = vmatprep.subr.mxu0 %v959
    %2262 = vmatpush1.msra.mxu0 %v958
    %2263 = vmatprep.subr.mxu0 %v961
    %2264 = vmatpush1.msra.mxu0 %v960
    %2265 = vmatprep.subr.mxu0 %v963
    %2266 = vmatpush1.msra.mxu0 %v962
    %2267 = vmatprep.subr.mxu0 %v965
    %2268 = vmatpush1.msra.mxu0 %v964
    %2269 = vmatprep.subr.mxu0 %v967
    %2270 = vmatpush1.msra.mxu0 %v966
    %2271 = vmatprep.subr.mxu0 %v969
    %2272 = vmatpush1.msra.mxu0 %v968
    %2273 = vmatprep.subr.mxu0 %v971
    %2274 = vmatpush1.msra.mxu0 %v970
    %2275 = vmatprep.subr.mxu0 %v973
    %2276 = vmatpush1.msra.mxu0 %v972
    %2277 = vmatprep.subr.mxu0 %v975
    %2278 = vmatpush1.msra.mxu0 %v974
    %2279 = vmatprep.subr.mxu0 %v977
    %2280 = vmatpush1.msra.mxu0 %v976
    %2281 = vmatprep.subr.mxu0 %v979
    %2282 = vmatpush1.msra.mxu0 %v978
    %2283 = vmatprep.subr.mxu0 %v981
    %2284 = vmatpush1.msra.mxu0 %v980
    %2285 = vmatprep.subr.mxu0 %v983
    %2286 = vmatpush1.msra.mxu0 %v982
    %2287 = vmatprep.subr.mxu0 %v985
    %2288 = vmatpush1.msra.mxu0 %v984
    %2289 = vmatprep.subr.mxu0 %v987
    %2290 = vmatpush1.msra.mxu0 %v986
    %2291 = vmatprep.subr.mxu0 %v989
    %2292 = vmatpush1.msra.mxu0 %v988
    %2293 = vmatprep.subr.mxu0 %v991
    %2294 = vmatpush1.msra.mxu0 %v990
    %2295 = vmatprep.subr.mxu0 %v993
    %2296 = vmatpush1.msra.mxu0 %v992
    %2297 = vmatprep.subr.mxu0 %v995
    %2298 = vmatpush1.msra.mxu0 %v994
    %2299 = vmatprep.subr.mxu0 %v997
    %2300 = vmatpush1.msra.mxu0 %v996
    %2301 = vmatprep.subr.mxu0 %v999
    %2302 = vmatpush1.msra.mxu0 %v998
    %2303 = vmatprep.subr.mxu0 %v1001
    %2304 = vmatpush1.msra.mxu0 %v1000
    %2305 = vmatprep.subr.mxu0 %v1003
    %2306 = vmatpush1.msra.mxu0 %v1002
    %2307 = vmatprep.subr.mxu0 %v1005
    %2308 = vmatpush1.msra.mxu0 %v1004
    %2309 = vmatprep.subr.mxu0 %v1007
    %2310 = vmatpush1.msra.mxu0 %v1006
    %2311 = vmatprep.subr.mxu0 %v1009
    %2312 = vmatpush1.msra.mxu0 %v1008
    %2313 = vmatprep.subr.mxu0 %v1011
    %2314 = vmatpush1.msra.mxu0 %v1010
    %2315 = vmatprep.subr.mxu0 %v1013
    %2316 = vmatpush1.msra.mxu0 %v1012
    %2317 = vmatprep.subr.mxu0 %v1015
    %2318 = vmatpush1.msra.mxu0 %v1014
    %2319 = vmatprep.subr.mxu0 %v1017
    %2320 = vmatpush1.msra.mxu0 %v1016
    %2321 = vmatprep.mubr.f32.mxu0 %v1284
    %2322 = vmatmul.mubr.f32.gmra.mrb[0].mxu0 %v1282
    %v2323 = vpop.f32.mrb[0].mxu0
    %v2324 = vadd.f32 %v2253, %v2323
    %v2325 = vpop.f32.mrb[0].mxu0
    %v2326 = vadd.f32 %v2255, %v2325
    %2327 = vdwg.mxu0
    %2328 = vmatprep.subr.mxu0 %v1019
    %2329 = vmatpush1.msra.mxu0 %v1018
    %2330 = vmatprep.subr.mxu0 %v1021
    %2331 = vmatpush1.msra.mxu0 %v1020
    %2332 = vmatprep.subr.mxu0 %v1023
    %2333 = vmatpush1.msra.mxu0 %v1022
    %2334 = vmatprep.subr.mxu0 %v1025
    %2335 = vmatpush1.msra.mxu0 %v1024
    %2336 = vmatprep.subr.mxu0 %v1027
    %2337 = vmatpush1.msra.mxu0 %v1026
    %2338 = vmatprep.subr.mxu0 %v1029
    %2339 = vmatpush1.msra.mxu0 %v1028
    %2340 = vmatprep.subr.mxu0 %v1031
    %2341 = vmatpush1.msra.mxu0 %v1030
    %2342 = vmatprep.subr.mxu0 %v1033
    %2343 = vmatpush1.msra.mxu0 %v1032
    %2344 = vmatprep.subr.mxu0 %v1035
    %2345 = vmatpush1.msra.mxu0 %v1034
    %2346 = vmatprep.subr.mxu0 %v1037
    %2347 = vmatpush1.msra.mxu0 %v1036
    %2348 = vmatprep.subr.mxu0 %v1039
    %2349 = vmatpush1.msra.mxu0 %v1038
    %2350 = vmatprep.subr.mxu0 %v1041
    %2351 = vmatpush1.msra.mxu0 %v1040
    %2352 = vmatprep.subr.mxu0 %v1043
    %2353 = vmatpush1.msra.mxu0 %v1042
    %2354 = vmatprep.subr.mxu0 %v1045
    %2355 = vmatpush1.msra.mxu0 %v1044
    %2356 = vmatprep.subr.mxu0 %v1047
    %2357 = vmatpush1.msra.mxu0 %v1046
    %2358 = vmatprep.subr.mxu0 %v1049
    %2359 = vmatpush1.msra.mxu0 %v1048
    %2360 = vmatprep.subr.mxu0 %v1051
    %2361 = vmatpush1.msra.mxu0 %v1050
    %2362 = vmatprep.subr.mxu0 %v1053
    %2363 = vmatpush1.msra.mxu0 %v1052
    %2364 = vmatprep.subr.mxu0 %v1055
    %2365 = vmatpush1.msra.mxu0 %v1054
    %2366 = vmatprep.subr.mxu0 %v1057
    %2367 = vmatpush1.msra.mxu0 %v1056
    %2368 = vmatprep.subr.mxu0 %v1059
    %2369 = vmatpush1.msra.mxu0 %v1058
    %2370 = vmatprep.subr.mxu0 %v1061
    %2371 = vmatpush1.msra.mxu0 %v1060
    %2372 = vmatprep.subr.mxu0 %v1063
    %2373 = vmatpush1.msra.mxu0 %v1062
    %2374 = vmatprep.subr.mxu0 %v1065
    %2375 = vmatpush1.msra.mxu0 %v1064
    %2376 = vmatprep.subr.mxu0 %v1067
    %2377 = vmatpush1.msra.mxu0 %v1066
    %2378 = vmatprep.subr.mxu0 %v1069
    %2379 = vmatpush1.msra.mxu0 %v1068
    %2380 = vmatprep.subr.mxu0 %v1071
    %2381 = vmatpush1.msra.mxu0 %v1070
    %2382 = vmatprep.subr.mxu0 %v1073
    %2383 = vmatpush1.msra.mxu0 %v1072
    %2384 = vmatprep.subr.mxu0 %v1075
    %2385 = vmatpush1.msra.mxu0 %v1074
    %2386 = vmatprep.subr.mxu0 %v1077
    %2387 = vmatpush1.msra.mxu0 %v1076
    %2388 = vmatprep.subr.mxu0 %v1079
    %2389 = vmatpush1.msra.mxu0 %v1078
    %2390 = vmatprep.subr.mxu0 %v1081
    %2391 = vmatpush1.msra.mxu0 %v1080
    %2392 = vmatprep.mubr.f32.mxu0 %v1300
    %2393 = vmatmul.mubr.f32.gmra.mrb[0].mxu0 %v1292
    %v2394 = vpop.f32.mrb[0].mxu0
    %v2395 = vadd.f32 %v2324, %v2394
    %v2396 = vpop.f32.mrb[0].mxu0
    %v2397 = vadd.f32 %v2326, %v2396
    %2398 = vdwg.mxu0
    %2399 = vmatprep.subr.mxu0 %v1083
    %2400 = vmatpush1.msra.mxu0 %v1082
    %2401 = vmatprep.subr.mxu0 %v1085
    %2402 = vmatpush1.msra.mxu0 %v1084
    %2403 = vmatprep.subr.mxu0 %v1087
    %2404 = vmatpush1.msra.mxu0 %v1086
    %2405 = vmatprep.subr.mxu0 %v1089
    %2406 = vmatpush1.msra.mxu0 %v1088
    %2407 = vmatprep.subr.mxu0 %v1091
    %2408 = vmatpush1.msra.mxu0 %v1090
    %2409 = vmatprep.subr.mxu0 %v1093
    %2410 = vmatpush1.msra.mxu0 %v1092
    %2411 = vmatprep.subr.mxu0 %v1095
    %2412 = vmatpush1.msra.mxu0 %v1094
    %2413 = vmatprep.subr.mxu0 %v1097
    %2414 = vmatpush1.msra.mxu0 %v1096
    %2415 = vmatprep.subr.mxu0 %v1099
    %2416 = vmatpush1.msra.mxu0 %v1098
    %2417 = vmatprep.subr.mxu0 %v1101
    %2418 = vmatpush1.msra.mxu0 %v1100
    %2419 = vmatprep.subr.mxu0 %v1103
    %2420 = vmatpush1.msra.mxu0 %v1102
    %2421 = vmatprep.subr.mxu0 %v1105
    %2422 = vmatpush1.msra.mxu0 %v1104
    %2423 = vmatprep.subr.mxu0 %v1107
    %2424 = vmatpush1.msra.mxu0 %v1106
    %2425 = vmatprep.subr.mxu0 %v1109
    %2426 = vmatpush1.msra.mxu0 %v1108
    %2427 = vmatprep.subr.mxu0 %v1111
    %2428 = vmatpush1.msra.mxu0 %v1110
    %2429 = vmatprep.subr.mxu0 %v1113
    %2430 = vmatpush1.msra.mxu0 %v1112
    %2431 = vmatprep.subr.mxu0 %v1115
    %2432 = vmatpush1.msra.mxu0 %v1114
    %2433 = vmatprep.subr.mxu0 %v1117
    %2434 = vmatpush1.msra.mxu0 %v1116
    %2435 = vmatprep.subr.mxu0 %v1119
    %2436 = vmatpush1.msra.mxu0 %v1118
    %2437 = vmatprep.subr.mxu0 %v1121
    %2438 = vmatpush1.msra.mxu0 %v1120
    %2439 = vmatprep.subr.mxu0 %v1123
    %2440 = vmatpush1.msra.mxu0 %v1122
    %2441 = vmatprep.subr.mxu0 %v1125
    %2442 = vmatpush1.msra.mxu0 %v1124
    %2443 = vmatprep.subr.mxu0 %v1127
    %2444 = vmatpush1.msra.mxu0 %v1126
    %2445 = vmatprep.subr.mxu0 %v1129
    %2446 = vmatpush1.msra.mxu0 %v1128
    %2447 = vmatprep.subr.mxu0 %v1131
    %2448 = vmatpush1.msra.mxu0 %v1130
    %2449 = vmatprep.subr.mxu0 %v1133
    %2450 = vmatpush1.msra.mxu0 %v1132
    %2451 = vmatprep.subr.mxu0 %v1135
    %2452 = vmatpush1.msra.mxu0 %v1134
    %2453 = vmatprep.subr.mxu0 %v1137
    %2454 = vmatpush1.msra.mxu0 %v1136
    %2455 = vmatprep.subr.mxu0 %v1139
    %2456 = vmatpush1.msra.mxu0 %v1138
    %2457 = vmatprep.subr.mxu0 %v1141
    %2458 = vmatpush1.msra.mxu0 %v1140
    %2459 = vmatprep.subr.mxu0 %v1143
    %2460 = vmatpush1.msra.mxu0 %v1142
    %2461 = vmatprep.subr.mxu0 %v1145
    %2462 = vmatpush1.msra.mxu0 %v1144
    %2463 = vmatprep.mubr.f32.mxu0 %v1301
    %2464 = vmatmul.mubr.f32.gmra.mrb[0].mxu0 %v1299
    %v2465 = vpop.f32.mrb[0].mxu0
    %v2466 = vadd.f32 %v2395, %v2465
    %v2467 = vpop.f32.mrb[0].mxu0
    %v2468 = vadd.f32 %v2397, %v2467
    %2469 = vdwg.mxu0
    %v2470 = vmax.f32 %v2466, 0.0
    %v2471 = vmax.f32 %v2468, 0.0
    %v2472 = vld [vmem:[#allocation8] sm:$0xff]
    %v2473 = vld [vmem:[#allocation8 + $0x8] sm:$0xff]
    %v2474 = vld [vmem:[#allocation8 + $0x10] sm:$0xff]
    %v2475 = vld [vmem:[#allocation8 + $0x18] sm:$0xff]
    %v2476 = vld [vmem:[#allocation8 + $0x20] sm:$0xff]
    %v2477 = vld [vmem:[#allocation8 + $0x28] sm:$0xff]
    %v2478 = vld [vmem:[#allocation8 + $0x30] sm:$0xff]
    %v2479 = vld [vmem:[#allocation8 + $0x38] sm:$0xff]
    %v2480 = vld [vmem:[#allocation8 + $0x40] sm:$0xff]
    %v2481 = vld [vmem:[#allocation8 + $0x48] sm:$0xff]
    %v2482 = vld [vmem:[#allocation8 + $0x50] sm:$0xff]
    %v2483 = vld [vmem:[#allocation8 + $0x58] sm:$0xff]
    %v2484 = vld [vmem:[#allocation8 + $0x60] sm:$0xff]
    %v2485 = vld [vmem:[#allocation8 + $0x68] sm:$0xff]
    %v2486 = vld [vmem:[#allocation8 + $0x70] sm:$0xff]
    %v2487 = vld [vmem:[#allocation8 + $0x78] sm:$0xff]
    %v2488 = vld [vmem:[#allocation8 + $0x80] sm:$0xff]
    %v2489 = vld [vmem:[#allocation8 + $0x88] sm:$0xff]
    %v2490 = vld [vmem:[#allocation8 + $0x90] sm:$0xff]
    %v2491 = vld [vmem:[#allocation8 + $0x98] sm:$0xff]
    %v2492 = vld [vmem:[#allocation8 + $0xa0] sm:$0xff]
    %v2493 = vld [vmem:[#allocation8 + $0xa8] sm:$0xff]
    %v2494 = vld [vmem:[#allocation8 + $0xb0] sm:$0xff]
    %v2495 = vld [vmem:[#allocation8 + $0xb8] sm:$0xff]
    %v2496 = vld [vmem:[#allocation8 + $0xc0] sm:$0xff]
    %v2497 = vld [vmem:[#allocation8 + $0xc8] sm:$0xff]
    %v2498 = vld [vmem:[#allocation8 + $0xd0] sm:$0xff]
    %v2499 = vld [vmem:[#allocation8 + $0xd8] sm:$0xff]
    %v2500 = vld [vmem:[#allocation8 + $0xe0] sm:$0xff]
    %v2501 = vld [vmem:[#allocation8 + $0xe8] sm:$0xff]
    %v2502 = vld [vmem:[#allocation8 + $0xf0] sm:$0xff]
    %v2503 = vld [vmem:[#allocation8 + $0xf8] sm:$0xff]
    %v2504 = vld [vmem:[#allocation10] sm:$0x1]
    %v2506 = vlaneseq
    %v2507 = vshrl.u32 %v2506, 7
    %v2508 = vsub.s32 0, %v2507
    %v2509 = vrot.slane %v2504, %v2508
    %2511 = vmatprep.subr.mxu0 0.0
    %2512 = vmatpush1.msra.mxu0 %v2472
    %2513 = vmatprep.subr.mxu0 0.0
    %2514 = vmatpush1.msra.mxu0 %v2473
    %2515 = vmatprep.subr.mxu0 0.0
    %2516 = vmatpush1.msra.mxu0 %v2474
    %2517 = vmatprep.subr.mxu0 0.0
    %2518 = vmatpush1.msra.mxu0 %v2475
    %2519 = vmatprep.subr.mxu0 0.0
    %2520 = vmatpush1.msra.mxu0 %v2476
    %2521 = vmatprep.subr.mxu0 0.0
    %2522 = vmatpush1.msra.mxu0 %v2477
    %2523 = vmatprep.subr.mxu0 0.0
    %2524 = vmatpush1.msra.mxu0 %v2478
    %2525 = vmatprep.subr.mxu0 0.0
    %2526 = vmatpush1.msra.mxu0 %v2479
    %2527 = vmatprep.subr.mxu0 0.0
    %2528 = vmatpush1.msra.mxu0 %v2480
    %2529 = vmatprep.subr.mxu0 0.0
    %2530 = vmatpush1.msra.mxu0 %v2481
    %2531 = vmatprep.subr.mxu0 0.0
    %2532 = vmatpush1.msra.mxu0 %v2482
    %2533 = vmatprep.subr.mxu0 0.0
    %2534 = vmatpush1.msra.mxu0 %v2483
    %2535 = vmatprep.subr.mxu0 0.0
    %2536 = vmatpush1.msra.mxu0 %v2484
    %2537 = vmatprep.subr.mxu0 0.0
    %2538 = vmatpush1.msra.mxu0 %v2485
    %2539 = vmatprep.subr.mxu0 0.0
    %2540 = vmatpush1.msra.mxu0 %v2486
    %2541 = vmatprep.subr.mxu0 0.0
    %2542 = vmatpush1.msra.mxu0 %v2487
    %2543 = vmatprep.subr.mxu0 0.0
    %2544 = vmatpush1.msra.mxu0 %v2488
    %2545 = vmatprep.subr.mxu0 0.0
    %2546 = vmatpush1.msra.mxu0 %v2489
    %2547 = vmatprep.subr.mxu0 0.0
    %2548 = vmatpush1.msra.mxu0 %v2490
    %2549 = vmatprep.subr.mxu0 0.0
    %2550 = vmatpush1.msra.mxu0 %v2491
    %2551 = vmatprep.subr.mxu0 0.0
    %2552 = vmatpush1.msra.mxu0 %v2492
    %2553 = vmatprep.subr.mxu0 0.0
    %2554 = vmatpush1.msra.mxu0 %v2493
    %2555 = vmatprep.subr.mxu0 0.0
    %2556 = vmatpush1.msra.mxu0 %v2494
    %2557 = vmatprep.subr.mxu0 0.0
    %2558 = vmatpush1.msra.mxu0 %v2495
    %2559 = vmatprep.subr.mxu0 0.0
    %2560 = vmatpush1.msra.mxu0 %v2496
    %2561 = vmatprep.subr.mxu0 0.0
    %2562 = vmatpush1.msra.mxu0 %v2497
    %2563 = vmatprep.subr.mxu0 0.0
    %2564 = vmatpush1.msra.mxu0 %v2498
    %2565 = vmatprep.subr.mxu0 0.0
    %2566 = vmatpush1.msra.mxu0 %v2499
    %2567 = vmatprep.subr.mxu0 0.0
    %2568 = vmatpush1.msra.mxu0 %v2500
    %2569 = vmatprep.subr.mxu0 0.0
    %2570 = vmatpush1.msra.mxu0 %v2501
    %2571 = vmatprep.subr.mxu0 0.0
    %2572 = vmatpush1.msra.mxu0 %v2502
    %2573 = vmatprep.subr.mxu0 0.0
    %2574 = vmatpush1.msra.mxu0 %v2503
    %2575 = vmatprep.mubr.f32.mxu0 %v2471
    %2576 = vmatmul.mubr.f32.gmra.mrb[0].mxu0 %v2470
    %v2577 = vpop.f32.mrb[0].mxu0
    %v2578 = vadd.f32 %v2509, %v2577
    %v2579 = vpop.f32.mrb[0].mxu0
    %2580 = vdwg.mxu0
    %v2581 = vmax.f32 %v2578, 0.0
    %v2582 = vld [vmem:[#allocation11] sm:$0xff]
    %v2583 = vld [vmem:[#allocation11 + $0x8] sm:$0xff]
    %v2584 = vld [vmem:[#allocation11 + $0x10] sm:$0xff]
    %v2585 = vld [vmem:[#allocation11 + $0x18] sm:$0xff]
    %v2586 = vld [vmem:[#allocation11 + $0x20] sm:$0xff]
    %v2587 = vld [vmem:[#allocation11 + $0x28] sm:$0xff]
    %v2588 = vld [vmem:[#allocation11 + $0x30] sm:$0xff]
    %v2589 = vld [vmem:[#allocation11 + $0x38] sm:$0xff]
    %v2590 = vld [vmem:[#allocation11 + $0x40] sm:$0xff]
    %v2591 = vld [vmem:[#allocation11 + $0x48] sm:$0xff]
    %v2592 = vld [vmem:[#allocation11 + $0x50] sm:$0xff]
    %v2593 = vld [vmem:[#allocation11 + $0x58] sm:$0xff]
    %v2594 = vld [vmem:[#allocation11 + $0x60] sm:$0xff]
    %v2595 = vld [vmem:[#allocation11 + $0x68] sm:$0xff]
    %v2596 = vld [vmem:[#allocation11 + $0x70] sm:$0xff]
    %v2597 = vld [vmem:[#allocation11 + $0x78] sm:$0xff]
    %v2598 = vld [vmem:[#allocation13] sm:$0x1]
    %v2600 = vlaneseq
    %v2601 = vshrl.u32 %v2600, 7
    %v2602 = vsub.s32 0, %v2601
    %v2603 = vrot.slane %v2598, %v2602
    %2605 = vmatprep.subr.mxu0 0.0
    %2606 = vmatpush1.msra.mxu0 %v2582
    %2607 = vmatprep.subr.mxu0 0.0
    %2608 = vmatpush1.msra.mxu0 %v2583
    %2609 = vmatprep.subr.mxu0 0.0
    %2610 = vmatpush1.msra.mxu0 %v2584
    %2611 = vmatprep.subr.mxu0 0.0
    %2612 = vmatpush1.msra.mxu0 %v2585
    %2613 = vmatprep.subr.mxu0 0.0
    %2614 = vmatpush1.msra.mxu0 %v2586
    %2615 = vmatprep.subr.mxu0 0.0
    %2616 = vmatpush1.msra.mxu0 %v2587
    %2617 = vmatprep.subr.mxu0 0.0
    %2618 = vmatpush1.msra.mxu0 %v2588
    %2619 = vmatprep.subr.mxu0 0.0
    %2620 = vmatpush1.msra.mxu0 %v2589
    %2621 = vmatprep.subr.mxu0 0.0
    %2622 = vmatpush1.msra.mxu0 %v2590
    %2623 = vmatprep.subr.mxu0 0.0
    %2624 = vmatpush1.msra.mxu0 %v2591
    %2625 = vmatprep.subr.mxu0 0.0
    %2626 = vmatpush1.msra.mxu0 %v2592
    %2627 = vmatprep.subr.mxu0 0.0
    %2628 = vmatpush1.msra.mxu0 %v2593
    %2629 = vmatprep.subr.mxu0 0.0
    %2630 = vmatpush1.msra.mxu0 %v2594
    %2631 = vmatprep.subr.mxu0 0.0
    %2632 = vmatpush1.msra.mxu0 %v2595
    %2633 = vmatprep.subr.mxu0 0.0
    %2634 = vmatpush1.msra.mxu0 %v2596
    %2635 = vmatprep.subr.mxu0 0.0
    %2636 = vmatpush1.msra.mxu0 %v2597
    %2637 = vmatprep.subr.mxu0 0.0
    %2638 = vmatpush1.msra.mxu0 0.0
    %2639 = vmatprep.subr.mxu0 0.0
    %2640 = vmatpush1.msra.mxu0 0.0
    %2641 = vmatprep.subr.mxu0 0.0
    %2642 = vmatpush1.msra.mxu0 0.0
    %2643 = vmatprep.subr.mxu0 0.0
    %2644 = vmatpush1.msra.mxu0 0.0
    %2645 = vmatprep.subr.mxu0 0.0
    %2646 = vmatpush1.msra.mxu0 0.0
    %2647 = vmatprep.subr.mxu0 0.0
    %2648 = vmatpush1.msra.mxu0 0.0
    %2649 = vmatprep.subr.mxu0 0.0
    %2650 = vmatpush1.msra.mxu0 0.0
    %2651 = vmatprep.subr.mxu0 0.0
    %2652 = vmatpush1.msra.mxu0 0.0
    %2653 = vmatprep.subr.mxu0 0.0
    %2654 = vmatpush1.msra.mxu0 0.0
    %2655 = vmatprep.subr.mxu0 0.0
    %2656 = vmatpush1.msra.mxu0 0.0
    %2657 = vmatprep.subr.mxu0 0.0
    %2658 = vmatpush1.msra.mxu0 0.0
    %2659 = vmatprep.subr.mxu0 0.0
    %2660 = vmatpush1.msra.mxu0 0.0
    %2661 = vmatprep.subr.mxu0 0.0
    %2662 = vmatpush1.msra.mxu0 0.0
    %2663 = vmatprep.subr.mxu0 0.0
    %2664 = vmatpush1.msra.mxu0 0.0
    %2665 = vmatprep.subr.mxu0 0.0
    %2666 = vmatpush1.msra.mxu0 0.0
    %2667 = vmatprep.subr.mxu0 0.0
    %2668 = vmatpush1.msra.mxu0 0.0
    %2669 = vmatprep.mubr.f32.mxu0 0.0
    %2670 = vmatmul.mubr.f32.gmra.mrb[0].mxu0 %v2581
    %v2671 = vpop.f32.mrb[0].mxu0
    %v2672 = vadd.f32 %v2603, %v2671
    %v2673 = vpop.f32.mrb[0].mxu0
    %2674 = vdwg.mxu0
    %2675 = vst [vmem:[#allocation14] sm:$0x3] %v2672
    // Predicated region
    $region58: #{tpu_custom_call.1} parent=1 // pred_check
      _
    $region59: #{tpu_custom_call.1} parent=1 // pred_check_branch
      %2677 = sbr.rel (0) target = $region61
    $region60: #{tpu_custom_call.1} parent=1 // pred_region
      %s2679 = ssub.s32 32, 32
      %2680 = vsyncadd [#allocation4], %s2679
      %s2682 = sshll.u32 [#allocation14], 4
      %s2683 = int_to_ptr.vmem [resolvable:$true] %s2682
      %2685 = dma.vmem_to_hbm [thread:$0]  %s2683, 32, %s7, [#allocation4]
    $region61: #{tpu_custom_call.1} parent=1 // pred_fallthru
      _
    // Predicated region
    $region62: #{tpu_custom_call.1} parent=1 // pred_check
      _
    $region63: #{tpu_custom_call.1} parent=1 // pred_check_branch
      %2687 = sbr.rel (0) target = $region65
    $region64: #{tpu_custom_call.1} parent=1 // pred_region
      %2688 = dma.done [#allocation4], 32
    $region65: #{tpu_custom_call.1} parent=1 // pred_fallthru
      _
    %2689 = vsyncpa [#allocation3], 1
    %2690 = vsyncpa [#allocation6], 1
    %2691 = vsyncpa [#allocation9], 1
    %2692 = vsyncpa [#allocation12], 1
    %2693 = vsyncpa [#allocation4], 1

</llo_original>
